<compile_context>
chip_gen: v5e
topology: v5e:2x2
jax: 0.10.0
libtpu: 0.0.40
codegen_flags: <defaults>
</compile_context>

<pallas_src>
import functools

import numpy as np
import jax
import jax.numpy as jnp
from jax.experimental import pallas as pl
from jax.experimental.pallas import tpu as pltpu

KSIZE = 5
STRIDE = 2
BN_EPS = 1e-5


# ---------------------------------------------------------------------------
# Pallas kernels
# ---------------------------------------------------------------------------
def _conv1_kernel(p_ref, w_ref, s_ref, b_ref, o_ref):
    # p: (1, M, K) bf16 im2col patches for one batch element, w: (K, 16) bf16.
    acc = jnp.dot(p_ref[0], w_ref[...], preferred_element_type=jnp.float32)
    y = acc * s_ref[...] + b_ref[...]          # folded eval-mode BN, f32
    o_ref[0] = jnp.maximum(y, 0.0).astype(o_ref.dtype)


def _fused_tail_kernel(p2_ref, w2_ref, s2_ref, b2_ref, w3_ref, s3_ref, b3_ref,
                       hwt_ref, hb_ref, o_ref, a2_ref, *,
                       batch, h2, w2dim, oh3, ow3):
    # ---- conv2 + bn2 + relu: activation stays in VMEM scratch --------------
    acc2 = jnp.dot(p2_ref[...], w2_ref[...], preferred_element_type=jnp.float32)
    a2_ref[...] = jnp.maximum(acc2 * s2_ref[...] + b2_ref[...], 0.0)

    # ---- conv3 patch gather straight from VMEM ------------------------------
    # a2 rows are (b, oh2, ow2) row-major; conv3 output (b, oh, ow) needs rows
    # (b, 2*oh + ki, 2*ow + kj).  All starts are static; stride-2 ref loads.
    row_blocks = []
    for b in range(batch):
        for oh in range(oh3):
            taps = []
            for ki in range(KSIZE):
                base = (b * h2 + STRIDE * oh + ki) * w2dim
                for kj in range(KSIZE):
                    taps.append(a2_ref[pl.ds(base + kj, ow3, stride=STRIDE), :])
            row_blocks.append(jnp.concatenate(taps, axis=1))   # (ow3, 25*32)
    p3 = jnp.concatenate(row_blocks, axis=0).astype(jnp.bfloat16)  # (m3, 800)

    # ---- conv3 + bn3 + relu --------------------------------------------------
    acc3 = jnp.dot(p3, w3_ref[...], preferred_element_type=jnp.float32)
    y3 = jnp.maximum(acc3 * s3_ref[...] + b3_ref[...], 0.0)        # (m3, 32) f32

    # ---- Linear(448, 2) head as a VPU multiply-reduce (no tiny MXU matmuls) -
    n_head = hwt_ref.shape[0]
    cols = [jnp.sum(y3 * hwt_ref[n], axis=1, keepdims=True) for n in range(n_head)]
    r = jnp.concatenate(cols, axis=1)                              # (m3, n_head)
    npos = oh3 * ow3
    rows = [jnp.sum(r[b * npos:(b + 1) * npos, :], axis=0, keepdims=True)
            for b in range(batch)]
    o_ref[...] = (jnp.concatenate(rows, axis=0) + hb_ref[...]).astype(o_ref.dtype)


# ---------------------------------------------------------------------------
# pallas_call wrappers
# ---------------------------------------------------------------------------
def _conv1_call(p1, w, s, b):
    B, M, K = p1.shape
    cout = w.shape[1]
    cost = pl.CostEstimate(
        flops=2 * B * M * K * cout, transcendentals=0,
        bytes_accessed=p1.size * 2 + w.size * 2 + (s.size + b.size) * 4
        + B * M * cout * 2)
    return pl.pallas_call(
        _conv1_kernel,
        out_shape=jax.ShapeDtypeStruct((B, M, cout), jnp.bfloat16),
        grid=(B,),
        in_specs=[
            pl.BlockSpec((1, M, K), lambda i: (i, 0, 0)),
            pl.BlockSpec((K, cout), lambda i: (0, 0)),
            pl.BlockSpec((1, cout), lambda i: (0, 0)),
            pl.BlockSpec((1, cout), lambda i: (0, 0)),
        ],
        out_specs=pl.BlockSpec((1, M, cout), lambda i: (i, 0, 0)),
        compiler_params=pltpu.CompilerParams(
            dimension_semantics=("parallel",)),
        cost_estimate=cost,
    )(p1, w, s, b)


def _fused_tail_call(p2, w2, s2, b2, w3, s3, b3, hwt, hb, *, batch, h2, w2dim):
    m2, k2 = p2.shape
    cout2 = w2.shape[1]
    k3, cout3 = w3.shape
    oh3 = (h2 - KSIZE) // STRIDE + 1
    ow3 = (w2dim - KSIZE) // STRIDE + 1
    m3 = batch * oh3 * ow3
    n_out = hb.shape[1]
    assert m2 == batch * h2 * w2dim
    assert k3 == KSIZE * KSIZE * cout2
    assert hwt.shape == (n_out, m3, cout3)

    cost = pl.CostEstimate(
        flops=2 * m2 * k2 * cout2 + 2 * m3 * k3 * cout3 + 2 * m3 * cout3 * n_out,
        transcendentals=0,
        bytes_accessed=p2.size * 2 + (w2.size + w3.size) * 2
        + (s2.size + b2.size + s3.size + b3.size + hwt.size + hb.size) * 4
        + batch * n_out * 4)
    kernel = functools.partial(_fused_tail_kernel, batch=batch, h2=h2,
                               w2dim=w2dim, oh3=oh3, ow3=ow3)
    return pl.pallas_call(
        kernel,
        out_shape=jax.ShapeDtypeStruct((batch, n_out), jnp.float32),
        grid=(1,),
        in_specs=[
            pl.BlockSpec((m2, k2), lambda i: (0, 0)),
            pl.BlockSpec((k2, cout2), lambda i: (0, 0)),
            pl.BlockSpec((1, cout2), lambda i: (0, 0)),
            pl.BlockSpec((1, cout2), lambda i: (0, 0)),
            pl.BlockSpec((k3, cout3), lambda i: (0, 0)),
            pl.BlockSpec((1, cout3), lambda i: (0, 0)),
            pl.BlockSpec((1, cout3), lambda i: (0, 0)),
            pl.BlockSpec((n_out, m3, cout3), lambda i: (0, 0, 0)),
            pl.BlockSpec((1, n_out), lambda i: (0, 0)),
        ],
        out_specs=pl.BlockSpec((batch, n_out), lambda i: (0, 0)),
        scratch_shapes=[pltpu.VMEM((m2, cout2), jnp.float32)],
        compiler_params=pltpu.CompilerParams(
            dimension_semantics=("arbitrary",)),
        cost_estimate=cost,
    )(p2, w2, s2, b2, w3, s3, b3, hwt, hb)


# ---------------------------------------------------------------------------
# Glue: fused XLA im2col per conv input and the forward pass
# ---------------------------------------------------------------------------
def _patches_nhwc(act):
    return jax.lax.conv_general_dilated_patches(
        act, (KSIZE, KSIZE), (STRIDE, STRIDE), "VALID",
        dimension_numbers=("NHWC", "HWIO", "NHWC"))


@jax.jit
def dqn_forward(x, prm):
    """x: (B, 3, H, W) NCHW float32, exactly like the PyTorch module."""
    B = x.shape[0]
    a = jnp.transpose(x, (0, 2, 3, 1)).astype(jnp.bfloat16)      # NHWC, bf16

    # --- conv1 + bn1 + relu (Pallas kernel #1) -------------------------------
    p1 = _patches_nhwc(a)
    _, oh1, ow1, k1 = p1.shape
    a1 = _conv1_call(p1.reshape(B, oh1 * ow1, k1),
                     prm["w1"], prm["s1"], prm["b1"])
    a1 = a1.reshape(B, oh1, ow1, prm["w1"].shape[1])

    # --- conv2 + bn2 + relu + conv3 + bn3 + relu + head (Pallas kernel #2) ----
    p2 = _patches_nhwc(a1)
    _, oh2, ow2, k2 = p2.shape
    out = _fused_tail_call(p2.reshape(B * oh2 * ow2, k2),
                           prm["w2"], prm["s2"], prm["b2"],
                           prm["w3"], prm["s3"], prm["b3"],
                           prm["hwt"], prm["hb"],
                           batch=B, h2=oh2, w2dim=ow2)
    return out


# ---------------------------------------------------------------------------
# One-time parameter preparation (all folding / permutation hoisted)
# ---------------------------------------------------------------------------
def _patch_perm(cin, k):
    """Probe the feature ordering of lax.conv_general_dilated_patches."""
    ksq = k * k

    def run(code):
        xx = jnp.asarray(np.transpose(code, (1, 2, 0)))[None]    # (1, k, k, cin)
        pat = jax.lax.conv_general_dilated_patches(
            xx, (k, k), (1, 1), "VALID",
            dimension_numbers=("NHWC", "HWIO", "NHWC"),
            precision=jax.lax.Precision.HIGHEST)
        return np.asarray(pat, dtype=np.float64).reshape(-1)

    c_code = np.broadcast_to(
        np.arange(cin, dtype=np.float32)[:, None, None], (cin, k, k))
    s_code = np.broadcast_to(
        np.arange(ksq, dtype=np.float32).reshape(1, k, k), (cin, k, k))
    perm = (np.rint(run(c_code)) * ksq + np.rint(run(s_code))).astype(np.int64)
    assert sorted(perm.tolist()) == list(range(cin * ksq)), "patch probe failed"
    return perm


def prepare_params(p, batch_size, eps=BN_EPS):
    def fold_bn(conv_b, bn, cout):
        gamma, beta, rmean, rvar = bn
        scale = gamma / jnp.sqrt(rvar + eps)
        bias = beta + (conv_b - rmean) * scale
        return (scale.reshape(1, cout).astype(jnp.float32),
                bias.reshape(1, cout).astype(jnp.float32))

    def pack_w_patches(w):
        # Weight laid out to match XLA dilated-patches feature order; unpadded.
        cout, cin, kh, kw = w.shape
        perm = _patch_perm(cin, kh)
        k = cin * kh * kw
        return jnp.asarray(w).reshape(cout, k)[:, perm].T.astype(jnp.bfloat16)

    s1, b1 = fold_bn(p["c1b"], p["bn1"], 16)
    s2, b2 = fold_bn(p["c2b"], p["bn2"], 32)
    s3, b3 = fold_bn(p["c3b"], p["bn3"], 32)

    # conv3 weight packed for the in-kernel patch layout: columns (ki, kj, ci).
    w3 = jnp.transpose(p["c3w"], (2, 3, 1, 0)).reshape(
        KSIZE * KSIZE * 32, 32).astype(jnp.bfloat16)

    # Head: PyTorch flattens NCHW (C=32, H=2, W=7) -> feature = c*14 + h*7 + w.
    # Kernel y3 rows are (b, h, w) with channels on lanes -> reorder to
    # (h, w, c), tile per batch.  Kept at true width 2 (no 128-pad).
    hw = p["hw"].reshape(2, 32, 2, 7).transpose(0, 2, 3, 1).reshape(2, 14, 32)
    hwt = jnp.tile(hw[:, None], (1, batch_size, 1, 1)).reshape(
        2, batch_size * 14, 32).astype(jnp.float32)
    hb = p["hb"].reshape(1, 2).astype(jnp.float32)

    return {"w1": pack_w_patches(p["c1w"]), "s1": s1, "b1": b1,
            "w2": pack_w_patches(p["c2w"]), "s2": s2, "b2": b2,
            "w3": w3, "s3": s3, "b3": b3,
            "hwt": hwt, "hb": hb}


# ---------------------------------------------------------------------------
# Deterministic parameter init (shapes from DQN.__init__)
# ---------------------------------------------------------------------------
def init_params(key):
    ks = jax.random.split(key, 12)

    def bn(k, c):
        g = 1.0 + 0.1 * jax.random.normal(k, (c,), jnp.float32)
        b = 0.1 * jax.random.normal(jax.random.fold_in(k, 1), (c,), jnp.float32)
        rm = 0.05 * jax.random.normal(jax.random.fold_in(k, 2), (c,), jnp.float32)
        rv = 1.0 + 0.1 * jax.random.uniform(jax.random.fold_in(k, 3), (c,), jnp.float32)
        return (g, b, rm, rv)

    return {
        "c1w": 0.1 * jax.random.normal(ks[0], (16, 3, 5, 5), jnp.float32),
        "c1b": 0.01 * jax.random.normal(ks[1], (16,), jnp.float32),
        "bn1": bn(ks[2], 16),
        "c2w": 0.1 * jax.random.normal(ks[3], (32, 16, 5, 5), jnp.float32),
        "c2b": 0.01 * jax.random.normal(ks[4], (32,), jnp.float32),
        "bn2": bn(ks[5], 32),
        "c3w": 0.1 * jax.random.normal(ks[6], (32, 32, 5, 5), jnp.float32),
        "c3b": 0.01 * jax.random.normal(ks[7], (32,), jnp.float32),
        "bn3": bn(ks[8], 32),
        "hw": 0.05 * jax.random.normal(ks[9], (2, 448), jnp.float32),
        "hb": 0.01 * jax.random.normal(ks[10], (2,), jnp.float32),
    }


# ---------------------------------------------------------------------------
# Pure-JAX f32 reference (same math as the PyTorch module, eval-mode BN)
# ---------------------------------------------------------------------------
def _reference_forward(x, p, eps=BN_EPS):
    def conv_bn_relu(a, wgt, cb, bn):
        gamma, beta, rmean, rvar = bn
        y = jax.lax.conv_general_dilated(
            a, wgt, (STRIDE, STRIDE), "VALID",
            dimension_numbers=("NCHW", "OIHW", "NCHW"),
            precision=jax.lax.Precision.HIGHEST)
        y = y + cb[None, :, None, None]
        scale = gamma / jnp.sqrt(rvar + eps)
        y = (y - rmean[None, :, None, None]) * scale[None, :, None, None] \
            + beta[None, :, None, None]
        return jnp.maximum(y, 0.0)

    a = conv_bn_relu(x, p["c1w"], p["c1b"], p["bn1"])
    a = conv_bn_relu(a, p["c2w"], p["c2b"], p["bn2"])
    a = conv_bn_relu(a, p["c3w"], p["c3b"], p["bn3"])
    flat = a.reshape(a.shape[0], -1)              # NCHW flatten == torch .view
    return jnp.dot(flat, p["hw"].T, precision=jax.lax.Precision.HIGHEST) + p["hb"]


if __name__ == "__main__":
    key = jax.random.PRNGKey(0)
    pkey, xkey = jax.random.split(key)
    params = init_params(pkey)

    # Input spatial size dictated by Linear(448, 2): (B, 3, 40, 80)
    # -> conv stack output (B, 32, 2, 7) -> 448 features.  Batch = 2.
    B = 2
    prm = prepare_params(params, batch_size=B)
    x = jax.random.normal(xkey, (B, 3, 40, 80), jnp.float32)

    out = dqn_forward(x, prm)
    jax.block_until_ready(out)
    assert out.shape == (B, 2), out.shape

    # Relative-style cross-check (Pallas path uses bf16 MXU operands, f32 accum).
    ref = _reference_forward(x, params)
    err = float(jnp.max(jnp.abs(out - ref)))
    scale = float(jnp.max(jnp.abs(ref)))
    assert err <= 0.1 * max(scale, 1.0), f"max abs err {err} vs ref scale {scale}"

    print("KERNEL_OK")
</pallas_src>

<mosaic_0001>
module attributes {stable_mosaic.version = 11 : i64} {
  func.func @_conv1_kernel(%arg0: i32, %arg1: memref<1x684x75xbf16, #tpu.memory_space<vmem>>, %arg2: memref<75x16xbf16, #tpu.memory_space<vmem>>, %arg3: memref<1x16xf32, #tpu.memory_space<vmem>>, %arg4: memref<1x16xf32, #tpu.memory_space<vmem>>, %arg5: memref<1x684x16xbf16, #tpu.memory_space<vmem>>) attributes {dimension_semantics = [#tpu.dimension_semantics<parallel>], iteration_bounds = array<i64: 2>, scalar_prefetch = 0 : i64, scratch_operands = 0 : i64, tpu.core_type = #tpu.core_type<tc>, window_params = [{transform_indices = @transform_0, window_bounds = array<i64: 1, 684, 75>}, {pipeline_mode = #tpu.pipeline_mode<synchronous>, transform_indices = @transform_1, window_bounds = array<i64: 75, 16>}, {pipeline_mode = #tpu.pipeline_mode<synchronous>, transform_indices = @transform_2, window_bounds = array<i64: 1, 16>}, {pipeline_mode = #tpu.pipeline_mode<synchronous>, transform_indices = @transform_3, window_bounds = array<i64: 1, 16>}, {transform_indices = @transform_4, window_bounds = array<i64: 1, 684, 16>}]} {
    %c0 = arith.constant 0 : index
    %c0_0 = arith.constant 0 : index
    %c0_1 = arith.constant 0 : index
    %0 = vector.load %arg1[%c0, %c0_0, %c0_1] : memref<1x684x75xbf16, #tpu.memory_space<vmem>>, vector<1x684x75xbf16>
    %1 = vector.shape_cast %0 : vector<1x684x75xbf16> to vector<684x75xbf16>
    %c0_2 = arith.constant 0 : index
    %c0_3 = arith.constant 0 : index
    %2 = vector.load %arg2[%c0_2, %c0_3] : memref<75x16xbf16, #tpu.memory_space<vmem>>, vector<75x16xbf16>
    %cst = arith.constant dense<0.000000e+00> : vector<684x16xf32>
    %3 = tpu.matmul %1, %2, %cst {dimension_numbers = #tpu.dot_dimension_numbers<[1], [0], [0], [1], [0, 0, 1, 1], [], []>} : vector<684x75xbf16>, vector<75x16xbf16>, vector<684x16xf32> -> vector<684x16xf32>
    %c0_4 = arith.constant 0 : index
    %c0_5 = arith.constant 0 : index
    %4 = vector.load %arg3[%c0_4, %c0_5] : memref<1x16xf32, #tpu.memory_space<vmem>>, vector<1x16xf32>
    %5 = vector.broadcast %4 : vector<1x16xf32> to vector<684x16xf32>
    %6 = arith.mulf %3, %5 : vector<684x16xf32>
    %c0_6 = arith.constant 0 : index
    %c0_7 = arith.constant 0 : index
    %7 = vector.load %arg4[%c0_6, %c0_7] : memref<1x16xf32, #tpu.memory_space<vmem>>, vector<1x16xf32>
    %8 = vector.broadcast %7 : vector<1x16xf32> to vector<684x16xf32>
    %9 = arith.addf %6, %8 : vector<684x16xf32>
    %cst_8 = arith.constant 0.000000e+00 : f32
    %10 = vector.broadcast %cst_8 : f32 to vector<684x16xf32>
    %11 = arith.maximumf %9, %10 : vector<684x16xf32>
    %12 = arith.truncf %11 : vector<684x16xf32> to vector<684x16xbf16>
    %c0_9 = arith.constant 0 : index
    %c0_10 = arith.constant 0 : index
    %c0_11 = arith.constant 0 : index
    %13 = vector.load %arg5[%c0_9, %c0_10, %c0_11] : memref<1x684x16xbf16, #tpu.memory_space<vmem>>, vector<1x684x16xbf16>
    %14 = vector.shape_cast %13 : vector<1x684x16xbf16> to vector<684x16xbf16>
    %15 = vector.shape_cast %12 : vector<684x16xbf16> to vector<1x684x16xbf16>
    tpu.vector_store %arg5[%c0_9, %c0_10, %c0_11], %15 {strides = array<i32>} : memref<1x684x16xbf16, #tpu.memory_space<vmem>>, vector<1x684x16xbf16>,
    return
  }
  func.func @transform_0(%arg0: i32) -> (i32, i32, i32) {
    %c0_i32 = arith.constant 0 : i32
    %c0_i32_0 = arith.constant 0 : i32
    %c0_i32_1 = arith.constant 0 : i32
    return %arg0, %c0_i32, %c0_i32_0 : i32, i32, i32
  }
  func.func @transform_1(%arg0: i32) -> (i32, i32) {
    %c0_i32 = arith.constant 0 : i32
    %c0_i32_0 = arith.constant 0 : i32
    %c0_i32_1 = arith.constant 0 : i32
    return %c0_i32, %c0_i32_0 : i32, i32
  }
  func.func @transform_2(%arg0: i32) -> (i32, i32) {
    %c0_i32 = arith.constant 0 : i32
    %c0_i32_0 = arith.constant 0 : i32
    %c0_i32_1 = arith.constant 0 : i32
    return %c0_i32, %c0_i32_0 : i32, i32
  }
  func.func @transform_3(%arg0: i32) -> (i32, i32) {
    %c0_i32 = arith.constant 0 : i32
    %c0_i32_0 = arith.constant 0 : i32
    %c0_i32_1 = arith.constant 0 : i32
    return %c0_i32, %c0_i32_0 : i32, i32
  }
  func.func @transform_4(%arg0: i32) -> (i32, i32, i32) {
    %c0_i32 = arith.constant 0 : i32
    %c0_i32_0 = arith.constant 0 : i32
    %c0_i32_1 = arith.constant 0 : i32
    return %arg0, %c0_i32, %c0_i32_0 : i32, i32, i32
  }
}

module attributes {stable_mosaic.version = 11 : i64} {
  func.func @_fused_tail_kernel(%arg0: i32, %arg1: memref<238x400xbf16, #tpu.memory_space<vmem>>, %arg2: memref<400x32xbf16, #tpu.memory_space<vmem>>, %arg3: memref<1x32xf32, #tpu.memory_space<vmem>>, %arg4: memref<1x32xf32, #tpu.memory_space<vmem>>, %arg5: memref<800x32xbf16, #tpu.memory_space<vmem>>, %arg6: memref<1x32xf32, #tpu.memory_space<vmem>>, %arg7: memref<1x32xf32, #tpu.memory_space<vmem>>, %arg8: memref<2x28x32xf32, #tpu.memory_space<vmem>>, %arg9: memref<1x2xf32, #tpu.memory_space<vmem>>, %arg10: memref<2x2xf32, #tpu.memory_space<vmem>>, %arg11: memref<238x32xf32, #tpu.memory_space<vmem>>) attributes {dimension_semantics = [#tpu.dimension_semantics<arbitrary>], iteration_bounds = array<i64: 1>, scalar_prefetch = 0 : i64, scratch_operands = 1 : i64, tpu.core_type = #tpu.core_type<tc>, window_params = [{pipeline_mode = #tpu.pipeline_mode<synchronous>, transform_indices = @transform_0, window_bounds = array<i64: 238, 400>}, {pipeline_mode = #tpu.pipeline_mode<synchronous>, transform_indices = @transform_1, window_bounds = array<i64: 400, 32>}, {pipeline_mode = #tpu.pipeline_mode<synchronous>, transform_indices = @transform_2, window_bounds = array<i64: 1, 32>}, {pipeline_mode = #tpu.pipeline_mode<synchronous>, transform_indices = @transform_3, window_bounds = array<i64: 1, 32>}, {pipeline_mode = #tpu.pipeline_mode<synchronous>, transform_indices = @transform_4, window_bounds = array<i64: 800, 32>}, {pipeline_mode = #tpu.pipeline_mode<synchronous>, transform_indices = @transform_5, window_bounds = array<i64: 1, 32>}, {pipeline_mode = #tpu.pipeline_mode<synchronous>, transform_indices = @transform_6, window_bounds = array<i64: 1, 32>}, {pipeline_mode = #tpu.pipeline_mode<synchronous>, transform_indices = @transform_7, window_bounds = array<i64: 2, 28, 32>}, {pipeline_mode = #tpu.pipeline_mode<synchronous>, transform_indices = @transform_8, window_bounds = array<i64: 1, 2>}, {pipeline_mode = #tpu.pipeline_mode<synchronous>, transform_indices = @transform_9, window_bounds = array<i64: 2, 2>}]} {
    %c0 = arith.constant 0 : index
    %c0_0 = arith.constant 0 : index
    %0 = vector.load %arg1[%c0, %c0_0] : memref<238x400xbf16, #tpu.memory_space<vmem>>, vector<238x400xbf16>
    %c0_1 = arith.constant 0 : index
    %c0_2 = arith.constant 0 : index
    %1 = vector.load %arg2[%c0_1, %c0_2] : memref<400x32xbf16, #tpu.memory_space<vmem>>, vector<400x32xbf16>
    %cst = arith.constant dense<0.000000e+00> : vector<238x32xf32>
    %2 = tpu.matmul %0, %1, %cst {dimension_numbers = #tpu.dot_dimension_numbers<[1], [0], [0], [1], [0, 0, 1, 1], [], []>} : vector<238x400xbf16>, vector<400x32xbf16>, vector<238x32xf32> -> vector<238x32xf32>
    %c0_3 = arith.constant 0 : index
    %c0_4 = arith.constant 0 : index
    %3 = vector.load %arg3[%c0_3, %c0_4] : memref<1x32xf32, #tpu.memory_space<vmem>>, vector<1x32xf32>
    %4 = vector.broadcast %3 : vector<1x32xf32> to vector<238x32xf32>
    %5 = arith.mulf %2, %4 : vector<238x32xf32>
    %c0_5 = arith.constant 0 : index
    %c0_6 = arith.constant 0 : index
    %6 = vector.load %arg4[%c0_5, %c0_6] : memref<1x32xf32, #tpu.memory_space<vmem>>, vector<1x32xf32>
    %7 = vector.broadcast %6 : vector<1x32xf32> to vector<238x32xf32>
    %8 = arith.addf %5, %7 : vector<238x32xf32>
    %cst_7 = arith.constant 0.000000e+00 : f32
    %9 = vector.broadcast %cst_7 : f32 to vector<238x32xf32>
    %10 = arith.maximumf %8, %9 : vector<238x32xf32>
    %c0_8 = arith.constant 0 : index
    %c0_9 = arith.constant 0 : index
    %11 = vector.load %arg11[%c0_8, %c0_9] : memref<238x32xf32, #tpu.memory_space<vmem>>, vector<238x32xf32>
    tpu.vector_store %arg11[%c0_8, %c0_9], %10 {strides = array<i32>} : memref<238x32xf32, #tpu.memory_space<vmem>>, vector<238x32xf32>,
    %c0_10 = arith.constant 0 : index
    %c0_11 = arith.constant 0 : index
    %12 = tpu.strided_load %arg11[%c0_10, %c0_11] {strides = array<i32: 2, 1>} : memref<238x32xf32, #tpu.memory_space<vmem>>, vector<7x32xf32>
    %c1 = arith.constant 1 : index
    %c0_12 = arith.constant 0 : index
    %13 = tpu.strided_load %arg11[%c1, %c0_12] {strides = array<i32: 2, 1>} : memref<238x32xf32, #tpu.memory_space<vmem>>, vector<7x32xf32>
    %c2 = arith.constant 2 : index
    %c0_13 = arith.constant 0 : index
    %14 = tpu.strided_load %arg11[%c2, %c0_13] {strides = array<i32: 2, 1>} : memref<238x32xf32, #tpu.memory_space<vmem>>, vector<7x32xf32>
    %c3 = arith.constant 3 : index
    %c0_14 = arith.constant 0 : index
    %15 = tpu.strided_load %arg11[%c3, %c0_14] {strides = array<i32: 2, 1>} : memref<238x32xf32, #tpu.memory_space<vmem>>, vector<7x32xf32>
    %c4 = arith.constant 4 : index
    %c0_15 = arith.constant 0 : index
    %16 = tpu.strided_load %arg11[%c4, %c0_15] {strides = array<i32: 2, 1>} : memref<238x32xf32, #tpu.memory_space<vmem>>, vector<7x32xf32>
    %c17 = arith.constant 17 : index
    %c0_16 = arith.constant 0 : index
    %17 = tpu.strided_load %arg11[%c17, %c0_16] {strides = array<i32: 2, 1>} : memref<238x32xf32, #tpu.memory_space<vmem>>, vector<7x32xf32>
    %c18 = arith.constant 18 : index
    %c0_17 = arith.constant 0 : index
    %18 = tpu.strided_load %arg11[%c18, %c0_17] {strides = array<i32: 2, 1>} : memref<238x32xf32, #tpu.memory_space<vmem>>, vector<7x32xf32>
    %c19 = arith.constant 19 : index
    %c0_18 = arith.constant 0 : index
    %19 = tpu.strided_load %arg11[%c19, %c0_18] {strides = array<i32: 2, 1>} : memref<238x32xf32, #tpu.memory_space<vmem>>, vector<7x32xf32>
    %c20 = arith.constant 20 : index
    %c0_19 = arith.constant 0 : index
    %20 = tpu.strided_load %arg11[%c20, %c0_19] {strides = array<i32: 2, 1>} : memref<238x32xf32, #tpu.memory_space<vmem>>, vector<7x32xf32>
    %c21 = arith.constant 21 : index
    %c0_20 = arith.constant 0 : index
    %21 = tpu.strided_load %arg11[%c21, %c0_20] {strides = array<i32: 2, 1>} : memref<238x32xf32, #tpu.memory_space<vmem>>, vector<7x32xf32>
    %c34 = arith.constant 34 : index
    %c0_21 = arith.constant 0 : index
    %22 = tpu.strided_load %arg11[%c34, %c0_21] {strides = array<i32: 2, 1>} : memref<238x32xf32, #tpu.memory_space<vmem>>, vector<7x32xf32>
    %c35 = arith.constant 35 : index
    %c0_22 = arith.constant 0 : index
    %23 = tpu.strided_load %arg11[%c35, %c0_22] {strides = array<i32: 2, 1>} : memref<238x32xf32, #tpu.memory_space<vmem>>, vector<7x32xf32>
    %c36 = arith.constant 36 : index
    %c0_23 = arith.constant 0 : index
    %24 = tpu.strided_load %arg11[%c36, %c0_23] {strides = array<i32: 2, 1>} : memref<238x32xf32, #tpu.memory_space<vmem>>, vector<7x32xf32>
    %c37 = arith.constant 37 : index
    %c0_24 = arith.constant 0 : index
    %25 = tpu.strided_load %arg11[%c37, %c0_24] {strides = array<i32: 2, 1>} : memref<238x32xf32, #tpu.memory_space<vmem>>, vector<7x32xf32>
    %c38 = arith.constant 38 : index
    %c0_25 = arith.constant 0 : index
    %26 = tpu.strided_load %arg11[%c38, %c0_25] {strides = array<i32: 2, 1>} : memref<238x32xf32, #tpu.memory_space<vmem>>, vector<7x32xf32>
    %c51 = arith.constant 51 : index
    %c0_26 = arith.constant 0 : index
    %27 = tpu.strided_load %arg11[%c51, %c0_26] {strides = array<i32: 2, 1>} : memref<238x32xf32, #tpu.memory_space<vmem>>, vector<7x32xf32>
    %c52 = arith.constant 52 : index
    %c0_27 = arith.constant 0 : index
    %28 = tpu.strided_load %arg11[%c52, %c0_27] {strides = array<i32: 2, 1>} : memref<238x32xf32, #tpu.memory_space<vmem>>, vector<7x32xf32>
    %c53 = arith.constant 53 : index
    %c0_28 = arith.constant 0 : index
    %29 = tpu.strided_load %arg11[%c53, %c0_28] {strides = array<i32: 2, 1>} : memref<238x32xf32, #tpu.memory_space<vmem>>, vector<7x32xf32>
    %c54 = arith.constant 54 : index
    %c0_29 = arith.constant 0 : index
    %30 = tpu.strided_load %arg11[%c54, %c0_29] {strides = array<i32: 2, 1>} : memref<238x32xf32, #tpu.memory_space<vmem>>, vector<7x32xf32>
    %c55 = arith.constant 55 : index
    %c0_30 = arith.constant 0 : index
    %31 = tpu.strided_load %arg11[%c55, %c0_30] {strides = array<i32: 2, 1>} : memref<238x32xf32, #tpu.memory_space<vmem>>, vector<7x32xf32>
    %c68 = arith.constant 68 : index
    %c0_31 = arith.constant 0 : index
    %32 = tpu.strided_load %arg11[%c68, %c0_31] {strides = array<i32: 2, 1>} : memref<238x32xf32, #tpu.memory_space<vmem>>, vector<7x32xf32>
    %c69 = arith.constant 69 : index
    %c0_32 = arith.constant 0 : index
    %33 = tpu.strided_load %arg11[%c69, %c0_32] {strides = array<i32: 2, 1>} : memref<238x32xf32, #tpu.memory_space<vmem>>, vector<7x32xf32>
    %c70 = arith.constant 70 : index
    %c0_33 = arith.constant 0 : index
    %34 = tpu.strided_load %arg11[%c70, %c0_33] {strides = array<i32: 2, 1>} : memref<238x32xf32, #tpu.memory_space<vmem>>, vector<7x32xf32>
    %c71 = arith.constant 71 : index
    %c0_34 = arith.constant 0 : index
    %35 = tpu.strided_load %arg11[%c71, %c0_34] {strides = array<i32: 2, 1>} : memref<238x32xf32, #tpu.memory_space<vmem>>, vector<7x32xf32>
    %c72 = arith.constant 72 : index
    %c0_35 = arith.constant 0 : index
    %36 = tpu.strided_load %arg11[%c72, %c0_35] {strides = array<i32: 2, 1>} : memref<238x32xf32, #tpu.memory_space<vmem>>, vector<7x32xf32>
    %37 = tpu.concatenate %12, %13, %14, %15, %16, %17, %18, %19, %20, %21, %22, %23, %24, %25, %26, %27 in 1 : vector<7x32xf32>, vector<7x32xf32>, vector<7x32xf32>, vector<7x32xf32>, vector<7x32xf32>, vector<7x32xf32>, vector<7x32xf32>, vector<7x32xf32>, vector<7x32xf32>, vector<7x32xf32>, vector<7x32xf32>, vector<7x32xf32>, vector<7x32xf32>, vector<7x32xf32>, vector<7x32xf32>, vector<7x32xf32> -> vector<7x512xf32>
    %38 = tpu.concatenate %28, %29, %30, %31, %32, %33, %34, %35, %36 in 1 : vector<7x32xf32>, vector<7x32xf32>, vector<7x32xf32>, vector<7x32xf32>, vector<7x32xf32>, vector<7x32xf32>, vector<7x32xf32>, vector<7x32xf32>, vector<7x32xf32> -> vector<7x288xf32>
    %39 = tpu.concatenate %37, %38 in 1 : vector<7x512xf32>, vector<7x288xf32> -> vector<7x800xf32>
    %c34_36 = arith.constant 34 : index
    %c0_37 = arith.constant 0 : index
    %40 = tpu.strided_load %arg11[%c34_36, %c0_37] {strides = array<i32: 2, 1>} : memref<238x32xf32, #tpu.memory_space<vmem>>, vector<7x32xf32>
    %c35_38 = arith.constant 35 : index
    %c0_39 = arith.constant 0 : index
    %41 = tpu.strided_load %arg11[%c35_38, %c0_39] {strides = array<i32: 2, 1>} : memref<238x32xf32, #tpu.memory_space<vmem>>, vector<7x32xf32>
    %c36_40 = arith.constant 36 : index
    %c0_41 = arith.constant 0 : index
    %42 = tpu.strided_load %arg11[%c36_40, %c0_41] {strides = array<i32: 2, 1>} : memref<238x32xf32, #tpu.memory_space<vmem>>, vector<7x32xf32>
    %c37_42 = arith.constant 37 : index
    %c0_43 = arith.constant 0 : index
    %43 = tpu.strided_load %arg11[%c37_42, %c0_43] {strides = array<i32: 2, 1>} : memref<238x32xf32, #tpu.memory_space<vmem>>, vector<7x32xf32>
    %c38_44 = arith.constant 38 : index
    %c0_45 = arith.constant 0 : index
    %44 = tpu.strided_load %arg11[%c38_44, %c0_45] {strides = array<i32: 2, 1>} : memref<238x32xf32, #tpu.memory_space<vmem>>, vector<7x32xf32>
    %c51_46 = arith.constant 51 : index
    %c0_47 = arith.constant 0 : index
    %45 = tpu.strided_load %arg11[%c51_46, %c0_47] {strides = array<i32: 2, 1>} : memref<238x32xf32, #tpu.memory_space<vmem>>, vector<7x32xf32>
    %c52_48 = arith.constant 52 : index
    %c0_49 = arith.constant 0 : index
    %46 = tpu.strided_load %arg11[%c52_48, %c0_49] {strides = array<i32: 2, 1>} : memref<238x32xf32, #tpu.memory_space<vmem>>, vector<7x32xf32>
    %c53_50 = arith.constant 53 : index
    %c0_51 = arith.constant 0 : index
    %47 = tpu.strided_load %arg11[%c53_50, %c0_51] {strides = array<i32: 2, 1>} : memref<238x32xf32, #tpu.memory_space<vmem>>, vector<7x32xf32>
    %c54_52 = arith.constant 54 : index
    %c0_53 = arith.constant 0 : index
    %48 = tpu.strided_load %arg11[%c54_52, %c0_53] {strides = array<i32: 2, 1>} : memref<238x32xf32, #tpu.memory_space<vmem>>, vector<7x32xf32>
    %c55_54 = arith.constant 55 : index
    %c0_55 = arith.constant 0 : index
    %49 = tpu.strided_load %arg11[%c55_54, %c0_55] {strides = array<i32: 2, 1>} : memref<238x32xf32, #tpu.memory_space<vmem>>, vector<7x32xf32>
    %c68_56 = arith.constant 68 : index
    %c0_57 = arith.constant 0 : index
    %50 = tpu.strided_load %arg11[%c68_56, %c0_57] {strides = array<i32: 2, 1>} : memref<238x32xf32, #tpu.memory_space<vmem>>, vector<7x32xf32>
    %c69_58 = arith.constant 69 : index
    %c0_59 = arith.constant 0 : index
    %51 = tpu.strided_load %arg11[%c69_58, %c0_59] {strides = array<i32: 2, 1>} : memref<238x32xf32, #tpu.memory_space<vmem>>, vector<7x32xf32>
    %c70_60 = arith.constant 70 : index
    %c0_61 = arith.constant 0 : index
    %52 = tpu.strided_load %arg11[%c70_60, %c0_61] {strides = array<i32: 2, 1>} : memref<238x32xf32, #tpu.memory_space<vmem>>, vector<7x32xf32>
    %c71_62 = arith.constant 71 : index
    %c0_63 = arith.constant 0 : index
    %53 = tpu.strided_load %arg11[%c71_62, %c0_63] {strides = array<i32: 2, 1>} : memref<238x32xf32, #tpu.memory_space<vmem>>, vector<7x32xf32>
    %c72_64 = arith.constant 72 : index
    %c0_65 = arith.constant 0 : index
    %54 = tpu.strided_load %arg11[%c72_64, %c0_65] {strides = array<i32: 2, 1>} : memref<238x32xf32, #tpu.memory_space<vmem>>, vector<7x32xf32>
    %c85 = arith.constant 85 : index
    %c0_66 = arith.constant 0 : index
    %55 = tpu.strided_load %arg11[%c85, %c0_66] {strides = array<i32: 2, 1>} : memref<238x32xf32, #tpu.memory_space<vmem>>, vector<7x32xf32>
    %c86 = arith.constant 86 : index
    %c0_67 = arith.constant 0 : index
    %56 = tpu.strided_load %arg11[%c86, %c0_67] {strides = array<i32: 2, 1>} : memref<238x32xf32, #tpu.memory_space<vmem>>, vector<7x32xf32>
    %c87 = arith.constant 87 : index
    %c0_68 = arith.constant 0 : index
    %57 = tpu.strided_load %arg11[%c87, %c0_68] {strides = array<i32: 2, 1>} : memref<238x32xf32, #tpu.memory_space<vmem>>, vector<7x32xf32>
    %c88 = arith.constant 88 : index
    %c0_69 = arith.constant 0 : index
    %58 = tpu.strided_load %arg11[%c88, %c0_69] {strides = array<i32: 2, 1>} : memref<238x32xf32, #tpu.memory_space<vmem>>, vector<7x32xf32>
    %c89 = arith.constant 89 : index
    %c0_70 = arith.constant 0 : index
    %59 = tpu.strided_load %arg11[%c89, %c0_70] {strides = array<i32: 2, 1>} : memref<238x32xf32, #tpu.memory_space<vmem>>, vector<7x32xf32>
    %c102 = arith.constant 102 : index
    %c0_71 = arith.constant 0 : index
    %60 = tpu.strided_load %arg11[%c102, %c0_71] {strides = array<i32: 2, 1>} : memref<238x32xf32, #tpu.memory_space<vmem>>, vector<7x32xf32>
    %c103 = arith.constant 103 : index
    %c0_72 = arith.constant 0 : index
    %61 = tpu.strided_load %arg11[%c103, %c0_72] {strides = array<i32: 2, 1>} : memref<238x32xf32, #tpu.memory_space<vmem>>, vector<7x32xf32>
    %c104 = arith.constant 104 : index
    %c0_73 = arith.constant 0 : index
    %62 = tpu.strided_load %arg11[%c104, %c0_73] {strides = array<i32: 2, 1>} : memref<238x32xf32, #tpu.memory_space<vmem>>, vector<7x32xf32>
    %c105 = arith.constant 105 : index
    %c0_74 = arith.constant 0 : index
    %63 = tpu.strided_load %arg11[%c105, %c0_74] {strides = array<i32: 2, 1>} : memref<238x32xf32, #tpu.memory_space<vmem>>, vector<7x32xf32>
    %c106 = arith.constant 106 : index
    %c0_75 = arith.constant 0 : index
    %64 = tpu.strided_load %arg11[%c106, %c0_75] {strides = array<i32: 2, 1>} : memref<238x32xf32, #tpu.memory_space<vmem>>, vector<7x32xf32>
    %65 = tpu.concatenate %40, %41, %42, %43, %44, %45, %46, %47, %48, %49, %50, %51, %52, %53, %54, %55 in 1 : vector<7x32xf32>, vector<7x32xf32>, vector<7x32xf32>, vector<7x32xf32>, vector<7x32xf32>, vector<7x32xf32>, vector<7x32xf32>, vector<7x32xf32>, vector<7x32xf32>, vector<7x32xf32>, vector<7x32xf32>, vector<7x32xf32>, vector<7x32xf32>, vector<7x32xf32>, vector<7x32xf32>, vector<7x32xf32> -> vector<7x512xf32>
    %66 = tpu.concatenate %56, %57, %58, %59, %60, %61, %62, %63, %64 in 1 : vector<7x32xf32>, vector<7x32xf32>, vector<7x32xf32>, vector<7x32xf32>, vector<7x32xf32>, vector<7x32xf32>, vector<7x32xf32>, vector<7x32xf32>, vector<7x32xf32> -> vector<7x288xf32>
    %67 = tpu.concatenate %65, %66 in 1 : vector<7x512xf32>, vector<7x288xf32> -> vector<7x800xf32>
    %c119 = arith.constant 119 : index
    %c0_76 = arith.constant 0 : index
    %68 = tpu.strided_load %arg11[%c119, %c0_76] {strides = array<i32: 2, 1>} : memref<238x32xf32, #tpu.memory_space<vmem>>, vector<7x32xf32>
    %c120 = arith.constant 120 : index
    %c0_77 = arith.constant 0 : index
    %69 = tpu.strided_load %arg11[%c120, %c0_77] {strides = array<i32: 2, 1>} : memref<238x32xf32, #tpu.memory_space<vmem>>, vector<7x32xf32>
    %c121 = arith.constant 121 : index
    %c0_78 = arith.constant 0 : index
    %70 = tpu.strided_load %arg11[%c121, %c0_78] {strides = array<i32: 2, 1>} : memref<238x32xf32, #tpu.memory_space<vmem>>, vector<7x32xf32>
    %c122 = arith.constant 122 : index
    %c0_79 = arith.constant 0 : index
    %71 = tpu.strided_load %arg11[%c122, %c0_79] {strides = array<i32: 2, 1>} : memref<238x32xf32, #tpu.memory_space<vmem>>, vector<7x32xf32>
    %c123 = arith.constant 123 : index
    %c0_80 = arith.constant 0 : index
    %72 = tpu.strided_load %arg11[%c123, %c0_80] {strides = array<i32: 2, 1>} : memref<238x32xf32, #tpu.memory_space<vmem>>, vector<7x32xf32>
    %c136 = arith.constant 136 : index
    %c0_81 = arith.constant 0 : index
    %73 = tpu.strided_load %arg11[%c136, %c0_81] {strides = array<i32: 2, 1>} : memref<238x32xf32, #tpu.memory_space<vmem>>, vector<7x32xf32>
    %c137 = arith.constant 137 : index
    %c0_82 = arith.constant 0 : index
    %74 = tpu.strided_load %arg11[%c137, %c0_82] {strides = array<i32: 2, 1>} : memref<238x32xf32, #tpu.memory_space<vmem>>, vector<7x32xf32>
    %c138 = arith.constant 138 : index
    %c0_83 = arith.constant 0 : index
    %75 = tpu.strided_load %arg11[%c138, %c0_83] {strides = array<i32: 2, 1>} : memref<238x32xf32, #tpu.memory_space<vmem>>, vector<7x32xf32>
    %c139 = arith.constant 139 : index
    %c0_84 = arith.constant 0 : index
    %76 = tpu.strided_load %arg11[%c139, %c0_84] {strides = array<i32: 2, 1>} : memref<238x32xf32, #tpu.memory_space<vmem>>, vector<7x32xf32>
    %c140 = arith.constant 140 : index
    %c0_85 = arith.constant 0 : index
    %77 = tpu.strided_load %arg11[%c140, %c0_85] {strides = array<i32: 2, 1>} : memref<238x32xf32, #tpu.memory_space<vmem>>, vector<7x32xf32>
    %c153 = arith.constant 153 : index
    %c0_86 = arith.constant 0 : index
    %78 = tpu.strided_load %arg11[%c153, %c0_86] {strides = array<i32: 2, 1>} : memref<238x32xf32, #tpu.memory_space<vmem>>, vector<7x32xf32>
    %c154 = arith.constant 154 : index
    %c0_87 = arith.constant 0 : index
    %79 = tpu.strided_load %arg11[%c154, %c0_87] {strides = array<i32: 2, 1>} : memref<238x32xf32, #tpu.memory_space<vmem>>, vector<7x32xf32>
    %c155 = arith.constant 155 : index
    %c0_88 = arith.constant 0 : index
    %80 = tpu.strided_load %arg11[%c155, %c0_88] {strides = array<i32: 2, 1>} : memref<238x32xf32, #tpu.memory_space<vmem>>, vector<7x32xf32>
    %c156 = arith.constant 156 : index
    %c0_89 = arith.constant 0 : index
    %81 = tpu.strided_load %arg11[%c156, %c0_89] {strides = array<i32: 2, 1>} : memref<238x32xf32, #tpu.memory_space<vmem>>, vector<7x32xf32>
    %c157 = arith.constant 157 : index
    %c0_90 = arith.constant 0 : index
    %82 = tpu.strided_load %arg11[%c157, %c0_90] {strides = array<i32: 2, 1>} : memref<238x32xf32, #tpu.memory_space<vmem>>, vector<7x32xf32>
    %c170 = arith.constant 170 : index
    %c0_91 = arith.constant 0 : index
    %83 = tpu.strided_load %arg11[%c170, %c0_91] {strides = array<i32: 2, 1>} : memref<238x32xf32, #tpu.memory_space<vmem>>, vector<7x32xf32>
    %c171 = arith.constant 171 : index
    %c0_92 = arith.constant 0 : index
    %84 = tpu.strided_load %arg11[%c171, %c0_92] {strides = array<i32: 2, 1>} : memref<238x32xf32, #tpu.memory_space<vmem>>, vector<7x32xf32>
    %c172 = arith.constant 172 : index
    %c0_93 = arith.constant 0 : index
    %85 = tpu.strided_load %arg11[%c172, %c0_93] {strides = array<i32: 2, 1>} : memref<238x32xf32, #tpu.memory_space<vmem>>, vector<7x32xf32>
    %c173 = arith.constant 173 : index
    %c0_94 = arith.constant 0 : index
    %86 = tpu.strided_load %arg11[%c173, %c0_94] {strides = array<i32: 2, 1>} : memref<238x32xf32, #tpu.memory_space<vmem>>, vector<7x32xf32>
    %c174 = arith.constant 174 : index
    %c0_95 = arith.constant 0 : index
    %87 = tpu.strided_load %arg11[%c174, %c0_95] {strides = array<i32: 2, 1>} : memref<238x32xf32, #tpu.memory_space<vmem>>, vector<7x32xf32>
    %c187 = arith.constant 187 : index
    %c0_96 = arith.constant 0 : index
    %88 = tpu.strided_load %arg11[%c187, %c0_96] {strides = array<i32: 2, 1>} : memref<238x32xf32, #tpu.memory_space<vmem>>, vector<7x32xf32>
    %c188 = arith.constant 188 : index
    %c0_97 = arith.constant 0 : index
    %89 = tpu.strided_load %arg11[%c188, %c0_97] {strides = array<i32: 2, 1>} : memref<238x32xf32, #tpu.memory_space<vmem>>, vector<7x32xf32>
    %c189 = arith.constant 189 : index
    %c0_98 = arith.constant 0 : index
    %90 = tpu.strided_load %arg11[%c189, %c0_98] {strides = array<i32: 2, 1>} : memref<238x32xf32, #tpu.memory_space<vmem>>, vector<7x32xf32>
    %c190 = arith.constant 190 : index
    %c0_99 = arith.constant 0 : index
    %91 = tpu.strided_load %arg11[%c190, %c0_99] {strides = array<i32: 2, 1>} : memref<238x32xf32, #tpu.memory_space<vmem>>, vector<7x32xf32>
    %c191 = arith.constant 191 : index
    %c0_100 = arith.constant 0 : index
    %92 = tpu.strided_load %arg11[%c191, %c0_100] {strides = array<i32: 2, 1>} : memref<238x32xf32, #tpu.memory_space<vmem>>, vector<7x32xf32>
    %93 = tpu.concatenate %68, %69, %70, %71, %72, %73, %74, %75, %76, %77, %78, %79, %80, %81, %82, %83 in 1 : vector<7x32xf32>, vector<7x32xf32>, vector<7x32xf32>, vector<7x32xf32>, vector<7x32xf32>, vector<7x32xf32>, vector<7x32xf32>, vector<7x32xf32>, vector<7x32xf32>, vector<7x32xf32>, vector<7x32xf32>, vector<7x32xf32>, vector<7x32xf32>, vector<7x32xf32>, vector<7x32xf32>, vector<7x32xf32> -> vector<7x512xf32>
    %94 = tpu.concatenate %84, %85, %86, %87, %88, %89, %90, %91, %92 in 1 : vector<7x32xf32>, vector<7x32xf32>, vector<7x32xf32>, vector<7x32xf32>, vector<7x32xf32>, vector<7x32xf32>, vector<7x32xf32>, vector<7x32xf32>, vector<7x32xf32> -> vector<7x288xf32>
    %95 = tpu.concatenate %93, %94 in 1 : vector<7x512xf32>, vector<7x288xf32> -> vector<7x800xf32>
    %c153_101 = arith.constant 153 : index
    %c0_102 = arith.constant 0 : index
    %96 = tpu.strided_load %arg11[%c153_101, %c0_102] {strides = array<i32: 2, 1>} : memref<238x32xf32, #tpu.memory_space<vmem>>, vector<7x32xf32>
    %c154_103 = arith.constant 154 : index
    %c0_104 = arith.constant 0 : index
    %97 = tpu.strided_load %arg11[%c154_103, %c0_104] {strides = array<i32: 2, 1>} : memref<238x32xf32, #tpu.memory_space<vmem>>, vector<7x32xf32>
    %c155_105 = arith.constant 155 : index
    %c0_106 = arith.constant 0 : index
    %98 = tpu.strided_load %arg11[%c155_105, %c0_106] {strides = array<i32: 2, 1>} : memref<238x32xf32, #tpu.memory_space<vmem>>, vector<7x32xf32>
    %c156_107 = arith.constant 156 : index
    %c0_108 = arith.constant 0 : index
    %99 = tpu.strided_load %arg11[%c156_107, %c0_108] {strides = array<i32: 2, 1>} : memref<238x32xf32, #tpu.memory_space<vmem>>, vector<7x32xf32>
    %c157_109 = arith.constant 157 : index
    %c0_110 = arith.constant 0 : index
    %100 = tpu.strided_load %arg11[%c157_109, %c0_110] {strides = array<i32: 2, 1>} : memref<238x32xf32, #tpu.memory_space<vmem>>, vector<7x32xf32>
    %c170_111 = arith.constant 170 : index
    %c0_112 = arith.constant 0 : index
    %101 = tpu.strided_load %arg11[%c170_111, %c0_112] {strides = array<i32: 2, 1>} : memref<238x32xf32, #tpu.memory_space<vmem>>, vector<7x32xf32>
    %c171_113 = arith.constant 171 : index
    %c0_114 = arith.constant 0 : index
    %102 = tpu.strided_load %arg11[%c171_113, %c0_114] {strides = array<i32: 2, 1>} : memref<238x32xf32, #tpu.memory_space<vmem>>, vector<7x32xf32>
    %c172_115 = arith.constant 172 : index
    %c0_116 = arith.constant 0 : index
    %103 = tpu.strided_load %arg11[%c172_115, %c0_116] {strides = array<i32: 2, 1>} : memref<238x32xf32, #tpu.memory_space<vmem>>, vector<7x32xf32>
    %c173_117 = arith.constant 173 : index
    %c0_118 = arith.constant 0 : index
    %104 = tpu.strided_load %arg11[%c173_117, %c0_118] {strides = array<i32: 2, 1>} : memref<238x32xf32, #tpu.memory_space<vmem>>, vector<7x32xf32>
    %c174_119 = arith.constant 174 : index
    %c0_120 = arith.constant 0 : index
    %105 = tpu.strided_load %arg11[%c174_119, %c0_120] {strides = array<i32: 2, 1>} : memref<238x32xf32, #tpu.memory_space<vmem>>, vector<7x32xf32>
    %c187_121 = arith.constant 187 : index
    %c0_122 = arith.constant 0 : index
    %106 = tpu.strided_load %arg11[%c187_121, %c0_122] {strides = array<i32: 2, 1>} : memref<238x32xf32, #tpu.memory_space<vmem>>, vector<7x32xf32>
    %c188_123 = arith.constant 188 : index
    %c0_124 = arith.constant 0 : index
    %107 = tpu.strided_load %arg11[%c188_123, %c0_124] {strides = array<i32: 2, 1>} : memref<238x32xf32, #tpu.memory_space<vmem>>, vector<7x32xf32>
    %c189_125 = arith.constant 189 : index
    %c0_126 = arith.constant 0 : index
    %108 = tpu.strided_load %arg11[%c189_125, %c0_126] {strides = array<i32: 2, 1>} : memref<238x32xf32, #tpu.memory_space<vmem>>, vector<7x32xf32>
    %c190_127 = arith.constant 190 : index
    %c0_128 = arith.constant 0 : index
    %109 = tpu.strided_load %arg11[%c190_127, %c0_128] {strides = array<i32: 2, 1>} : memref<238x32xf32, #tpu.memory_space<vmem>>, vector<7x32xf32>
    %c191_129 = arith.constant 191 : index
    %c0_130 = arith.constant 0 : index
    %110 = tpu.strided_load %arg11[%c191_129, %c0_130] {strides = array<i32: 2, 1>} : memref<238x32xf32, #tpu.memory_space<vmem>>, vector<7x32xf32>
    %c204 = arith.constant 204 : index
    %c0_131 = arith.constant 0 : index
    %111 = tpu.strided_load %arg11[%c204, %c0_131] {strides = array<i32: 2, 1>} : memref<238x32xf32, #tpu.memory_space<vmem>>, vector<7x32xf32>
    %c205 = arith.constant 205 : index
    %c0_132 = arith.constant 0 : index
    %112 = tpu.strided_load %arg11[%c205, %c0_132] {strides = array<i32: 2, 1>} : memref<238x32xf32, #tpu.memory_space<vmem>>, vector<7x32xf32>
    %c206 = arith.constant 206 : index
    %c0_133 = arith.constant 0 : index
    %113 = tpu.strided_load %arg11[%c206, %c0_133] {strides = array<i32: 2, 1>} : memref<238x32xf32, #tpu.memory_space<vmem>>, vector<7x32xf32>
    %c207 = arith.constant 207 : index
    %c0_134 = arith.constant 0 : index
    %114 = tpu.strided_load %arg11[%c207, %c0_134] {strides = array<i32: 2, 1>} : memref<238x32xf32, #tpu.memory_space<vmem>>, vector<7x32xf32>
    %c208 = arith.constant 208 : index
    %c0_135 = arith.constant 0 : index
    %115 = tpu.strided_load %arg11[%c208, %c0_135] {strides = array<i32: 2, 1>} : memref<238x32xf32, #tpu.memory_space<vmem>>, vector<7x32xf32>
    %c221 = arith.constant 221 : index
    %c0_136 = arith.constant 0 : index
    %116 = tpu.strided_load %arg11[%c221, %c0_136] {strides = array<i32: 2, 1>} : memref<238x32xf32, #tpu.memory_space<vmem>>, vector<7x32xf32>
    %c222 = arith.constant 222 : index
    %c0_137 = arith.constant 0 : index
    %117 = tpu.strided_load %arg11[%c222, %c0_137] {strides = array<i32: 2, 1>} : memref<238x32xf32, #tpu.memory_space<vmem>>, vector<7x32xf32>
    %c223 = arith.constant 223 : index
    %c0_138 = arith.constant 0 : index
    %118 = tpu.strided_load %arg11[%c223, %c0_138] {strides = array<i32: 2, 1>} : memref<238x32xf32, #tpu.memory_space<vmem>>, vector<7x32xf32>
    %c224 = arith.constant 224 : index
    %c0_139 = arith.constant 0 : index
    %119 = tpu.strided_load %arg11[%c224, %c0_139] {strides = array<i32: 2, 1>} : memref<238x32xf32, #tpu.memory_space<vmem>>, vector<7x32xf32>
    %c225 = arith.constant 225 : index
    %c0_140 = arith.constant 0 : index
    %120 = tpu.strided_load %arg11[%c225, %c0_140] {strides = array<i32: 2, 1>} : memref<238x32xf32, #tpu.memory_space<vmem>>, vector<7x32xf32>
    %121 = tpu.concatenate %96, %97, %98, %99, %100, %101, %102, %103, %104, %105, %106, %107, %108, %109, %110, %111 in 1 : vector<7x32xf32>, vector<7x32xf32>, vector<7x32xf32>, vector<7x32xf32>, vector<7x32xf32>, vector<7x32xf32>, vector<7x32xf32>, vector<7x32xf32>, vector<7x32xf32>, vector<7x32xf32>, vector<7x32xf32>, vector<7x32xf32>, vector<7x32xf32>, vector<7x32xf32>, vector<7x32xf32>, vector<7x32xf32> -> vector<7x512xf32>
    %122 = tpu.concatenate %112, %113, %114, %115, %116, %117, %118, %119, %120 in 1 : vector<7x32xf32>, vector<7x32xf32>, vector<7x32xf32>, vector<7x32xf32>, vector<7x32xf32>, vector<7x32xf32>, vector<7x32xf32>, vector<7x32xf32>, vector<7x32xf32> -> vector<7x288xf32>
    %123 = tpu.concatenate %121, %122 in 1 : vector<7x512xf32>, vector<7x288xf32> -> vector<7x800xf32>
    %124 = tpu.concatenate %39, %67, %95, %123 in 0 : vector<7x800xf32>, vector<7x800xf32>, vector<7x800xf32>, vector<7x800xf32> -> vector<28x800xf32>
    %125 = arith.truncf %124 : vector<28x800xf32> to vector<28x800xbf16>
    %c0_141 = arith.constant 0 : index
    %c0_142 = arith.constant 0 : index
    %126 = vector.load %arg5[%c0_141, %c0_142] : memref<800x32xbf16, #tpu.memory_space<vmem>>, vector<800x32xbf16>
    %cst_143 = arith.constant dense<0.000000e+00> : vector<28x32xf32>
    %127 = tpu.matmul %125, %126, %cst_143 {dimension_numbers = #tpu.dot_dimension_numbers<[1], [0], [0], [1], [0, 0, 1, 1], [], []>} : vector<28x800xbf16>, vector<800x32xbf16>, vector<28x32xf32> -> vector<28x32xf32>
    %c0_144 = arith.constant 0 : index
    %c0_145 = arith.constant 0 : index
    %128 = vector.load %arg6[%c0_144, %c0_145] : memref<1x32xf32, #tpu.memory_space<vmem>>, vector<1x32xf32>
    %129 = vector.broadcast %128 : vector<1x32xf32> to vector<28x32xf32>
    %130 = arith.mulf %127, %129 : vector<28x32xf32>
    %c0_146 = arith.constant 0 : index
    %c0_147 = arith.constant 0 : index
    %131 = vector.load %arg7[%c0_146, %c0_147] : memref<1x32xf32, #tpu.memory_space<vmem>>, vector<1x32xf32>
    %132 = vector.broadcast %131 : vector<1x32xf32> to vector<28x32xf32>
    %133 = arith.addf %130, %132 : vector<28x32xf32>
    %cst_148 = arith.constant 0.000000e+00 : f32
    %134 = vector.broadcast %cst_148 : f32 to vector<28x32xf32>
    %135 = arith.maximumf %133, %134 : vector<28x32xf32>
    %c0_149 = arith.constant 0 : index
    %c0_150 = arith.constant 0 : index
    %c0_151 = arith.constant 0 : index
    %136 = vector.load %arg8[%c0_149, %c0_150, %c0_151] : memref<2x28x32xf32, #tpu.memory_space<vmem>>, vector<1x28x32xf32>
    %137 = vector.shape_cast %136 : vector<1x28x32xf32> to vector<28x32xf32>
    %138 = arith.mulf %135, %137 : vector<28x32xf32>
    %cst_152 = arith.constant dense<0.000000e+00> : vector<28xf32>
    %139 = vector.multi_reduction <add>, %138, %cst_152 [1] : vector<28x32xf32> to vector<28xf32>
    %140 = vector.shape_cast %139 : vector<28xf32> to vector<28x1xf32>
    %c1_153 = arith.constant 1 : index
    %c0_154 = arith.constant 0 : index
    %c0_155 = arith.constant 0 : index
    %141 = vector.load %arg8[%c1_153, %c0_154, %c0_155] : memref<2x28x32xf32, #tpu.memory_space<vmem>>, vector<1x28x32xf32>
    %142 = vector.shape_cast %141 : vector<1x28x32xf32> to vector<28x32xf32>
    %143 = arith.mulf %135, %142 : vector<28x32xf32>
    %cst_156 = arith.constant dense<0.000000e+00> : vector<28xf32>
    %144 = vector.multi_reduction <add>, %143, %cst_156 [1] : vector<28x32xf32> to vector<28xf32>
    %145 = vector.shape_cast %144 : vector<28xf32> to vector<28x1xf32>
    %146 = tpu.concatenate %140, %145 in 1 : vector<28x1xf32>, vector<28x1xf32> -> vector<28x2xf32>
    %147 = vector.extract_strided_slice %146 {offsets = [0, 0], sizes = [14, 2], strides = [1, 1]} : vector<28x2xf32> to vector<14x2xf32>
    %cst_157 = arith.constant dense<0.000000e+00> : vector<2xf32>
    %148 = vector.multi_reduction <add>, %147, %cst_157 [0] : vector<14x2xf32> to vector<2xf32>
    %149 = vector.shape_cast %148 : vector<2xf32> to vector<1x2xf32>
    %150 = vector.extract_strided_slice %146 {offsets = [14, 0], sizes = [14, 2], strides = [1, 1]} : vector<28x2xf32> to vector<14x2xf32>
    %cst_158 = arith.constant dense<0.000000e+00> : vector<2xf32>
    %151 = vector.multi_reduction <add>, %150, %cst_158 [0] : vector<14x2xf32> to vector<2xf32>
    %152 = vector.shape_cast %151 : vector<2xf32> to vector<1x2xf32>
    %153 = tpu.concatenate %149, %152 in 0 : vector<1x2xf32>, vector<1x2xf32> -> vector<2x2xf32>
    %c0_159 = arith.constant 0 : index
    %c0_160 = arith.constant 0 : index
    %154 = vector.load %arg9[%c0_159, %c0_160] : memref<1x2xf32, #tpu.memory_space<vmem>>, vector<1x2xf32>
    %155 = vector.broadcast %154 : vector<1x2xf32> to vector<2x2xf32>
    %156 = arith.addf %153, %155 : vector<2x2xf32>
    %c0_161 = arith.constant 0 : index
    %c0_162 = arith.constant 0 : index
    %157 = vector.load %arg10[%c0_161, %c0_162] : memref<2x2xf32, #tpu.memory_space<vmem>>, vector<2x2xf32>
    tpu.vector_store %arg10[%c0_161, %c0_162], %156 {strides = array<i32>} : memref<2x2xf32, #tpu.memory_space<vmem>>, vector<2x2xf32>,
    return
  }
  func.func @transform_0(%arg0: i32) -> (i32, i32) {
    %c0_i32 = arith.constant 0 : i32
    %c0_i32_0 = arith.constant 0 : i32
    %c0_i32_1 = arith.constant 0 : i32
    return %c0_i32, %c0_i32_0 : i32, i32
  }
  func.func @transform_1(%arg0: i32) -> (i32, i32) {
    %c0_i32 = arith.constant 0 : i32
    %c0_i32_0 = arith.constant 0 : i32
    %c0_i32_1 = arith.constant 0 : i32
    return %c0_i32, %c0_i32_0 : i32, i32
  }
  func.func @transform_2(%arg0: i32) -> (i32, i32) {
    %c0_i32 = arith.constant 0 : i32
    %c0_i32_0 = arith.constant 0 : i32
    %c0_i32_1 = arith.constant 0 : i32
    return %c0_i32, %c0_i32_0 : i32, i32
  }
  func.func @transform_3(%arg0: i32) -> (i32, i32) {
    %c0_i32 = arith.constant 0 : i32
    %c0_i32_0 = arith.constant 0 : i32
    %c0_i32_1 = arith.constant 0 : i32
    return %c0_i32, %c0_i32_0 : i32, i32
  }
  func.func @transform_4(%arg0: i32) -> (i32, i32) {
    %c0_i32 = arith.constant 0 : i32
    %c0_i32_0 = arith.constant 0 : i32
    %c0_i32_1 = arith.constant 0 : i32
    return %c0_i32, %c0_i32_0 : i32, i32
  }
  func.func @transform_5(%arg0: i32) -> (i32, i32) {
    %c0_i32 = arith.constant 0 : i32
    %c0_i32_0 = arith.constant 0 : i32
    %c0_i32_1 = arith.constant 0 : i32
    return %c0_i32, %c0_i32_0 : i32, i32
  }
  func.func @transform_6(%arg0: i32) -> (i32, i32) {
    %c0_i32 = arith.constant 0 : i32
    %c0_i32_0 = arith.constant 0 : i32
    %c0_i32_1 = arith.constant 0 : i32
    return %c0_i32, %c0_i32_0 : i32, i32
  }
  func.func @transform_7(%arg0: i32) -> (i32, i32, i32) {
    %c0_i32 = arith.constant 0 : i32
    %c0_i32_0 = arith.constant 0 : i32
    %c0_i32_1 = arith.constant 0 : i32
    %c0_i32_2 = arith.constant 0 : i32
    return %c0_i32, %c0_i32_0, %c0_i32_1 : i32, i32, i32
  }
  func.func @transform_8(%arg0: i32) -> (i32, i32) {
    %c0_i32 = arith.constant 0 : i32
    %c0_i32_0 = arith.constant 0 : i32
    %c0_i32_1 = arith.constant 0 : i32
    return %c0_i32, %c0_i32_0 : i32, i32
  }
  func.func @transform_9(%arg0: i32) -> (i32, i32) {
    %c0_i32 = arith.constant 0 : i32
    %c0_i32_0 = arith.constant 0 : i32
    %c0_i32_1 = arith.constant 0 : i32
    return %c0_i32, %c0_i32_0 : i32, i32
  }
}

</mosaic_0001>

<llo_original>
// kernel: dqn_forward.2
$region0: #{dqn_forward.2}
  #allocation0 [shape = 'u32[]', space=smem, size = 0x4, offset = 0x4, fixed_abs, tag = 'smem constant byte address 0x4 - core index']
  #allocation1 [shape = 'u32[72,128]{1,0:T(1,128)}', space=vmem, size = 0x9000, scoped, tag = 'internal scratch']
  %s0 = inlined_call_operand.vmem [shape: bf16[2,684,75], index: 0, kind: input, shape index: {}]
  %s1 = inlined_call_operand.vmem [shape: bf16[75,16], index: 1, kind: input, shape index: {}]
  %s2 = inlined_call_operand.vmem [shape: f32[1,16], index: 2, kind: input, shape index: {}]
  %s3 = inlined_call_operand.vmem [shape: f32[1,16], index: 3, kind: input, shape index: {}]
  %s4 = inlined_call_operand.vmem [shape: bf16[2,684,16], index: 4, kind: output, shape index: {}]
  %s5 = sld [smem:[#allocation0]]
  $region49: #{dqn_forward.2} parent=0
    _
  %s7 = ssub.s32 1, %s5
  %s8 = scalar_select 0, %s7, %s5
  loop: start=0, step=1, limit=4
  $region2: #{dqn_forward.2} parent=0 // loop_pre_header
    _
  $region3: #{dqn_forward.2} parent=0 // loop_header
    %s10 = sphi 0, %s14
    %p11 = scmp.ge.s32.totalorder %s10, 4
    %s20 = sphi 0, %s22
    %s23 = sphi 0, %s20
    %s24 = sphi 0, %s23
    %s40 = sphi 0, %s24
    %s44 = sphi 0, %s44
    %s46 = sphi 0, %s44
    %s47 = sphi 0, %s46
    %s61 = sphi 0, %s47
    %s65 = sphi 0, %s65
    %s67 = sphi 0, %s65
    %s68 = sphi 0, %s67
    %s82 = sphi 0, %s68
    %s86 = sphi 0, %s86
    %s88 = sphi 0, %s86
    %s89 = sphi 0, %s88
    %s103 = sphi 0, %s89
    %s109 = sphi 0, %s111
    %s112 = sphi 0, %s109
    %s113 = sphi 0, %s112
    %s129 = sphi 0, %s113
  $region4: #{dqn_forward.2} parent=0 // loop_header_branch
    %13 = sbr.rel (%p11) target = $region8
  $region5: #{dqn_forward.2} parent=0 // loop_body
    %s15 = ssub.s32 %s10, 1
    %s16 = ssub.s32 %s10, 2
    %s17 = sadd.s32 %s10, 1
    %s18 = ssub.s32 %s10, %s17
    %p19 = scmp.eq.s32.totalorder %s18, 0
    %s21 = sadd.s32 %s20, 1
    %s22 = scalar_select %p19, %s20, %s21
    %p25 = pneg %p19
    %p26 = scmp.eq.s32.totalorder %s10, 1
    %p27 = por %p25, %p26
    %p28 = scmp.ne.s32.totalorder %s20, %s23
    %p29 = scmp.eq.s32.totalorder %s10, 0
    %p30 = por %p28, %p29
    %p31 = scmp.ne.s32.totalorder %s20, %s23
    %p32 = scmp.eq.s32.totalorder %s15, 1
    %p33 = por %p31, %p32
    %p34 = scmp.ne.s32.totalorder %s23, %s24
    %p35 = scmp.eq.s32.totalorder %s15, 0
    %p36 = por %p34, %p35
    %p37 = scmp.ne.s32.totalorder %s23, %s24
    %p38 = scmp.eq.s32.totalorder %s16, 1
    %p39 = por %p37, %p38
    %p41 = scmp.ne.s32.totalorder %s24, %s40
    %p42 = scmp.eq.s32.totalorder %s16, 0
    %p43 = por %p41, %p42
    %s45 = sadd.s32 %s44, 1
    %p48 = scmp.eq.s32.totalorder %s10, 1
    %p49 = scmp.ne.s32.totalorder %s44, %s46
    %p50 = scmp.eq.s32.totalorder %s10, 0
    %p51 = por %p49, %p50
    %p52 = scmp.ne.s32.totalorder %s44, %s46
    %p53 = scmp.eq.s32.totalorder %s15, 1
    %p54 = por %p52, %p53
    %p55 = scmp.ne.s32.totalorder %s46, %s47
    %p56 = scmp.eq.s32.totalorder %s15, 0
    %p57 = por %p55, %p56
    %p58 = scmp.ne.s32.totalorder %s46, %s47
    %p59 = scmp.eq.s32.totalorder %s16, 1
    %p60 = por %p58, %p59
    %p62 = scmp.ne.s32.totalorder %s47, %s61
    %p63 = scmp.eq.s32.totalorder %s16, 0
    %p64 = por %p62, %p63
    %s66 = sadd.s32 %s65, 1
    %p69 = scmp.eq.s32.totalorder %s10, 1
    %p70 = scmp.ne.s32.totalorder %s65, %s67
    %p71 = scmp.eq.s32.totalorder %s10, 0
    %p72 = por %p70, %p71
    %p73 = scmp.ne.s32.totalorder %s65, %s67
    %p74 = scmp.eq.s32.totalorder %s15, 1
    %p75 = por %p73, %p74
    %p76 = scmp.ne.s32.totalorder %s67, %s68
    %p77 = scmp.eq.s32.totalorder %s15, 0
    %p78 = por %p76, %p77
    %p79 = scmp.ne.s32.totalorder %s67, %s68
    %p80 = scmp.eq.s32.totalorder %s16, 1
    %p81 = por %p79, %p80
    %p83 = scmp.ne.s32.totalorder %s68, %s82
    %p84 = scmp.eq.s32.totalorder %s16, 0
    %p85 = por %p83, %p84
    %s87 = sadd.s32 %s86, 1
    %p90 = scmp.eq.s32.totalorder %s10, 1
    %p91 = scmp.ne.s32.totalorder %s86, %s88
    %p92 = scmp.eq.s32.totalorder %s10, 0
    %p93 = por %p91, %p92
    %p94 = scmp.ne.s32.totalorder %s86, %s88
    %p95 = scmp.eq.s32.totalorder %s15, 1
    %p96 = por %p94, %p95
    %p97 = scmp.ne.s32.totalorder %s88, %s89
    %p98 = scmp.eq.s32.totalorder %s15, 0
    %p99 = por %p97, %p98
    %p100 = scmp.ne.s32.totalorder %s88, %s89
    %p101 = scmp.eq.s32.totalorder %s16, 1
    %p102 = por %p100, %p101
    %p104 = scmp.ne.s32.totalorder %s89, %s103
    %p105 = scmp.eq.s32.totalorder %s16, 0
    %p106 = por %p104, %p105
    %s107 = ssub.s32 %s10, %s17
    %p108 = scmp.eq.s32.totalorder %s107, 0
    %s110 = sadd.s32 %s109, 1
    %s111 = scalar_select %p108, %s109, %s110
    %p114 = pneg %p108
    %p115 = scmp.eq.s32.totalorder %s10, 1
    %p116 = por %p114, %p115
    %p117 = scmp.ne.s32.totalorder %s109, %s112
    %p118 = scmp.eq.s32.totalorder %s10, 0
    %p119 = por %p117, %p118
    %p120 = scmp.ne.s32.totalorder %s109, %s112
    %p121 = scmp.eq.s32.totalorder %s15, 1
    %p122 = por %p120, %p121
    %p123 = scmp.ne.s32.totalorder %s112, %s113
    %p124 = scmp.eq.s32.totalorder %s15, 0
    %p125 = por %p123, %p124
    %p126 = scmp.ne.s32.totalorder %s112, %s113
    %p127 = scmp.eq.s32.totalorder %s16, 1
    %p128 = por %p126, %p127
    %p130 = scmp.ne.s32.totalorder %s113, %s129
    %p131 = scmp.eq.s32.totalorder %s16, 0
    %p132 = por %p130, %p131
    %p133 = scmp.le.s32.totalorder 1, %s10
    %p134 = scmp.lt.s32.totalorder %s10, 3
    %p135 = pnand %p133, %p134
    %p136 = pneg %p135
    // Predicated region
    $region9: #{dqn_forward.2} parent=5 // pred_check
      _
    $region10: #{dqn_forward.2} parent=5 // pred_check_branch
      %138 = sbr.rel (%p135) target = $region12
    $region11: #{dqn_forward.2} parent=5 // pred_region
      %s139 = ssub.s32 %s10, 1
      // Predicated region
      $region13: #{dqn_forward.2} parent=11 // pred_check
        %p140 = pneg %p57
      $region14: #{dqn_forward.2} parent=11 // pred_check_branch
        %142 = sbr.rel (%p140) target = $region16
      $region15: #{dqn_forward.2} parent=11 // pred_region
        _
      $region16: #{dqn_forward.2} parent=11 // pred_fallthru
        _
      // Predicated region
      $region17: #{dqn_forward.2} parent=11 // pred_check
        %p143 = pneg %p78
      $region18: #{dqn_forward.2} parent=11 // pred_check_branch
        %145 = sbr.rel (%p143) target = $region20
      $region19: #{dqn_forward.2} parent=11 // pred_region
        _
      $region20: #{dqn_forward.2} parent=11 // pred_fallthru
        _
      // Predicated region
      $region21: #{dqn_forward.2} parent=11 // pred_check
        %p146 = pneg %p99
      $region22: #{dqn_forward.2} parent=11 // pred_check_branch
        %148 = sbr.rel (%p146) target = $region24
      $region23: #{dqn_forward.2} parent=11 // pred_region
        _
      $region24: #{dqn_forward.2} parent=11 // pred_fallthru
        _
    $region12: #{dqn_forward.2} parent=5 // pred_fallthru
      _
    %p149 = scmp.lt.s32.totalorder %s10, 2
    // Predicated region
    $region25: #{dqn_forward.2} parent=5 // pred_check
      %p150 = pneg %p149
    $region26: #{dqn_forward.2} parent=5 // pred_check_branch
      %152 = sbr.rel (%p150) target = $region28
    $region27: #{dqn_forward.2} parent=5 // pred_region
      // Predicated region
      $region29: #{dqn_forward.2} parent=27 // pred_check
        %p153 = pneg %p30
      $region30: #{dqn_forward.2} parent=27 // pred_check_branch
        %155 = sbr.rel (%p153) target = $region32
      $region31: #{dqn_forward.2} parent=27 // pred_region
        %p156 = scmp.lt.s32.totalorder %s10, 1
        %s157 = scalar_select %p156, %s10, 1
        %s158 = smul.addr %s157, 86
        %s159 = smul.addr %s158, 4
        %s160 = scalar_lea.vmem %s0, %s159
      $region32: #{dqn_forward.2} parent=27 // pred_fallthru
        _
    $region28: #{dqn_forward.2} parent=5 // pred_fallthru
      _
    %p161 = scmp.le.s32.totalorder 1, %s10
    %p162 = scmp.lt.s32.totalorder %s10, 3
    %p163 = pnand %p161, %p162
    %p164 = pneg %p163
    // Predicated region
    $region33: #{dqn_forward.2} parent=5 // pred_check
      _
    $region34: #{dqn_forward.2} parent=5 // pred_check_branch
      %166 = sbr.rel (%p163) target = $region36
    $region35: #{dqn_forward.2} parent=5 // pred_region
      %s167 = ssub.s32 %s10, 1
      %p168 = scmp.lt.s32.totalorder %s15, 1
      %s169 = scalar_select %p168, %s15, 1
      %s170 = smul.addr %s169, 86
      %s171 = smul.addr %s170, 4
      %s172 = scalar_lea.vmem %s0, %s171
      %p173 = pneg %p36
      %p174 = pneg %p33
      %p175 = pneg %p57
      %p176 = pneg %p54
      %p177 = pneg %p78
      %p178 = pneg %p75
      %p179 = pneg %p99
      %p180 = pneg %p96
      %p181 = pneg %p125
      %p182 = pneg %p122
      %p183 = scmp.lt.s32.totalorder %s15, 1
      %s184 = scalar_select %p183, %s15, 1
      %s185 = smul.addr %s184, 86
      %s186 = smul.addr %s185, 4
      %s187 = scalar_lea.vmem %s4, %s186
      %p188 = scmp.lt.s32.totalorder %s15, 1
      %s189 = scalar_select %p188, %s15, 1
      %s190 = smul.addr %s189, 86
      %s191 = smul.addr %s190, 4
      %s192 = scalar_lea.vmem %s0, %s191
      %p193 = scmp.lt.s32.totalorder %s15, 1
      %s194 = scalar_select %p193, %s15, 1
      %s195 = smul.addr %s194, 86
      %s196 = smul.addr %s195, 4
      %s197 = scalar_lea.vmem %s4, %s196
      %v199 = vld [vmem:[%s192] sm:$0xf]
      %v200 = vld [vmem:[%s192 + $0x4] sm:$0xf]
      %v201 = vld [vmem:[%s192 + $0x8] sm:$0xf]
      %v202 = vld [vmem:[%s192 + $0xc] sm:$0xf]
      %v203 = vld [vmem:[%s192 + $0x10] sm:$0xf]
      %v204 = vld [vmem:[%s192 + $0x14] sm:$0xf]
      %v205 = vld [vmem:[%s192 + $0x18] sm:$0xf]
      %v206 = vld [vmem:[%s192 + $0x1c] sm:$0xf]
      %v207 = vld [vmem:[%s192 + $0x20] sm:$0xf]
      %v208 = vld [vmem:[%s192 + $0x24] sm:$0xf]
      %v209 = vld [vmem:[%s192 + $0x28] sm:$0xf]
      %v210 = vld [vmem:[%s192 + $0x2c] sm:$0xf]
      %v211 = vld [vmem:[%s192 + $0x30] sm:$0xf]
      %v212 = vld [vmem:[%s192 + $0x34] sm:$0xf]
      %v213 = vld [vmem:[%s192 + $0x38] sm:$0xf]
      %v214 = vld [vmem:[%s192 + $0x3c] sm:$0xf]
      %v215 = vld [vmem:[%s192 + $0x40] sm:$0xf]
      %v216 = vld [vmem:[%s192 + $0x44] sm:$0xf]
      %v217 = vld [vmem:[%s192 + $0x48] sm:$0xf]
      %v218 = vld [vmem:[%s192 + $0x4c] sm:$0xf]
      %v219 = vld [vmem:[%s192 + $0x50] sm:$0xf]
      %v220 = vld [vmem:[%s192 + $0x54] sm:$0xf]
      %v221 = vld [vmem:[%s192 + $0x58] sm:$0xf]
      %v222 = vld [vmem:[%s192 + $0x5c] sm:$0xf]
      %v223 = vld [vmem:[%s192 + $0x60] sm:$0xf]
      %v224 = vld [vmem:[%s192 + $0x64] sm:$0xf]
      %v225 = vld [vmem:[%s192 + $0x68] sm:$0xf]
      %v226 = vld [vmem:[%s192 + $0x6c] sm:$0xf]
      %v227 = vld [vmem:[%s192 + $0x70] sm:$0xf]
      %v228 = vld [vmem:[%s192 + $0x74] sm:$0xf]
      %v229 = vld [vmem:[%s192 + $0x78] sm:$0xf]
      %v230 = vld [vmem:[%s192 + $0x7c] sm:$0xf]
      %v231 = vld [vmem:[%s192 + $0x80] sm:$0xf]
      %v232 = vld [vmem:[%s192 + $0x84] sm:$0xf]
      %v233 = vld [vmem:[%s192 + $0x88] sm:$0xf]
      %v234 = vld [vmem:[%s192 + $0x8c] sm:$0xf]
      %v235 = vld [vmem:[%s192 + $0x90] sm:$0xf]
      %v236 = vld [vmem:[%s192 + $0x94] sm:$0xf]
      %v237 = vld [vmem:[%s192 + $0x98] sm:$0xf]
      %v238 = vld [vmem:[%s192 + $0x9c] sm:$0xf]
      %v239 = vld [vmem:[%s192 + $0xa0] sm:$0xf]
      %v240 = vld [vmem:[%s192 + $0xa4] sm:$0xf]
      %v241 = vld [vmem:[%s192 + $0xa8] sm:$0xf]
      %v242 = vld [vmem:[%s192 + $0xac] sm:$0xf]
      %v243 = vld [vmem:[%s192 + $0xb0] sm:$0xf]
      %v244 = vld [vmem:[%s192 + $0xb4] sm:$0xf]
      %v245 = vld [vmem:[%s192 + $0xb8] sm:$0xf]
      %v246 = vld [vmem:[%s192 + $0xbc] sm:$0xf]
      %v247 = vld [vmem:[%s192 + $0xc0] sm:$0xf]
      %v248 = vld [vmem:[%s192 + $0xc4] sm:$0xf]
      %v249 = vld [vmem:[%s192 + $0xc8] sm:$0xf]
      %v250 = vld [vmem:[%s192 + $0xcc] sm:$0xf]
      %v251 = vld [vmem:[%s192 + $0xd0] sm:$0xf]
      %v252 = vld [vmem:[%s192 + $0xd4] sm:$0xf]
      %v253 = vld [vmem:[%s192 + $0xd8] sm:$0xf]
      %v254 = vld [vmem:[%s192 + $0xdc] sm:$0xf]
      %v255 = vld [vmem:[%s192 + $0xe0] sm:$0xf]
      %v256 = vld [vmem:[%s192 + $0xe4] sm:$0xf]
      %v257 = vld [vmem:[%s192 + $0xe8] sm:$0xf]
      %v258 = vld [vmem:[%s192 + $0xec] sm:$0xf]
      %v259 = vld [vmem:[%s192 + $0xf0] sm:$0xf]
      %v260 = vld [vmem:[%s192 + $0xf4] sm:$0xf]
      %v261 = vld [vmem:[%s192 + $0xf8] sm:$0xf]
      %v262 = vld [vmem:[%s192 + $0xfc] sm:$0xf]
      %v263 = vld [vmem:[%s192 + $0x100] sm:$0xf]
      %v264 = vld [vmem:[%s192 + $0x104] sm:$0xf]
      %v265 = vld [vmem:[%s192 + $0x108] sm:$0xf]
      %v266 = vld [vmem:[%s192 + $0x10c] sm:$0xf]
      %v267 = vld [vmem:[%s192 + $0x110] sm:$0xf]
      %v268 = vld [vmem:[%s192 + $0x114] sm:$0xf]
      %v269 = vld [vmem:[%s192 + $0x118] sm:$0xf]
      %v270 = vld [vmem:[%s192 + $0x11c] sm:$0xf]
      %v271 = vld [vmem:[%s192 + $0x120] sm:$0xf]
      %v272 = vld [vmem:[%s192 + $0x124] sm:$0xf]
      %v273 = vld [vmem:[%s192 + $0x128] sm:$0xf]
      %v274 = vld [vmem:[%s192 + $0x12c] sm:$0xf]
      %v275 = vld [vmem:[%s192 + $0x130] sm:$0xf]
      %v276 = vld [vmem:[%s192 + $0x134] sm:$0xf]
      %v277 = vld [vmem:[%s192 + $0x138] sm:$0xf]
      %v278 = vld [vmem:[%s192 + $0x13c] sm:$0xf]
      %v279 = vld [vmem:[%s192 + $0x140] sm:$0xf]
      %v280 = vld [vmem:[%s192 + $0x144] sm:$0xf]
      %v281 = vld [vmem:[%s192 + $0x148] sm:$0xf]
      %v282 = vld [vmem:[%s192 + $0x14c] sm:$0xf]
      %v283 = vld [vmem:[%s192 + $0x150] sm:$0xf]
      %v284 = vld [vmem:[%s192 + $0x154] sm:$0x3]
      %v285 = vld [vmem:[%s1] sm:$0xf]
      %v286 = vld [vmem:[%s1 + $0x4] sm:$0xf]
      %v287 = vld [vmem:[%s1 + $0x8] sm:$0xf]
      %v288 = vld [vmem:[%s1 + $0xc] sm:$0xf]
      %v289 = vld [vmem:[%s1 + $0x10] sm:$0xf]
      %v290 = vld [vmem:[%s1 + $0x14] sm:$0xf]
      %v291 = vld [vmem:[%s1 + $0x18] sm:$0xf]
      %v292 = vld [vmem:[%s1 + $0x1c] sm:$0xf]
      %v293 = vld [vmem:[%s1 + $0x20] sm:$0xf]
      %v294 = vld [vmem:[%s1 + $0x24] sm:$0x3]
      %v381 = vunpack.c.l.b16 %v199
      %v382 = vunpack.c.l.b16 %v200
      %v383 = vunpack.c.l.b16 %v201
      %v384 = vunpack.c.l.b16 %v202
      %v385 = vunpack.c.l.b16 %v203
      %v386 = vunpack.c.l.b16 %v204
      %v387 = vunpack.c.l.b16 %v205
      %v388 = vunpack.c.l.b16 %v206
      %v389 = vunpack.c.l.b16 %v207
      %v390 = vunpack.c.l.b16 %v208
      %v391 = vunpack.c.l.b16 %v209
      %v392 = vunpack.c.l.b16 %v210
      %v393 = vunpack.c.l.b16 %v211
      %v394 = vunpack.c.l.b16 %v212
      %v395 = vunpack.c.l.b16 %v213
      %v396 = vunpack.c.l.b16 %v214
      %v397 = vunpack.c.l.b16 %v215
      %v398 = vunpack.c.l.b16 %v216
      %v399 = vunpack.c.l.b16 %v217
      %v400 = vunpack.c.l.b16 %v218
      %v401 = vunpack.c.l.b16 %v219
      %v402 = vunpack.c.l.b16 %v220
      %v403 = vunpack.c.l.b16 %v221
      %v404 = vunpack.c.l.b16 %v222
      %v405 = vunpack.c.l.b16 %v223
      %v406 = vunpack.c.l.b16 %v224
      %v407 = vunpack.c.l.b16 %v225
      %v408 = vunpack.c.l.b16 %v226
      %v409 = vunpack.c.l.b16 %v227
      %v410 = vunpack.c.l.b16 %v228
      %v411 = vunpack.c.l.b16 %v229
      %v412 = vunpack.c.l.b16 %v230
      %v413 = vunpack.c.l.b16 %v231
      %v414 = vunpack.c.l.b16 %v232
      %v415 = vunpack.c.l.b16 %v233
      %v416 = vunpack.c.l.b16 %v234
      %v417 = vunpack.c.l.b16 %v235
      %v418 = vunpack.c.l.b16 %v236
      %v419 = vunpack.c.l.b16 %v237
      %v420 = vunpack.c.l.b16 %v238
      %v421 = vunpack.c.l.b16 %v239
      %v422 = vunpack.c.l.b16 %v240
      %v423 = vunpack.c.l.b16 %v241
      %v424 = vunpack.c.l.b16 %v242
      %v425 = vunpack.c.l.b16 %v243
      %v426 = vunpack.c.l.b16 %v244
      %v427 = vunpack.c.l.b16 %v245
      %v428 = vunpack.c.l.b16 %v246
      %v429 = vunpack.c.l.b16 %v247
      %v430 = vunpack.c.l.b16 %v248
      %v431 = vunpack.c.l.b16 %v249
      %v432 = vunpack.c.l.b16 %v250
      %v433 = vunpack.c.l.b16 %v251
      %v434 = vunpack.c.l.b16 %v252
      %v435 = vunpack.c.l.b16 %v253
      %v436 = vunpack.c.l.b16 %v254
      %v437 = vunpack.c.l.b16 %v255
      %v438 = vunpack.c.l.b16 %v256
      %v439 = vunpack.c.l.b16 %v257
      %v440 = vunpack.c.l.b16 %v258
      %v441 = vunpack.c.l.b16 %v259
      %v442 = vunpack.c.l.b16 %v260
      %v443 = vunpack.c.l.b16 %v261
      %v444 = vunpack.c.l.b16 %v262
      %v445 = vunpack.c.l.b16 %v263
      %v446 = vunpack.c.l.b16 %v264
      %v447 = vunpack.c.l.b16 %v265
      %v448 = vunpack.c.l.b16 %v266
      %v449 = vunpack.c.l.b16 %v267
      %v450 = vunpack.c.l.b16 %v268
      %v451 = vunpack.c.l.b16 %v269
      %v452 = vunpack.c.l.b16 %v270
      %v453 = vunpack.c.l.b16 %v271
      %v454 = vunpack.c.l.b16 %v272
      %v455 = vunpack.c.l.b16 %v273
      %v456 = vunpack.c.l.b16 %v274
      %v457 = vunpack.c.l.b16 %v275
      %v458 = vunpack.c.l.b16 %v276
      %v459 = vunpack.c.l.b16 %v277
      %v460 = vunpack.c.l.b16 %v278
      %v461 = vunpack.c.l.b16 %v279
      %v462 = vunpack.c.l.b16 %v280
      %v463 = vunpack.c.l.b16 %v281
      %v464 = vunpack.c.l.b16 %v282
      %v465 = vunpack.c.l.b16 %v283
      %v466 = vunpack.c.l.b16 %v284
      %v467 = vpack.c.b16 %v382, %v381
      %v468 = vpack.c.b16 %v384, %v383
      %v469 = vpack.c.b16 %v386, %v385
      %v470 = vpack.c.b16 %v388, %v387
      %v471 = vpack.c.b16 %v390, %v389
      %v472 = vpack.c.b16 %v392, %v391
      %v473 = vpack.c.b16 %v394, %v393
      %v474 = vpack.c.b16 %v396, %v395
      %v475 = vpack.c.b16 %v398, %v397
      %v476 = vpack.c.b16 %v400, %v399
      %v477 = vpack.c.b16 %v402, %v401
      %v478 = vpack.c.b16 %v404, %v403
      %v479 = vpack.c.b16 %v406, %v405
      %v480 = vpack.c.b16 %v408, %v407
      %v481 = vpack.c.b16 %v410, %v409
      %v482 = vpack.c.b16 %v412, %v411
      %v483 = vpack.c.b16 %v414, %v413
      %v484 = vpack.c.b16 %v416, %v415
      %v485 = vpack.c.b16 %v418, %v417
      %v486 = vpack.c.b16 %v420, %v419
      %v487 = vpack.c.b16 %v422, %v421
      %v488 = vpack.c.b16 %v424, %v423
      %v489 = vpack.c.b16 %v426, %v425
      %v490 = vpack.c.b16 %v428, %v427
      %v491 = vpack.c.b16 %v430, %v429
      %v492 = vpack.c.b16 %v432, %v431
      %v493 = vpack.c.b16 %v434, %v433
      %v494 = vpack.c.b16 %v436, %v435
      %v495 = vpack.c.b16 %v438, %v437
      %v496 = vpack.c.b16 %v440, %v439
      %v497 = vpack.c.b16 %v442, %v441
      %v498 = vpack.c.b16 %v444, %v443
      %v499 = vpack.c.b16 %v446, %v445
      %v500 = vpack.c.b16 %v448, %v447
      %v501 = vpack.c.b16 %v450, %v449
      %v502 = vpack.c.b16 %v452, %v451
      %v503 = vpack.c.b16 %v454, %v453
      %v504 = vpack.c.b16 %v456, %v455
      %v505 = vpack.c.b16 %v458, %v457
      %v506 = vpack.c.b16 %v460, %v459
      %v507 = vpack.c.b16 %v462, %v461
      %v508 = vpack.c.b16 %v464, %v463
      %v509 = vpack.c.b16 %v466, %v465
      %v520 = vunpack.c.l.b16 %v285
      %v521 = vunpack.c.l.b16 %v286
      %v522 = vunpack.c.l.b16 %v287
      %v523 = vunpack.c.l.b16 %v288
      %v524 = vunpack.c.l.b16 %v289
      %v525 = vunpack.c.l.b16 %v290
      %v526 = vunpack.c.l.b16 %v291
      %v527 = vunpack.c.l.b16 %v292
      %v528 = vunpack.c.l.b16 %v293
      %v529 = vunpack.c.l.b16 %v294
      %v530 = vpack.c.b16 %v521, %v520
      %v531 = vpack.c.b16 %v523, %v522
      %v532 = vpack.c.b16 %v525, %v524
      %v533 = vpack.c.b16 %v527, %v526
      %v534 = vpack.c.b16 %v529, %v528
      %vm539 = vcmask 613376
      %v541 = vsel %vm539, %v467, 0
      %v544 = vsel %vm539, %v468, 0
      %v547 = vsel %vm539, %v469, 0
      %v550 = vsel %vm539, %v470, 0
      %v553 = vsel %vm539, %v471, 0
      %v556 = vsel %vm539, %v472, 0
      %v559 = vsel %vm539, %v473, 0
      %v562 = vsel %vm539, %v474, 0
      %v565 = vsel %vm539, %v475, 0
      %v568 = vsel %vm539, %v476, 0
      %v571 = vsel %vm539, %v477, 0
      %v574 = vsel %vm539, %v478, 0
      %v577 = vsel %vm539, %v479, 0
      %v580 = vsel %vm539, %v480, 0
      %v583 = vsel %vm539, %v481, 0
      %v586 = vsel %vm539, %v482, 0
      %v589 = vsel %vm539, %v483, 0
      %v592 = vsel %vm539, %v484, 0
      %v595 = vsel %vm539, %v485, 0
      %v598 = vsel %vm539, %v486, 0
      %v601 = vsel %vm539, %v487, 0
      %v604 = vsel %vm539, %v488, 0
      %v607 = vsel %vm539, %v489, 0
      %v610 = vsel %vm539, %v490, 0
      %v613 = vsel %vm539, %v491, 0
      %v616 = vsel %vm539, %v492, 0
      %v619 = vsel %vm539, %v493, 0
      %v622 = vsel %vm539, %v494, 0
      %v625 = vsel %vm539, %v495, 0
      %v628 = vsel %vm539, %v496, 0
      %v631 = vsel %vm539, %v497, 0
      %v634 = vsel %vm539, %v498, 0
      %v637 = vsel %vm539, %v499, 0
      %v640 = vsel %vm539, %v500, 0
      %v643 = vsel %vm539, %v501, 0
      %v646 = vsel %vm539, %v502, 0
      %v649 = vsel %vm539, %v503, 0
      %v652 = vsel %vm539, %v504, 0
      %v655 = vsel %vm539, %v505, 0
      %v658 = vsel %vm539, %v506, 0
      %v661 = vsel %vm539, %v507, 0
      %v664 = vsel %vm539, %v508, 0
      %v667 = vsel %vm539, %v509, 0
      %vm669 = vcmask 1044480
      %vm670 = vcmask 1045504
      %v671 = vsel %vm669, 4294967295, 65535
      %v672 = vsel %vm670, %v671, 0
      %v674 = vand.u32 %v534, %v672
      %676 = vmatpush.bf16.msra.mxu0 0
      %677 = vmatpush.bf16.msra.mxu0 0
      %678 = vmatpush.bf16.msra.mxu0 0
      %679 = vmatpush.bf16.msra.mxu0 %v674
      %680 = vmatpush.bf16.msra.mxu0 %v533
      %681 = vmatpush.bf16.msra.mxu0 %v532
      %682 = vmatpush.bf16.msra.mxu0 %v531
      %683 = vmatpush.bf16.msra.mxu0 %v530
      %684 = vmatmul.bf16.gmra.mxu0 %v541
      %v685 = vpop.f32.mrf.mxu0
      %v686 = vadd.f32 0.0, %v685
      %v687 = vpop.f32.mrf.mxu0
      %v688 = vadd.f32 0.0, %v687
      %689 = vmatmul.bf16.gmra.mxu0 %v544
      %v690 = vpop.f32.mrf.mxu0
      %v691 = vadd.f32 0.0, %v690
      %v692 = vpop.f32.mrf.mxu0
      %v693 = vadd.f32 0.0, %v692
      %694 = vmatmul.bf16.gmra.mxu0 %v547
      %v695 = vpop.f32.mrf.mxu0
      %v696 = vadd.f32 0.0, %v695
      %v697 = vpop.f32.mrf.mxu0
      %v698 = vadd.f32 0.0, %v697
      %699 = vmatmul.bf16.gmra.mxu0 %v550
      %v700 = vpop.f32.mrf.mxu0
      %v701 = vadd.f32 0.0, %v700
      %v702 = vpop.f32.mrf.mxu0
      %v703 = vadd.f32 0.0, %v702
      %704 = vmatmul.bf16.gmra.mxu0 %v553
      %v705 = vpop.f32.mrf.mxu0
      %v706 = vadd.f32 0.0, %v705
      %v707 = vpop.f32.mrf.mxu0
      %v708 = vadd.f32 0.0, %v707
      %709 = vmatmul.bf16.gmra.mxu0 %v556
      %v710 = vpop.f32.mrf.mxu0
      %v711 = vadd.f32 0.0, %v710
      %v712 = vpop.f32.mrf.mxu0
      %v713 = vadd.f32 0.0, %v712
      %714 = vmatmul.bf16.gmra.mxu0 %v559
      %v715 = vpop.f32.mrf.mxu0
      %v716 = vadd.f32 0.0, %v715
      %v717 = vpop.f32.mrf.mxu0
      %v718 = vadd.f32 0.0, %v717
      %719 = vmatmul.bf16.gmra.mxu0 %v562
      %v720 = vpop.f32.mrf.mxu0
      %v721 = vadd.f32 0.0, %v720
      %v722 = vpop.f32.mrf.mxu0
      %v723 = vadd.f32 0.0, %v722
      %724 = vmatmul.bf16.gmra.mxu0 %v565
      %v725 = vpop.f32.mrf.mxu0
      %v726 = vadd.f32 0.0, %v725
      %v727 = vpop.f32.mrf.mxu0
      %v728 = vadd.f32 0.0, %v727
      %729 = vmatmul.bf16.gmra.mxu0 %v568
      %v730 = vpop.f32.mrf.mxu0
      %v731 = vadd.f32 0.0, %v730
      %v732 = vpop.f32.mrf.mxu0
      %v733 = vadd.f32 0.0, %v732
      %734 = vmatmul.bf16.gmra.mxu0 %v571
      %v735 = vpop.f32.mrf.mxu0
      %v736 = vadd.f32 0.0, %v735
      %v737 = vpop.f32.mrf.mxu0
      %v738 = vadd.f32 0.0, %v737
      %739 = vmatmul.bf16.gmra.mxu0 %v574
      %v740 = vpop.f32.mrf.mxu0
      %v741 = vadd.f32 0.0, %v740
      %v742 = vpop.f32.mrf.mxu0
      %v743 = vadd.f32 0.0, %v742
      %744 = vmatmul.bf16.gmra.mxu0 %v577
      %v745 = vpop.f32.mrf.mxu0
      %v746 = vadd.f32 0.0, %v745
      %v747 = vpop.f32.mrf.mxu0
      %v748 = vadd.f32 0.0, %v747
      %749 = vmatmul.bf16.gmra.mxu0 %v580
      %v750 = vpop.f32.mrf.mxu0
      %v751 = vadd.f32 0.0, %v750
      %v752 = vpop.f32.mrf.mxu0
      %v753 = vadd.f32 0.0, %v752
      %754 = vmatmul.bf16.gmra.mxu0 %v583
      %v755 = vpop.f32.mrf.mxu0
      %v756 = vadd.f32 0.0, %v755
      %v757 = vpop.f32.mrf.mxu0
      %v758 = vadd.f32 0.0, %v757
      %759 = vmatmul.bf16.gmra.mxu0 %v586
      %v760 = vpop.f32.mrf.mxu0
      %v761 = vadd.f32 0.0, %v760
      %v762 = vpop.f32.mrf.mxu0
      %v763 = vadd.f32 0.0, %v762
      %764 = vmatmul.bf16.gmra.mxu0 %v589
      %v765 = vpop.f32.mrf.mxu0
      %v766 = vadd.f32 0.0, %v765
      %v767 = vpop.f32.mrf.mxu0
      %v768 = vadd.f32 0.0, %v767
      %769 = vmatmul.bf16.gmra.mxu0 %v592
      %v770 = vpop.f32.mrf.mxu0
      %v771 = vadd.f32 0.0, %v770
      %v772 = vpop.f32.mrf.mxu0
      %v773 = vadd.f32 0.0, %v772
      %774 = vmatmul.bf16.gmra.mxu0 %v595
      %v775 = vpop.f32.mrf.mxu0
      %v776 = vadd.f32 0.0, %v775
      %v777 = vpop.f32.mrf.mxu0
      %v778 = vadd.f32 0.0, %v777
      %779 = vmatmul.bf16.gmra.mxu0 %v598
      %v780 = vpop.f32.mrf.mxu0
      %v781 = vadd.f32 0.0, %v780
      %v782 = vpop.f32.mrf.mxu0
      %v783 = vadd.f32 0.0, %v782
      %784 = vmatmul.bf16.gmra.mxu0 %v601
      %v785 = vpop.f32.mrf.mxu0
      %v786 = vadd.f32 0.0, %v785
      %v787 = vpop.f32.mrf.mxu0
      %v788 = vadd.f32 0.0, %v787
      %789 = vmatmul.bf16.gmra.mxu0 %v604
      %v790 = vpop.f32.mrf.mxu0
      %v791 = vadd.f32 0.0, %v790
      %v792 = vpop.f32.mrf.mxu0
      %v793 = vadd.f32 0.0, %v792
      %794 = vmatmul.bf16.gmra.mxu0 %v607
      %v795 = vpop.f32.mrf.mxu0
      %v796 = vadd.f32 0.0, %v795
      %v797 = vpop.f32.mrf.mxu0
      %v798 = vadd.f32 0.0, %v797
      %799 = vmatmul.bf16.gmra.mxu0 %v610
      %v800 = vpop.f32.mrf.mxu0
      %v801 = vadd.f32 0.0, %v800
      %v802 = vpop.f32.mrf.mxu0
      %v803 = vadd.f32 0.0, %v802
      %804 = vmatmul.bf16.gmra.mxu0 %v613
      %v805 = vpop.f32.mrf.mxu0
      %v806 = vadd.f32 0.0, %v805
      %v807 = vpop.f32.mrf.mxu0
      %v808 = vadd.f32 0.0, %v807
      %809 = vmatmul.bf16.gmra.mxu0 %v616
      %v810 = vpop.f32.mrf.mxu0
      %v811 = vadd.f32 0.0, %v810
      %v812 = vpop.f32.mrf.mxu0
      %v813 = vadd.f32 0.0, %v812
      %814 = vmatmul.bf16.gmra.mxu0 %v619
      %v815 = vpop.f32.mrf.mxu0
      %v816 = vadd.f32 0.0, %v815
      %v817 = vpop.f32.mrf.mxu0
      %v818 = vadd.f32 0.0, %v817
      %819 = vmatmul.bf16.gmra.mxu0 %v622
      %v820 = vpop.f32.mrf.mxu0
      %v821 = vadd.f32 0.0, %v820
      %v822 = vpop.f32.mrf.mxu0
      %v823 = vadd.f32 0.0, %v822
      %824 = vmatmul.bf16.gmra.mxu0 %v625
      %v825 = vpop.f32.mrf.mxu0
      %v826 = vadd.f32 0.0, %v825
      %v827 = vpop.f32.mrf.mxu0
      %v828 = vadd.f32 0.0, %v827
      %829 = vmatmul.bf16.gmra.mxu0 %v628
      %v830 = vpop.f32.mrf.mxu0
      %v831 = vadd.f32 0.0, %v830
      %v832 = vpop.f32.mrf.mxu0
      %v833 = vadd.f32 0.0, %v832
      %834 = vmatmul.bf16.gmra.mxu0 %v631
      %v835 = vpop.f32.mrf.mxu0
      %v836 = vadd.f32 0.0, %v835
      %v837 = vpop.f32.mrf.mxu0
      %v838 = vadd.f32 0.0, %v837
      %839 = vmatmul.bf16.gmra.mxu0 %v634
      %v840 = vpop.f32.mrf.mxu0
      %v841 = vadd.f32 0.0, %v840
      %v842 = vpop.f32.mrf.mxu0
      %v843 = vadd.f32 0.0, %v842
      %844 = vmatmul.bf16.gmra.mxu0 %v637
      %v845 = vpop.f32.mrf.mxu0
      %v846 = vadd.f32 0.0, %v845
      %v847 = vpop.f32.mrf.mxu0
      %v848 = vadd.f32 0.0, %v847
      %849 = vmatmul.bf16.gmra.mxu0 %v640
      %v850 = vpop.f32.mrf.mxu0
      %v851 = vadd.f32 0.0, %v850
      %v852 = vpop.f32.mrf.mxu0
      %v853 = vadd.f32 0.0, %v852
      %854 = vmatmul.bf16.gmra.mxu0 %v643
      %v855 = vpop.f32.mrf.mxu0
      %v856 = vadd.f32 0.0, %v855
      %v857 = vpop.f32.mrf.mxu0
      %v858 = vadd.f32 0.0, %v857
      %859 = vmatmul.bf16.gmra.mxu0 %v646
      %v860 = vpop.f32.mrf.mxu0
      %v861 = vadd.f32 0.0, %v860
      %v862 = vpop.f32.mrf.mxu0
      %v863 = vadd.f32 0.0, %v862
      %864 = vmatmul.bf16.gmra.mxu0 %v649
      %v865 = vpop.f32.mrf.mxu0
      %v866 = vadd.f32 0.0, %v865
      %v867 = vpop.f32.mrf.mxu0
      %v868 = vadd.f32 0.0, %v867
      %869 = vmatmul.bf16.gmra.mxu0 %v652
      %v870 = vpop.f32.mrf.mxu0
      %v871 = vadd.f32 0.0, %v870
      %v872 = vpop.f32.mrf.mxu0
      %v873 = vadd.f32 0.0, %v872
      %874 = vmatmul.bf16.gmra.mxu0 %v655
      %v875 = vpop.f32.mrf.mxu0
      %v876 = vadd.f32 0.0, %v875
      %v877 = vpop.f32.mrf.mxu0
      %v878 = vadd.f32 0.0, %v877
      %879 = vmatmul.bf16.gmra.mxu0 %v658
      %v880 = vpop.f32.mrf.mxu0
      %v881 = vadd.f32 0.0, %v880
      %v882 = vpop.f32.mrf.mxu0
      %v883 = vadd.f32 0.0, %v882
      %884 = vmatmul.bf16.gmra.mxu0 %v661
      %v885 = vpop.f32.mrf.mxu0
      %v886 = vadd.f32 0.0, %v885
      %v887 = vpop.f32.mrf.mxu0
      %v888 = vadd.f32 0.0, %v887
      %889 = vmatmul.bf16.gmra.mxu0 %v664
      %v890 = vpop.f32.mrf.mxu0
      %v891 = vadd.f32 0.0, %v890
      %v892 = vpop.f32.mrf.mxu0
      %v893 = vadd.f32 0.0, %v892
      %894 = vmatmul.bf16.gmra.mxu0 %v667
      %v895 = vpop.f32.mrf.mxu0
      %v896 = vadd.f32 0.0, %v895
      %v897 = vpop.f32.mrf.mxu0
      %v898 = vadd.f32 0.0, %v897
      %899 = vdwg.mxu0
      %v900 = vld [vmem:[%s2] sm:$0x1]
      %v902 = vperm.slane %v900, 0
      %v904 = vmul.f32 %v686, %v902
      %v905 = vmul.f32 %v688, %v902
      %v906 = vmul.f32 %v691, %v902
      %v907 = vmul.f32 %v693, %v902
      %v908 = vmul.f32 %v696, %v902
      %v909 = vmul.f32 %v698, %v902
      %v910 = vmul.f32 %v701, %v902
      %v911 = vmul.f32 %v703, %v902
      %v912 = vmul.f32 %v706, %v902
      %v913 = vmul.f32 %v708, %v902
      %v914 = vmul.f32 %v711, %v902
      %v915 = vmul.f32 %v713, %v902
      %v916 = vmul.f32 %v716, %v902
      %v917 = vmul.f32 %v718, %v902
      %v918 = vmul.f32 %v721, %v902
      %v919 = vmul.f32 %v723, %v902
      %v920 = vmul.f32 %v726, %v902
      %v921 = vmul.f32 %v728, %v902
      %v922 = vmul.f32 %v731, %v902
      %v923 = vmul.f32 %v733, %v902
      %v924 = vmul.f32 %v736, %v902
      %v925 = vmul.f32 %v738, %v902
      %v926 = vmul.f32 %v741, %v902
      %v927 = vmul.f32 %v743, %v902
      %v928 = vmul.f32 %v746, %v902
      %v929 = vmul.f32 %v748, %v902
      %v930 = vmul.f32 %v751, %v902
      %v931 = vmul.f32 %v753, %v902
      %v932 = vmul.f32 %v756, %v902
      %v933 = vmul.f32 %v758, %v902
      %v934 = vmul.f32 %v761, %v902
      %v935 = vmul.f32 %v763, %v902
      %v936 = vmul.f32 %v766, %v902
      %v937 = vmul.f32 %v768, %v902
      %v938 = vmul.f32 %v771, %v902
      %v939 = vmul.f32 %v773, %v902
      %v940 = vmul.f32 %v776, %v902
      %v941 = vmul.f32 %v778, %v902
      %v942 = vmul.f32 %v781, %v902
      %v943 = vmul.f32 %v783, %v902
      %v944 = vmul.f32 %v786, %v902
      %v945 = vmul.f32 %v788, %v902
      %v946 = vmul.f32 %v791, %v902
      %v947 = vmul.f32 %v793, %v902
      %v948 = vmul.f32 %v796, %v902
      %v949 = vmul.f32 %v798, %v902
      %v950 = vmul.f32 %v801, %v902
      %v951 = vmul.f32 %v803, %v902
      %v952 = vmul.f32 %v806, %v902
      %v953 = vmul.f32 %v808, %v902
      %v954 = vmul.f32 %v811, %v902
      %v955 = vmul.f32 %v813, %v902
      %v956 = vmul.f32 %v816, %v902
      %v957 = vmul.f32 %v818, %v902
      %v958 = vmul.f32 %v821, %v902
      %v959 = vmul.f32 %v823, %v902
      %v960 = vmul.f32 %v826, %v902
      %v961 = vmul.f32 %v828, %v902
      %v962 = vmul.f32 %v831, %v902
      %v963 = vmul.f32 %v833, %v902
      %v964 = vmul.f32 %v836, %v902
      %v965 = vmul.f32 %v838, %v902
      %v966 = vmul.f32 %v841, %v902
      %v967 = vmul.f32 %v843, %v902
      %v968 = vmul.f32 %v846, %v902
      %v969 = vmul.f32 %v848, %v902
      %v970 = vmul.f32 %v851, %v902
      %v971 = vmul.f32 %v853, %v902
      %v972 = vmul.f32 %v856, %v902
      %v973 = vmul.f32 %v858, %v902
      %v974 = vmul.f32 %v861, %v902
      %v975 = vmul.f32 %v863, %v902
      %v976 = vmul.f32 %v866, %v902
      %v977 = vmul.f32 %v868, %v902
      %v978 = vmul.f32 %v871, %v902
      %v979 = vmul.f32 %v873, %v902
      %v980 = vmul.f32 %v876, %v902
      %v981 = vmul.f32 %v878, %v902
      %v982 = vmul.f32 %v881, %v902
      %v983 = vmul.f32 %v883, %v902
      %v984 = vmul.f32 %v886, %v902
      %v985 = vmul.f32 %v888, %v902
      %v986 = vmul.f32 %v891, %v902
      %v987 = vmul.f32 %v893, %v902
      %v988 = vmul.f32 %v896, %v902
      %v989 = vmul.f32 %v898, %v902
      %v990 = vld [vmem:[%s3] sm:$0x1]
      %v992 = vperm.slane %v990, 0
      %v994 = vadd.f32 %v904, %v992
      %v995 = vadd.f32 %v905, %v992
      %v996 = vadd.f32 %v906, %v992
      %v997 = vadd.f32 %v907, %v992
      %v998 = vadd.f32 %v908, %v992
      %v999 = vadd.f32 %v909, %v992
      %v1000 = vadd.f32 %v910, %v992
      %v1001 = vadd.f32 %v911, %v992
      %v1002 = vadd.f32 %v912, %v992
      %v1003 = vadd.f32 %v913, %v992
      %v1004 = vadd.f32 %v914, %v992
      %v1005 = vadd.f32 %v915, %v992
      %v1006 = vadd.f32 %v916, %v992
      %v1007 = vadd.f32 %v917, %v992
      %v1008 = vadd.f32 %v918, %v992
      %v1009 = vadd.f32 %v919, %v992
      %v1010 = vadd.f32 %v920, %v992
      %v1011 = vadd.f32 %v921, %v992
      %v1012 = vadd.f32 %v922, %v992
      %v1013 = vadd.f32 %v923, %v992
      %v1014 = vadd.f32 %v924, %v992
      %v1015 = vadd.f32 %v925, %v992
      %v1016 = vadd.f32 %v926, %v992
      %v1017 = vadd.f32 %v927, %v992
      %v1018 = vadd.f32 %v928, %v992
      %v1019 = vadd.f32 %v929, %v992
      %v1020 = vadd.f32 %v930, %v992
      %v1021 = vadd.f32 %v931, %v992
      %v1022 = vadd.f32 %v932, %v992
      %v1023 = vadd.f32 %v933, %v992
      %v1024 = vadd.f32 %v934, %v992
      %v1025 = vadd.f32 %v935, %v992
      %v1026 = vadd.f32 %v936, %v992
      %v1027 = vadd.f32 %v937, %v992
      %v1028 = vadd.f32 %v938, %v992
      %v1029 = vadd.f32 %v939, %v992
      %v1030 = vadd.f32 %v940, %v992
      %v1031 = vadd.f32 %v941, %v992
      %v1032 = vadd.f32 %v942, %v992
      %v1033 = vadd.f32 %v943, %v992
      %v1034 = vadd.f32 %v944, %v992
      %v1035 = vadd.f32 %v945, %v992
      %v1036 = vadd.f32 %v946, %v992
      %v1037 = vadd.f32 %v947, %v992
      %v1038 = vadd.f32 %v948, %v992
      %v1039 = vadd.f32 %v949, %v992
      %v1040 = vadd.f32 %v950, %v992
      %v1041 = vadd.f32 %v951, %v992
      %v1042 = vadd.f32 %v952, %v992
      %v1043 = vadd.f32 %v953, %v992
      %v1044 = vadd.f32 %v954, %v992
      %v1045 = vadd.f32 %v955, %v992
      %v1046 = vadd.f32 %v956, %v992
      %v1047 = vadd.f32 %v957, %v992
      %v1048 = vadd.f32 %v958, %v992
      %v1049 = vadd.f32 %v959, %v992
      %v1050 = vadd.f32 %v960, %v992
      %v1051 = vadd.f32 %v961, %v992
      %v1052 = vadd.f32 %v962, %v992
      %v1053 = vadd.f32 %v963, %v992
      %v1054 = vadd.f32 %v964, %v992
      %v1055 = vadd.f32 %v965, %v992
      %v1056 = vadd.f32 %v966, %v992
      %v1057 = vadd.f32 %v967, %v992
      %v1058 = vadd.f32 %v968, %v992
      %v1059 = vadd.f32 %v969, %v992
      %v1060 = vadd.f32 %v970, %v992
      %v1061 = vadd.f32 %v971, %v992
      %v1062 = vadd.f32 %v972, %v992
      %v1063 = vadd.f32 %v973, %v992
      %v1064 = vadd.f32 %v974, %v992
      %v1065 = vadd.f32 %v975, %v992
      %v1066 = vadd.f32 %v976, %v992
      %v1067 = vadd.f32 %v977, %v992
      %v1068 = vadd.f32 %v978, %v992
      %v1069 = vadd.f32 %v979, %v992
      %v1070 = vadd.f32 %v980, %v992
      %v1071 = vadd.f32 %v981, %v992
      %v1072 = vadd.f32 %v982, %v992
      %v1073 = vadd.f32 %v983, %v992
      %v1074 = vadd.f32 %v984, %v992
      %v1075 = vadd.f32 %v985, %v992
      %v1076 = vadd.f32 %v986, %v992
      %v1077 = vadd.f32 %v987, %v992
      %v1078 = vadd.f32 %v988, %v992
      %v1079 = vadd.f32 %v989, %v992
      %v1080 = vmax.f32 %v994, 0.0
      %v1081 = vmax.f32 %v995, 0.0
      %v1082 = vmax.f32 %v996, 0.0
      %v1083 = vmax.f32 %v997, 0.0
      %v1084 = vmax.f32 %v998, 0.0
      %v1085 = vmax.f32 %v999, 0.0
      %v1086 = vmax.f32 %v1000, 0.0
      %v1087 = vmax.f32 %v1001, 0.0
      %v1088 = vmax.f32 %v1002, 0.0
      %v1089 = vmax.f32 %v1003, 0.0
      %v1090 = vmax.f32 %v1004, 0.0
      %v1091 = vmax.f32 %v1005, 0.0
      %v1092 = vmax.f32 %v1006, 0.0
      %v1093 = vmax.f32 %v1007, 0.0
      %v1094 = vmax.f32 %v1008, 0.0
      %v1095 = vmax.f32 %v1009, 0.0
      %v1096 = vmax.f32 %v1010, 0.0
      %v1097 = vmax.f32 %v1011, 0.0
      %v1098 = vmax.f32 %v1012, 0.0
      %v1099 = vmax.f32 %v1013, 0.0
      %v1100 = vmax.f32 %v1014, 0.0
      %v1101 = vmax.f32 %v1015, 0.0
      %v1102 = vmax.f32 %v1016, 0.0
      %v1103 = vmax.f32 %v1017, 0.0
      %v1104 = vmax.f32 %v1018, 0.0
      %v1105 = vmax.f32 %v1019, 0.0
      %v1106 = vmax.f32 %v1020, 0.0
      %v1107 = vmax.f32 %v1021, 0.0
      %v1108 = vmax.f32 %v1022, 0.0
      %v1109 = vmax.f32 %v1023, 0.0
      %v1110 = vmax.f32 %v1024, 0.0
      %v1111 = vmax.f32 %v1025, 0.0
      %v1112 = vmax.f32 %v1026, 0.0
      %v1113 = vmax.f32 %v1027, 0.0
      %v1114 = vmax.f32 %v1028, 0.0
      %v1115 = vmax.f32 %v1029, 0.0
      %v1116 = vmax.f32 %v1030, 0.0
      %v1117 = vmax.f32 %v1031, 0.0
      %v1118 = vmax.f32 %v1032, 0.0
      %v1119 = vmax.f32 %v1033, 0.0
      %v1120 = vmax.f32 %v1034, 0.0
      %v1121 = vmax.f32 %v1035, 0.0
      %v1122 = vmax.f32 %v1036, 0.0
      %v1123 = vmax.f32 %v1037, 0.0
      %v1124 = vmax.f32 %v1038, 0.0
      %v1125 = vmax.f32 %v1039, 0.0
      %v1126 = vmax.f32 %v1040, 0.0
      %v1127 = vmax.f32 %v1041, 0.0
      %v1128 = vmax.f32 %v1042, 0.0
      %v1129 = vmax.f32 %v1043, 0.0
      %v1130 = vmax.f32 %v1044, 0.0
      %v1131 = vmax.f32 %v1045, 0.0
      %v1132 = vmax.f32 %v1046, 0.0
      %v1133 = vmax.f32 %v1047, 0.0
      %v1134 = vmax.f32 %v1048, 0.0
      %v1135 = vmax.f32 %v1049, 0.0
      %v1136 = vmax.f32 %v1050, 0.0
      %v1137 = vmax.f32 %v1051, 0.0
      %v1138 = vmax.f32 %v1052, 0.0
      %v1139 = vmax.f32 %v1053, 0.0
      %v1140 = vmax.f32 %v1054, 0.0
      %v1141 = vmax.f32 %v1055, 0.0
      %v1142 = vmax.f32 %v1056, 0.0
      %v1143 = vmax.f32 %v1057, 0.0
      %v1144 = vmax.f32 %v1058, 0.0
      %v1145 = vmax.f32 %v1059, 0.0
      %v1146 = vmax.f32 %v1060, 0.0
      %v1147 = vmax.f32 %v1061, 0.0
      %v1148 = vmax.f32 %v1062, 0.0
      %v1149 = vmax.f32 %v1063, 0.0
      %v1150 = vmax.f32 %v1064, 0.0
      %v1151 = vmax.f32 %v1065, 0.0
      %v1152 = vmax.f32 %v1066, 0.0
      %v1153 = vmax.f32 %v1067, 0.0
      %v1154 = vmax.f32 %v1068, 0.0
      %v1155 = vmax.f32 %v1069, 0.0
      %v1156 = vmax.f32 %v1070, 0.0
      %v1157 = vmax.f32 %v1071, 0.0
      %v1158 = vmax.f32 %v1072, 0.0
      %v1159 = vmax.f32 %v1073, 0.0
      %v1160 = vmax.f32 %v1074, 0.0
      %v1161 = vmax.f32 %v1075, 0.0
      %v1162 = vmax.f32 %v1076, 0.0
      %v1163 = vmax.f32 %v1077, 0.0
      %v1164 = vmax.f32 %v1078, 0.0
      %v1165 = vmax.f32 %v1079, 0.0
      %v1166 = vpack.c.bf16 %v1080, %v1080
      %v1167 = vpack.c.bf16 %v1081, %v1081
      %v1168 = vpack.c.bf16 %v1082, %v1082
      %v1169 = vpack.c.bf16 %v1083, %v1083
      %v1170 = vpack.c.bf16 %v1084, %v1084
      %v1171 = vpack.c.bf16 %v1085, %v1085
      %v1172 = vpack.c.bf16 %v1086, %v1086
      %v1173 = vpack.c.bf16 %v1087, %v1087
      %v1174 = vpack.c.bf16 %v1088, %v1088
      %v1175 = vpack.c.bf16 %v1089, %v1089
      %v1176 = vpack.c.bf16 %v1090, %v1090
      %v1177 = vpack.c.bf16 %v1091, %v1091
      %v1178 = vpack.c.bf16 %v1092, %v1092
      %v1179 = vpack.c.bf16 %v1093, %v1093
      %v1180 = vpack.c.bf16 %v1094, %v1094
      %v1181 = vpack.c.bf16 %v1095, %v1095
      %v1182 = vpack.c.bf16 %v1096, %v1096
      %v1183 = vpack.c.bf16 %v1097, %v1097
      %v1184 = vpack.c.bf16 %v1098, %v1098
      %v1185 = vpack.c.bf16 %v1099, %v1099
      %v1186 = vpack.c.bf16 %v1100, %v1100
      %v1187 = vpack.c.bf16 %v1101, %v1101
      %v1188 = vpack.c.bf16 %v1102, %v1102
      %v1189 = vpack.c.bf16 %v1103, %v1103
      %v1190 = vpack.c.bf16 %v1104, %v1104
      %v1191 = vpack.c.bf16 %v1105, %v1105
      %v1192 = vpack.c.bf16 %v1106, %v1106
      %v1193 = vpack.c.bf16 %v1107, %v1107
      %v1194 = vpack.c.bf16 %v1108, %v1108
      %v1195 = vpack.c.bf16 %v1109, %v1109
      %v1196 = vpack.c.bf16 %v1110, %v1110
      %v1197 = vpack.c.bf16 %v1111, %v1111
      %v1198 = vpack.c.bf16 %v1112, %v1112
      %v1199 = vpack.c.bf16 %v1113, %v1113
      %v1200 = vpack.c.bf16 %v1114, %v1114
      %v1201 = vpack.c.bf16 %v1115, %v1115
      %v1202 = vpack.c.bf16 %v1116, %v1116
      %v1203 = vpack.c.bf16 %v1117, %v1117
      %v1204 = vpack.c.bf16 %v1118, %v1118
      %v1205 = vpack.c.bf16 %v1119, %v1119
      %v1206 = vpack.c.bf16 %v1120, %v1120
      %v1207 = vpack.c.bf16 %v1121, %v1121
      %v1208 = vpack.c.bf16 %v1122, %v1122
      %v1209 = vpack.c.bf16 %v1123, %v1123
      %v1210 = vpack.c.bf16 %v1124, %v1124
      %v1211 = vpack.c.bf16 %v1125, %v1125
      %v1212 = vpack.c.bf16 %v1126, %v1126
      %v1213 = vpack.c.bf16 %v1127, %v1127
      %v1214 = vpack.c.bf16 %v1128, %v1128
      %v1215 = vpack.c.bf16 %v1129, %v1129
      %v1216 = vpack.c.bf16 %v1130, %v1130
      %v1217 = vpack.c.bf16 %v1131, %v1131
      %v1218 = vpack.c.bf16 %v1132, %v1132
      %v1219 = vpack.c.bf16 %v1133, %v1133
      %v1220 = vpack.c.bf16 %v1134, %v1134
      %v1221 = vpack.c.bf16 %v1135, %v1135
      %v1222 = vpack.c.bf16 %v1136, %v1136
      %v1223 = vpack.c.bf16 %v1137, %v1137
      %v1224 = vpack.c.bf16 %v1138, %v1138
      %v1225 = vpack.c.bf16 %v1139, %v1139
      %v1226 = vpack.c.bf16 %v1140, %v1140
      %v1227 = vpack.c.bf16 %v1141, %v1141
      %v1228 = vpack.c.bf16 %v1142, %v1142
      %v1229 = vpack.c.bf16 %v1143, %v1143
      %v1230 = vpack.c.bf16 %v1144, %v1144
      %v1231 = vpack.c.bf16 %v1145, %v1145
      %v1232 = vpack.c.bf16 %v1146, %v1146
      %v1233 = vpack.c.bf16 %v1147, %v1147
      %v1234 = vpack.c.bf16 %v1148, %v1148
      %v1235 = vpack.c.bf16 %v1149, %v1149
      %v1236 = vpack.c.bf16 %v1150, %v1150
      %v1237 = vpack.c.bf16 %v1151, %v1151
      %v1238 = vpack.c.bf16 %v1152, %v1152
      %v1239 = vpack.c.bf16 %v1153, %v1153
      %v1240 = vpack.c.bf16 %v1154, %v1154
      %v1241 = vpack.c.bf16 %v1155, %v1155
      %v1242 = vpack.c.bf16 %v1156, %v1156
      %v1243 = vpack.c.bf16 %v1157, %v1157
      %v1244 = vpack.c.bf16 %v1158, %v1158
      %v1245 = vpack.c.bf16 %v1159, %v1159
      %v1246 = vpack.c.bf16 %v1160, %v1160
      %v1247 = vpack.c.bf16 %v1161, %v1161
      %v1248 = vpack.c.bf16 %v1162, %v1162
      %v1249 = vpack.c.bf16 %v1163, %v1163
      %v1250 = vpack.c.bf16 %v1164, %v1164
      %v1251 = vpack.c.bf16 %v1165, %v1165
      %vm1252 = vcmask 125952
      %1253 = vst.msk [vmem:[%s197] sm:$0xf] %vm1252, %v1166
      %1254 = vst.msk [vmem:[%s197 + $0x4] sm:$0xf] %vm1252, %v1167
      %1255 = vst.msk [vmem:[%s197 + $0x8] sm:$0xf] %vm1252, %v1168
      %1256 = vst.msk [vmem:[%s197 + $0xc] sm:$0xf] %vm1252, %v1169
      %1257 = vst.msk [vmem:[%s197 + $0x10] sm:$0xf] %vm1252, %v1170
      %1258 = vst.msk [vmem:[%s197 + $0x14] sm:$0xf] %vm1252, %v1171
      %1259 = vst.msk [vmem:[%s197 + $0x18] sm:$0xf] %vm1252, %v1172
      %1260 = vst.msk [vmem:[%s197 + $0x1c] sm:$0xf] %vm1252, %v1173
      %1261 = vst.msk [vmem:[%s197 + $0x20] sm:$0xf] %vm1252, %v1174
      %1262 = vst.msk [vmem:[%s197 + $0x24] sm:$0xf] %vm1252, %v1175
      %1263 = vst.msk [vmem:[%s197 + $0x28] sm:$0xf] %vm1252, %v1176
      %1264 = vst.msk [vmem:[%s197 + $0x2c] sm:$0xf] %vm1252, %v1177
      %1265 = vst.msk [vmem:[%s197 + $0x30] sm:$0xf] %vm1252, %v1178
      %1266 = vst.msk [vmem:[%s197 + $0x34] sm:$0xf] %vm1252, %v1179
      %1267 = vst.msk [vmem:[%s197 + $0x38] sm:$0xf] %vm1252, %v1180
      %1268 = vst.msk [vmem:[%s197 + $0x3c] sm:$0xf] %vm1252, %v1181
      %1269 = vst.msk [vmem:[%s197 + $0x40] sm:$0xf] %vm1252, %v1182
      %1270 = vst.msk [vmem:[%s197 + $0x44] sm:$0xf] %vm1252, %v1183
      %1271 = vst.msk [vmem:[%s197 + $0x48] sm:$0xf] %vm1252, %v1184
      %1272 = vst.msk [vmem:[%s197 + $0x4c] sm:$0xf] %vm1252, %v1185
      %1273 = vst.msk [vmem:[%s197 + $0x50] sm:$0xf] %vm1252, %v1186
      %1274 = vst.msk [vmem:[%s197 + $0x54] sm:$0xf] %vm1252, %v1187
      %1275 = vst.msk [vmem:[%s197 + $0x58] sm:$0xf] %vm1252, %v1188
      %1276 = vst.msk [vmem:[%s197 + $0x5c] sm:$0xf] %vm1252, %v1189
      %1277 = vst.msk [vmem:[%s197 + $0x60] sm:$0xf] %vm1252, %v1190
      %1278 = vst.msk [vmem:[%s197 + $0x64] sm:$0xf] %vm1252, %v1191
      %1279 = vst.msk [vmem:[%s197 + $0x68] sm:$0xf] %vm1252, %v1192
      %1280 = vst.msk [vmem:[%s197 + $0x6c] sm:$0xf] %vm1252, %v1193
      %1281 = vst.msk [vmem:[%s197 + $0x70] sm:$0xf] %vm1252, %v1194
      %1282 = vst.msk [vmem:[%s197 + $0x74] sm:$0xf] %vm1252, %v1195
      %1283 = vst.msk [vmem:[%s197 + $0x78] sm:$0xf] %vm1252, %v1196
      %1284 = vst.msk [vmem:[%s197 + $0x7c] sm:$0xf] %vm1252, %v1197
      %1285 = vst.msk [vmem:[%s197 + $0x80] sm:$0xf] %vm1252, %v1198
      %1286 = vst.msk [vmem:[%s197 + $0x84] sm:$0xf] %vm1252, %v1199
      %1287 = vst.msk [vmem:[%s197 + $0x88] sm:$0xf] %vm1252, %v1200
      %1288 = vst.msk [vmem:[%s197 + $0x8c] sm:$0xf] %vm1252, %v1201
      %1289 = vst.msk [vmem:[%s197 + $0x90] sm:$0xf] %vm1252, %v1202
      %1290 = vst.msk [vmem:[%s197 + $0x94] sm:$0xf] %vm1252, %v1203
      %1291 = vst.msk [vmem:[%s197 + $0x98] sm:$0xf] %vm1252, %v1204
      %1292 = vst.msk [vmem:[%s197 + $0x9c] sm:$0xf] %vm1252, %v1205
      %1293 = vst.msk [vmem:[%s197 + $0xa0] sm:$0xf] %vm1252, %v1206
      %1294 = vst.msk [vmem:[%s197 + $0xa4] sm:$0xf] %vm1252, %v1207
      %1295 = vst.msk [vmem:[%s197 + $0xa8] sm:$0xf] %vm1252, %v1208
      %1296 = vst.msk [vmem:[%s197 + $0xac] sm:$0xf] %vm1252, %v1209
      %1297 = vst.msk [vmem:[%s197 + $0xb0] sm:$0xf] %vm1252, %v1210
      %1298 = vst.msk [vmem:[%s197 + $0xb4] sm:$0xf] %vm1252, %v1211
      %1299 = vst.msk [vmem:[%s197 + $0xb8] sm:$0xf] %vm1252, %v1212
      %1300 = vst.msk [vmem:[%s197 + $0xbc] sm:$0xf] %vm1252, %v1213
      %1301 = vst.msk [vmem:[%s197 + $0xc0] sm:$0xf] %vm1252, %v1214
      %1302 = vst.msk [vmem:[%s197 + $0xc4] sm:$0xf] %vm1252, %v1215
      %1303 = vst.msk [vmem:[%s197 + $0xc8] sm:$0xf] %vm1252, %v1216
      %1304 = vst.msk [vmem:[%s197 + $0xcc] sm:$0xf] %vm1252, %v1217
      %1305 = vst.msk [vmem:[%s197 + $0xd0] sm:$0xf] %vm1252, %v1218
      %1306 = vst.msk [vmem:[%s197 + $0xd4] sm:$0xf] %vm1252, %v1219
      %1307 = vst.msk [vmem:[%s197 + $0xd8] sm:$0xf] %vm1252, %v1220
      %1308 = vst.msk [vmem:[%s197 + $0xdc] sm:$0xf] %vm1252, %v1221
      %1309 = vst.msk [vmem:[%s197 + $0xe0] sm:$0xf] %vm1252, %v1222
      %1310 = vst.msk [vmem:[%s197 + $0xe4] sm:$0xf] %vm1252, %v1223
      %1311 = vst.msk [vmem:[%s197 + $0xe8] sm:$0xf] %vm1252, %v1224
      %1312 = vst.msk [vmem:[%s197 + $0xec] sm:$0xf] %vm1252, %v1225
      %1313 = vst.msk [vmem:[%s197 + $0xf0] sm:$0xf] %vm1252, %v1226
      %1314 = vst.msk [vmem:[%s197 + $0xf4] sm:$0xf] %vm1252, %v1227
      %1315 = vst.msk [vmem:[%s197 + $0xf8] sm:$0xf] %vm1252, %v1228
      %1316 = vst.msk [vmem:[%s197 + $0xfc] sm:$0xf] %vm1252, %v1229
      %1317 = vst.msk [vmem:[%s197 + $0x100] sm:$0xf] %vm1252, %v1230
      %1318 = vst.msk [vmem:[%s197 + $0x104] sm:$0xf] %vm1252, %v1231
      %1319 = vst.msk [vmem:[%s197 + $0x108] sm:$0xf] %vm1252, %v1232
      %1320 = vst.msk [vmem:[%s197 + $0x10c] sm:$0xf] %vm1252, %v1233
      %1321 = vst.msk [vmem:[%s197 + $0x110] sm:$0xf] %vm1252, %v1234
      %1322 = vst.msk [vmem:[%s197 + $0x114] sm:$0xf] %vm1252, %v1235
      %1323 = vst.msk [vmem:[%s197 + $0x118] sm:$0xf] %vm1252, %v1236
      %1324 = vst.msk [vmem:[%s197 + $0x11c] sm:$0xf] %vm1252, %v1237
      %1325 = vst.msk [vmem:[%s197 + $0x120] sm:$0xf] %vm1252, %v1238
      %1326 = vst.msk [vmem:[%s197 + $0x124] sm:$0xf] %vm1252, %v1239
      %1327 = vst.msk [vmem:[%s197 + $0x128] sm:$0xf] %vm1252, %v1240
      %1328 = vst.msk [vmem:[%s197 + $0x12c] sm:$0xf] %vm1252, %v1241
      %1329 = vst.msk [vmem:[%s197 + $0x130] sm:$0xf] %vm1252, %v1242
      %1330 = vst.msk [vmem:[%s197 + $0x134] sm:$0xf] %vm1252, %v1243
      %1331 = vst.msk [vmem:[%s197 + $0x138] sm:$0xf] %vm1252, %v1244
      %1332 = vst.msk [vmem:[%s197 + $0x13c] sm:$0xf] %vm1252, %v1245
      %1333 = vst.msk [vmem:[%s197 + $0x140] sm:$0xf] %vm1252, %v1246
      %1334 = vst.msk [vmem:[%s197 + $0x144] sm:$0xf] %vm1252, %v1247
      %1335 = vst.msk [vmem:[%s197 + $0x148] sm:$0xf] %vm1252, %v1248
      %1336 = vst.msk [vmem:[%s197 + $0x14c] sm:$0xf] %vm1252, %v1249
      %1337 = vst.msk [vmem:[%s197 + $0x150] sm:$0xf] %vm1252, %v1250
      %vm1338 = vcmask 123904
      %1339 = vst.msk [vmem:[%s197 + $0x154] sm:$0x3] %vm1338, %v1251
      %p1340 = scmp.lt.s32.totalorder %s15, 1
      %s1341 = scalar_select %p1340, %s15, 1
      %s1342 = smul.addr %s1341, 86
      %s1343 = smul.addr %s1342, 4
      %s1344 = scalar_lea.vmem %s4, %s1343
      // Predicated region
      $region37: #{dqn_forward.2} parent=35 // pred_check
        %p1345 = pneg %p122
      $region38: #{dqn_forward.2} parent=35 // pred_check_branch
        %1347 = sbr.rel (%p1345) target = $region40
      $region39: #{dqn_forward.2} parent=35 // pred_region
        _
      $region40: #{dqn_forward.2} parent=35 // pred_fallthru
        _
    $region36: #{dqn_forward.2} parent=5 // pred_fallthru
      _
    %p1348 = scmp.le.s32.totalorder 2, %s10
    // Predicated region
    $region41: #{dqn_forward.2} parent=5 // pred_check
      %p1349 = pneg %p1348
    $region42: #{dqn_forward.2} parent=5 // pred_check_branch
      %1351 = sbr.rel (%p1349) target = $region44
    $region43: #{dqn_forward.2} parent=5 // pred_region
      %s1352 = ssub.s32 %s10, 2
      // Predicated region
      $region45: #{dqn_forward.2} parent=43 // pred_check
        %p1353 = pneg %p128
      $region46: #{dqn_forward.2} parent=43 // pred_check_branch
        %1355 = sbr.rel (%p1353) target = $region48
      $region47: #{dqn_forward.2} parent=43 // pred_region
        %p1356 = scmp.lt.s32.totalorder %s16, 1
        %s1357 = scalar_select %p1356, %s16, 1
        %s1358 = smul.addr %s1357, 86
        %s1359 = smul.addr %s1358, 4
        %s1360 = scalar_lea.vmem %s4, %s1359
      $region48: #{dqn_forward.2} parent=43 // pred_fallthru
        _
    $region44: #{dqn_forward.2} parent=5 // pred_fallthru
      _
  $region6: #{dqn_forward.2} parent=0 // loop_footer
    %s14 = sadd.s32 1, %s10
  $region7: #{dqn_forward.2} parent=0 // loop_footer_branch
    %9 = sbr.rel target = $region3
  $region8: #{dqn_forward.2} parent=0 // loop_exit
    _

// kernel: dqn_forward.3
$region0: #{dqn_forward.3}
  #allocation0 [shape = 'u32[]', space=smem, size = 0x4, offset = 0x4, fixed_abs, tag = 'smem constant byte address 0x4 - core index']
  #allocation1 [shape = 'u32[72,128]{1,0:T(1,128)}', space=vmem, size = 0x9000, scoped, tag = 'internal scratch']
  #allocation2 [shape = 'f32[238,32]{1,0:T(8,128)}', space=vmem, size = 0x1e000, scoped, tag = 'scratch operand']
  %s0 = inlined_call_operand.vmem [shape: bf16[238,400], index: 0, kind: input, shape index: {}]
  %s1 = inlined_call_operand.vmem [shape: bf16[400,32], index: 1, kind: input, shape index: {}]
  %s2 = inlined_call_operand.vmem [shape: f32[1,32], index: 2, kind: input, shape index: {}]
  %s3 = inlined_call_operand.vmem [shape: f32[1,32], index: 3, kind: input, shape index: {}]
  %s4 = inlined_call_operand.vmem [shape: bf16[800,32], index: 4, kind: input, shape index: {}]
  %s5 = inlined_call_operand.vmem [shape: f32[1,32], index: 5, kind: input, shape index: {}]
  %s6 = inlined_call_operand.vmem [shape: f32[1,32], index: 6, kind: input, shape index: {}]
  %s7 = inlined_call_operand.vmem [shape: f32[2,28,32], index: 7, kind: input, shape index: {}]
  %s8 = inlined_call_operand.vmem [shape: f32[1,2], index: 8, kind: input, shape index: {}]
  %s9 = inlined_call_operand.hbm [shape: f32[2,2], index: 9, kind: output, shape index: {}]
  %s10 = sld [smem:[#allocation0]]
  $region46: #{dqn_forward.3} parent=0
    _
  %s12 = ssub.s32 1, %s10
  %s13 = scalar_select 0, %s12, %s10
  $region1: #{dqn_forward.3} parent=0
    #allocation3 [shape = 'u8[1024]{0}', space=vmem, size = 0x400, scoped, tag = 'output window, operand 0, single buffered']
    #allocation4 [shape = 's32[1]{0}', space=sflag, size = 0x4, scoped, tag = 'scoped memory for dqn_forward.3']
    %14 = vsyncpa [#allocation4], 0
    // Predicated region
    $region2: #{dqn_forward.3} parent=1 // pred_check
      _
    $region3: #{dqn_forward.3} parent=1 // pred_check_branch
      %16 = sbr.rel (0) target = $region5
    $region4: #{dqn_forward.3} parent=1 // pred_region
      _
    $region5: #{dqn_forward.3} parent=1 // pred_fallthru
      _
    // Predicated region
    $region6: #{dqn_forward.3} parent=1 // pred_check
      _
    $region7: #{dqn_forward.3} parent=1 // pred_check_branch
      %18 = sbr.rel (0) target = $region9
    $region8: #{dqn_forward.3} parent=1 // pred_region
      _
    $region9: #{dqn_forward.3} parent=1 // pred_fallthru
      _
    // Predicated region
    $region10: #{dqn_forward.3} parent=1 // pred_check
      _
    $region11: #{dqn_forward.3} parent=1 // pred_check_branch
      %20 = sbr.rel (0) target = $region13
    $region12: #{dqn_forward.3} parent=1 // pred_region
      _
    $region13: #{dqn_forward.3} parent=1 // pred_fallthru
      _
    // Predicated region
    $region14: #{dqn_forward.3} parent=1 // pred_check
      _
    $region15: #{dqn_forward.3} parent=1 // pred_check_branch
      %22 = sbr.rel (0) target = $region17
    $region16: #{dqn_forward.3} parent=1 // pred_region
      _
    $region17: #{dqn_forward.3} parent=1 // pred_fallthru
      _
    // Predicated region
    $region18: #{dqn_forward.3} parent=1 // pred_check
      _
    $region19: #{dqn_forward.3} parent=1 // pred_check_branch
      %24 = sbr.rel (0) target = $region21
    $region20: #{dqn_forward.3} parent=1 // pred_region
      _
    $region21: #{dqn_forward.3} parent=1 // pred_fallthru
      _
    // Predicated region
    $region22: #{dqn_forward.3} parent=1 // pred_check
      _
    $region23: #{dqn_forward.3} parent=1 // pred_check_branch
      %26 = sbr.rel (0) target = $region25
    $region24: #{dqn_forward.3} parent=1 // pred_region
      _
    $region25: #{dqn_forward.3} parent=1 // pred_fallthru
      _
    // Predicated region
    $region26: #{dqn_forward.3} parent=1 // pred_check
      _
    $region27: #{dqn_forward.3} parent=1 // pred_check_branch
      %28 = sbr.rel (0) target = $region29
    $region28: #{dqn_forward.3} parent=1 // pred_region
      _
    $region29: #{dqn_forward.3} parent=1 // pred_fallthru
      _
    // Predicated region
    $region30: #{dqn_forward.3} parent=1 // pred_check
      _
    $region31: #{dqn_forward.3} parent=1 // pred_check_branch
      %30 = sbr.rel (0) target = $region33
    $region32: #{dqn_forward.3} parent=1 // pred_region
      _
    $region33: #{dqn_forward.3} parent=1 // pred_fallthru
      _
    // Predicated region
    $region34: #{dqn_forward.3} parent=1 // pred_check
      _
    $region35: #{dqn_forward.3} parent=1 // pred_check_branch
      %32 = sbr.rel (0) target = $region37
    $region36: #{dqn_forward.3} parent=1 // pred_region
      _
    $region37: #{dqn_forward.3} parent=1 // pred_fallthru
      _
    %v34 = vld [vmem:[%s0] sm:$0xff]
    %v35 = vld [vmem:[%s0 + $0x8] sm:$0xff]
    %v36 = vld [vmem:[%s0 + $0x10] sm:$0xff]
    %v37 = vld [vmem:[%s0 + $0x18] sm:$0xff]
    %v38 = vld [vmem:[%s0 + $0x20] sm:$0xff]
    %v39 = vld [vmem:[%s0 + $0x28] sm:$0xff]
    %v40 = vld [vmem:[%s0 + $0x30] sm:$0xff]
    %v41 = vld [vmem:[%s0 + $0x38] sm:$0xff]
    %v42 = vld [vmem:[%s0 + $0x40] sm:$0xff]
    %v43 = vld [vmem:[%s0 + $0x48] sm:$0xff]
    %v44 = vld [vmem:[%s0 + $0x50] sm:$0xff]
    %v45 = vld [vmem:[%s0 + $0x58] sm:$0xff]
    %v46 = vld [vmem:[%s0 + $0x60] sm:$0xff]
    %v47 = vld [vmem:[%s0 + $0x68] sm:$0xff]
    %v48 = vld [vmem:[%s0 + $0x70] sm:$0xff]
    %v49 = vld [vmem:[%s0 + $0x78] sm:$0xff]
    %v50 = vld [vmem:[%s0 + $0x80] sm:$0xff]
    %v51 = vld [vmem:[%s0 + $0x88] sm:$0xff]
    %v52 = vld [vmem:[%s0 + $0x90] sm:$0xff]
    %v53 = vld [vmem:[%s0 + $0x98] sm:$0xff]
    %v54 = vld [vmem:[%s0 + $0xa0] sm:$0xff]
    %v55 = vld [vmem:[%s0 + $0xa8] sm:$0xff]
    %v56 = vld [vmem:[%s0 + $0xb0] sm:$0xff]
    %v57 = vld [vmem:[%s0 + $0xb8] sm:$0xff]
    %v58 = vld [vmem:[%s0 + $0xc0] sm:$0xff]
    %v59 = vld [vmem:[%s0 + $0xc8] sm:$0xff]
    %v60 = vld [vmem:[%s0 + $0xd0] sm:$0xff]
    %v61 = vld [vmem:[%s0 + $0xd8] sm:$0xff]
    %v62 = vld [vmem:[%s0 + $0xe0] sm:$0xff]
    %v63 = vld [vmem:[%s0 + $0xe8] sm:$0xff]
    %v64 = vld [vmem:[%s0 + $0xf0] sm:$0xff]
    %v65 = vld [vmem:[%s0 + $0xf8] sm:$0xff]
    %v66 = vld [vmem:[%s0 + $0x100] sm:$0xff]
    %v67 = vld [vmem:[%s0 + $0x108] sm:$0xff]
    %v68 = vld [vmem:[%s0 + $0x110] sm:$0xff]
    %v69 = vld [vmem:[%s0 + $0x118] sm:$0xff]
    %v70 = vld [vmem:[%s0 + $0x120] sm:$0xff]
    %v71 = vld [vmem:[%s0 + $0x128] sm:$0xff]
    %v72 = vld [vmem:[%s0 + $0x130] sm:$0xff]
    %v73 = vld [vmem:[%s0 + $0x138] sm:$0xff]
    %v74 = vld [vmem:[%s0 + $0x140] sm:$0xff]
    %v75 = vld [vmem:[%s0 + $0x148] sm:$0xff]
    %v76 = vld [vmem:[%s0 + $0x150] sm:$0xff]
    %v77 = vld [vmem:[%s0 + $0x158] sm:$0xff]
    %v78 = vld [vmem:[%s0 + $0x160] sm:$0xff]
    %v79 = vld [vmem:[%s0 + $0x168] sm:$0xff]
    %v80 = vld [vmem:[%s0 + $0x170] sm:$0xff]
    %v81 = vld [vmem:[%s0 + $0x178] sm:$0xff]
    %v82 = vld [vmem:[%s0 + $0x180] sm:$0xff]
    %v83 = vld [vmem:[%s0 + $0x188] sm:$0xff]
    %v84 = vld [vmem:[%s0 + $0x190] sm:$0xff]
    %v85 = vld [vmem:[%s0 + $0x198] sm:$0xff]
    %v86 = vld [vmem:[%s0 + $0x1a0] sm:$0xff]
    %v87 = vld [vmem:[%s0 + $0x1a8] sm:$0xff]
    %v88 = vld [vmem:[%s0 + $0x1b0] sm:$0xff]
    %v89 = vld [vmem:[%s0 + $0x1b8] sm:$0xff]
    %v90 = vld [vmem:[%s0 + $0x1c0] sm:$0xff]
    %v91 = vld [vmem:[%s0 + $0x1c8] sm:$0xff]
    %v92 = vld [vmem:[%s0 + $0x1d0] sm:$0x77]
    %v93 = vld [vmem:[%s0 + $0x1d8] sm:$0x77]
    %v94 = vld [vmem:[%s1] sm:$0xf]
    %v95 = vld [vmem:[%s1 + $0x4] sm:$0xf]
    %v96 = vld [vmem:[%s1 + $0x8] sm:$0xf]
    %v97 = vld [vmem:[%s1 + $0xc] sm:$0xf]
    %v98 = vld [vmem:[%s1 + $0x10] sm:$0xf]
    %v99 = vld [vmem:[%s1 + $0x14] sm:$0xf]
    %v100 = vld [vmem:[%s1 + $0x18] sm:$0xf]
    %v101 = vld [vmem:[%s1 + $0x1c] sm:$0xf]
    %v102 = vld [vmem:[%s1 + $0x20] sm:$0xf]
    %v103 = vld [vmem:[%s1 + $0x24] sm:$0xf]
    %v104 = vld [vmem:[%s1 + $0x28] sm:$0xf]
    %v105 = vld [vmem:[%s1 + $0x2c] sm:$0xf]
    %v106 = vld [vmem:[%s1 + $0x30] sm:$0xf]
    %v107 = vld [vmem:[%s1 + $0x34] sm:$0xf]
    %v108 = vld [vmem:[%s1 + $0x38] sm:$0xf]
    %v109 = vld [vmem:[%s1 + $0x3c] sm:$0xf]
    %v110 = vld [vmem:[%s1 + $0x40] sm:$0xf]
    %v111 = vld [vmem:[%s1 + $0x44] sm:$0xf]
    %v112 = vld [vmem:[%s1 + $0x48] sm:$0xf]
    %v113 = vld [vmem:[%s1 + $0x4c] sm:$0xf]
    %v114 = vld [vmem:[%s1 + $0x50] sm:$0xf]
    %v115 = vld [vmem:[%s1 + $0x54] sm:$0xf]
    %v116 = vld [vmem:[%s1 + $0x58] sm:$0xf]
    %v117 = vld [vmem:[%s1 + $0x5c] sm:$0xf]
    %v118 = vld [vmem:[%s1 + $0x60] sm:$0xf]
    %v119 = vld [vmem:[%s1 + $0x64] sm:$0xf]
    %v120 = vld [vmem:[%s1 + $0x68] sm:$0xf]
    %v121 = vld [vmem:[%s1 + $0x6c] sm:$0xf]
    %v122 = vld [vmem:[%s1 + $0x70] sm:$0xf]
    %v123 = vld [vmem:[%s1 + $0x74] sm:$0xf]
    %v124 = vld [vmem:[%s1 + $0x78] sm:$0xf]
    %v125 = vld [vmem:[%s1 + $0x7c] sm:$0xf]
    %v126 = vld [vmem:[%s1 + $0x80] sm:$0xf]
    %v127 = vld [vmem:[%s1 + $0x84] sm:$0xf]
    %v128 = vld [vmem:[%s1 + $0x88] sm:$0xf]
    %v129 = vld [vmem:[%s1 + $0x8c] sm:$0xf]
    %v130 = vld [vmem:[%s1 + $0x90] sm:$0xf]
    %v131 = vld [vmem:[%s1 + $0x94] sm:$0xf]
    %v132 = vld [vmem:[%s1 + $0x98] sm:$0xf]
    %v133 = vld [vmem:[%s1 + $0x9c] sm:$0xf]
    %v134 = vld [vmem:[%s1 + $0xa0] sm:$0xf]
    %v135 = vld [vmem:[%s1 + $0xa4] sm:$0xf]
    %v136 = vld [vmem:[%s1 + $0xa8] sm:$0xf]
    %v137 = vld [vmem:[%s1 + $0xac] sm:$0xf]
    %v138 = vld [vmem:[%s1 + $0xb0] sm:$0xf]
    %v139 = vld [vmem:[%s1 + $0xb4] sm:$0xf]
    %v140 = vld [vmem:[%s1 + $0xb8] sm:$0xf]
    %v141 = vld [vmem:[%s1 + $0xbc] sm:$0xf]
    %v142 = vld [vmem:[%s1 + $0xc0] sm:$0xf]
    %v143 = vld [vmem:[%s1 + $0xc4] sm:$0xf]
    %v204 = vunpack.c.l.b16 %v34
    %v205 = vunpack.c.h.b16 %v34
    %v206 = vunpack.c.l.b16 %v35
    %v207 = vunpack.c.h.b16 %v35
    %v208 = vunpack.c.l.b16 %v36
    %v209 = vunpack.c.h.b16 %v36
    %v210 = vunpack.c.l.b16 %v37
    %v211 = vunpack.c.h.b16 %v37
    %v212 = vunpack.c.l.b16 %v38
    %v213 = vunpack.c.h.b16 %v38
    %v214 = vunpack.c.l.b16 %v39
    %v215 = vunpack.c.h.b16 %v39
    %v216 = vunpack.c.l.b16 %v40
    %v217 = vunpack.c.h.b16 %v40
    %v218 = vunpack.c.l.b16 %v41
    %v219 = vunpack.c.h.b16 %v41
    %v220 = vunpack.c.l.b16 %v42
    %v221 = vunpack.c.h.b16 %v42
    %v222 = vunpack.c.l.b16 %v43
    %v223 = vunpack.c.h.b16 %v43
    %v224 = vunpack.c.l.b16 %v44
    %v225 = vunpack.c.h.b16 %v44
    %v226 = vunpack.c.l.b16 %v45
    %v227 = vunpack.c.h.b16 %v45
    %v228 = vunpack.c.l.b16 %v46
    %v229 = vunpack.c.h.b16 %v46
    %v230 = vunpack.c.l.b16 %v47
    %v231 = vunpack.c.h.b16 %v47
    %v232 = vunpack.c.l.b16 %v48
    %v233 = vunpack.c.h.b16 %v48
    %v234 = vunpack.c.l.b16 %v49
    %v235 = vunpack.c.h.b16 %v49
    %v236 = vunpack.c.l.b16 %v50
    %v237 = vunpack.c.h.b16 %v50
    %v238 = vunpack.c.l.b16 %v51
    %v239 = vunpack.c.h.b16 %v51
    %v240 = vunpack.c.l.b16 %v52
    %v241 = vunpack.c.h.b16 %v52
    %v242 = vunpack.c.l.b16 %v53
    %v243 = vunpack.c.h.b16 %v53
    %v244 = vunpack.c.l.b16 %v54
    %v245 = vunpack.c.h.b16 %v54
    %v246 = vunpack.c.l.b16 %v55
    %v247 = vunpack.c.h.b16 %v55
    %v248 = vunpack.c.l.b16 %v56
    %v249 = vunpack.c.h.b16 %v56
    %v250 = vunpack.c.l.b16 %v57
    %v251 = vunpack.c.h.b16 %v57
    %v252 = vunpack.c.l.b16 %v58
    %v253 = vunpack.c.h.b16 %v58
    %v254 = vunpack.c.l.b16 %v59
    %v255 = vunpack.c.h.b16 %v59
    %v256 = vunpack.c.l.b16 %v60
    %v257 = vunpack.c.h.b16 %v60
    %v258 = vunpack.c.l.b16 %v61
    %v259 = vunpack.c.h.b16 %v61
    %v260 = vunpack.c.l.b16 %v62
    %v261 = vunpack.c.h.b16 %v62
    %v262 = vunpack.c.l.b16 %v63
    %v263 = vunpack.c.h.b16 %v63
    %v264 = vunpack.c.l.b16 %v64
    %v265 = vunpack.c.h.b16 %v64
    %v266 = vunpack.c.l.b16 %v65
    %v267 = vunpack.c.h.b16 %v65
    %v268 = vunpack.c.l.b16 %v66
    %v269 = vunpack.c.h.b16 %v66
    %v270 = vunpack.c.l.b16 %v67
    %v271 = vunpack.c.h.b16 %v67
    %v272 = vunpack.c.l.b16 %v68
    %v273 = vunpack.c.h.b16 %v68
    %v274 = vunpack.c.l.b16 %v69
    %v275 = vunpack.c.h.b16 %v69
    %v276 = vunpack.c.l.b16 %v70
    %v277 = vunpack.c.h.b16 %v70
    %v278 = vunpack.c.l.b16 %v71
    %v279 = vunpack.c.h.b16 %v71
    %v280 = vunpack.c.l.b16 %v72
    %v281 = vunpack.c.h.b16 %v72
    %v282 = vunpack.c.l.b16 %v73
    %v283 = vunpack.c.h.b16 %v73
    %v284 = vunpack.c.l.b16 %v74
    %v285 = vunpack.c.h.b16 %v74
    %v286 = vunpack.c.l.b16 %v75
    %v287 = vunpack.c.h.b16 %v75
    %v288 = vunpack.c.l.b16 %v76
    %v289 = vunpack.c.h.b16 %v76
    %v290 = vunpack.c.l.b16 %v77
    %v291 = vunpack.c.h.b16 %v77
    %v292 = vunpack.c.l.b16 %v78
    %v293 = vunpack.c.h.b16 %v78
    %v294 = vunpack.c.l.b16 %v79
    %v295 = vunpack.c.h.b16 %v79
    %v296 = vunpack.c.l.b16 %v80
    %v297 = vunpack.c.h.b16 %v80
    %v298 = vunpack.c.l.b16 %v81
    %v299 = vunpack.c.h.b16 %v81
    %v300 = vunpack.c.l.b16 %v82
    %v301 = vunpack.c.h.b16 %v82
    %v302 = vunpack.c.l.b16 %v83
    %v303 = vunpack.c.h.b16 %v83
    %v304 = vunpack.c.l.b16 %v84
    %v305 = vunpack.c.h.b16 %v84
    %v306 = vunpack.c.l.b16 %v85
    %v307 = vunpack.c.h.b16 %v85
    %v308 = vunpack.c.l.b16 %v86
    %v309 = vunpack.c.h.b16 %v86
    %v310 = vunpack.c.l.b16 %v87
    %v311 = vunpack.c.h.b16 %v87
    %v312 = vunpack.c.l.b16 %v88
    %v313 = vunpack.c.h.b16 %v88
    %v314 = vunpack.c.l.b16 %v89
    %v315 = vunpack.c.h.b16 %v89
    %v316 = vunpack.c.l.b16 %v90
    %v317 = vunpack.c.h.b16 %v90
    %v318 = vunpack.c.l.b16 %v91
    %v319 = vunpack.c.h.b16 %v91
    %v320 = vunpack.c.l.b16 %v92
    %v321 = vunpack.c.h.b16 %v92
    %v322 = vunpack.c.l.b16 %v93
    %v323 = vunpack.c.h.b16 %v93
    %v324 = vpack.c.b16 %v208, %v204
    %v325 = vpack.c.b16 %v209, %v205
    %v326 = vpack.c.b16 %v210, %v206
    %v327 = vpack.c.b16 %v211, %v207
    %v328 = vpack.c.b16 %v216, %v212
    %v329 = vpack.c.b16 %v217, %v213
    %v330 = vpack.c.b16 %v218, %v214
    %v331 = vpack.c.b16 %v219, %v215
    %v332 = vpack.c.b16 %v224, %v220
    %v333 = vpack.c.b16 %v225, %v221
    %v334 = vpack.c.b16 %v226, %v222
    %v335 = vpack.c.b16 %v227, %v223
    %v336 = vpack.c.b16 %v232, %v228
    %v337 = vpack.c.b16 %v233, %v229
    %v338 = vpack.c.b16 %v234, %v230
    %v339 = vpack.c.b16 %v235, %v231
    %v340 = vpack.c.b16 %v240, %v236
    %v341 = vpack.c.b16 %v241, %v237
    %v342 = vpack.c.b16 %v242, %v238
    %v343 = vpack.c.b16 %v243, %v239
    %v344 = vpack.c.b16 %v248, %v244
    %v345 = vpack.c.b16 %v249, %v245
    %v346 = vpack.c.b16 %v250, %v246
    %v347 = vpack.c.b16 %v251, %v247
    %v348 = vpack.c.b16 %v256, %v252
    %v349 = vpack.c.b16 %v257, %v253
    %v350 = vpack.c.b16 %v258, %v254
    %v351 = vpack.c.b16 %v259, %v255
    %v352 = vpack.c.b16 %v264, %v260
    %v353 = vpack.c.b16 %v265, %v261
    %v354 = vpack.c.b16 %v266, %v262
    %v355 = vpack.c.b16 %v267, %v263
    %v356 = vpack.c.b16 %v272, %v268
    %v357 = vpack.c.b16 %v273, %v269
    %v358 = vpack.c.b16 %v274, %v270
    %v359 = vpack.c.b16 %v275, %v271
    %v360 = vpack.c.b16 %v280, %v276
    %v361 = vpack.c.b16 %v281, %v277
    %v362 = vpack.c.b16 %v282, %v278
    %v363 = vpack.c.b16 %v283, %v279
    %v364 = vpack.c.b16 %v288, %v284
    %v365 = vpack.c.b16 %v289, %v285
    %v366 = vpack.c.b16 %v290, %v286
    %v367 = vpack.c.b16 %v291, %v287
    %v368 = vpack.c.b16 %v296, %v292
    %v369 = vpack.c.b16 %v297, %v293
    %v370 = vpack.c.b16 %v298, %v294
    %v371 = vpack.c.b16 %v299, %v295
    %v372 = vpack.c.b16 %v304, %v300
    %v373 = vpack.c.b16 %v305, %v301
    %v374 = vpack.c.b16 %v306, %v302
    %v375 = vpack.c.b16 %v307, %v303
    %v376 = vpack.c.b16 %v312, %v308
    %v377 = vpack.c.b16 %v313, %v309
    %v378 = vpack.c.b16 %v314, %v310
    %v379 = vpack.c.b16 %v315, %v311
    %v380 = vpack.c.b16 %v320, %v316
    %v381 = vpack.c.b16 %v321, %v317
    %v382 = vpack.c.b16 %v322, %v318
    %v383 = vpack.c.b16 %v323, %v319
    %v479 = vunpack.c.l.b16 %v94
    %v480 = vunpack.c.l.b16 %v95
    %v481 = vunpack.c.l.b16 %v96
    %v482 = vunpack.c.l.b16 %v97
    %v483 = vunpack.c.l.b16 %v98
    %v484 = vunpack.c.l.b16 %v99
    %v485 = vunpack.c.l.b16 %v100
    %v486 = vunpack.c.l.b16 %v101
    %v487 = vunpack.c.l.b16 %v102
    %v488 = vunpack.c.l.b16 %v103
    %v489 = vunpack.c.l.b16 %v104
    %v490 = vunpack.c.l.b16 %v105
    %v491 = vunpack.c.l.b16 %v106
    %v492 = vunpack.c.l.b16 %v107
    %v493 = vunpack.c.l.b16 %v108
    %v494 = vunpack.c.l.b16 %v109
    %v495 = vunpack.c.l.b16 %v110
    %v496 = vunpack.c.l.b16 %v111
    %v497 = vunpack.c.l.b16 %v112
    %v498 = vunpack.c.l.b16 %v113
    %v499 = vunpack.c.l.b16 %v114
    %v500 = vunpack.c.l.b16 %v115
    %v501 = vunpack.c.l.b16 %v116
    %v502 = vunpack.c.l.b16 %v117
    %v503 = vunpack.c.l.b16 %v118
    %v504 = vunpack.c.l.b16 %v119
    %v505 = vunpack.c.l.b16 %v120
    %v506 = vunpack.c.l.b16 %v121
    %v507 = vunpack.c.l.b16 %v122
    %v508 = vunpack.c.l.b16 %v123
    %v509 = vunpack.c.l.b16 %v124
    %v510 = vunpack.c.l.b16 %v125
    %v511 = vunpack.c.l.b16 %v126
    %v512 = vunpack.c.l.b16 %v127
    %v513 = vunpack.c.l.b16 %v128
    %v514 = vunpack.c.l.b16 %v129
    %v515 = vunpack.c.l.b16 %v130
    %v516 = vunpack.c.l.b16 %v131
    %v517 = vunpack.c.l.b16 %v132
    %v518 = vunpack.c.l.b16 %v133
    %v519 = vunpack.c.l.b16 %v134
    %v520 = vunpack.c.l.b16 %v135
    %v521 = vunpack.c.l.b16 %v136
    %v522 = vunpack.c.l.b16 %v137
    %v523 = vunpack.c.l.b16 %v138
    %v524 = vunpack.c.l.b16 %v139
    %v525 = vunpack.c.l.b16 %v140
    %v526 = vunpack.c.l.b16 %v141
    %v527 = vunpack.c.l.b16 %v142
    %v528 = vunpack.c.l.b16 %v143
    %v529 = vpack.c.b16 %v480, %v479
    %v530 = vpack.c.b16 %v482, %v481
    %v531 = vpack.c.b16 %v484, %v483
    %v532 = vpack.c.b16 %v486, %v485
    %v533 = vpack.c.b16 %v488, %v487
    %v534 = vpack.c.b16 %v490, %v489
    %v535 = vpack.c.b16 %v492, %v491
    %v536 = vpack.c.b16 %v494, %v493
    %v537 = vpack.c.b16 %v496, %v495
    %v538 = vpack.c.b16 %v498, %v497
    %v539 = vpack.c.b16 %v500, %v499
    %v540 = vpack.c.b16 %v502, %v501
    %v541 = vpack.c.b16 %v504, %v503
    %v542 = vpack.c.b16 %v506, %v505
    %v543 = vpack.c.b16 %v508, %v507
    %v544 = vpack.c.b16 %v510, %v509
    %v545 = vpack.c.b16 %v512, %v511
    %v546 = vpack.c.b16 %v514, %v513
    %v547 = vpack.c.b16 %v516, %v515
    %v548 = vpack.c.b16 %v518, %v517
    %v549 = vpack.c.b16 %v520, %v519
    %v550 = vpack.c.b16 %v522, %v521
    %v551 = vpack.c.b16 %v524, %v523
    %v552 = vpack.c.b16 %v526, %v525
    %v553 = vpack.c.b16 %v528, %v527
    %vm579 = vcmask 130048
    %v581 = vsel %vm579, %v327, 0
    %v584 = vsel %vm579, %v331, 0
    %v587 = vsel %vm579, %v335, 0
    %v590 = vsel %vm579, %v339, 0
    %v593 = vsel %vm579, %v343, 0
    %v596 = vsel %vm579, %v347, 0
    %v599 = vsel %vm579, %v351, 0
    %v602 = vsel %vm579, %v355, 0
    %v605 = vsel %vm579, %v359, 0
    %v608 = vsel %vm579, %v363, 0
    %v611 = vsel %vm579, %v367, 0
    %v614 = vsel %vm579, %v371, 0
    %v617 = vsel %vm579, %v375, 0
    %v620 = vsel %vm579, %v379, 0
    %v623 = vsel %vm579, %v383, 0
    %625 = vmatpush.bf16.msra.mxu0 %v536
    %626 = vmatpush.bf16.msra.mxu0 %v535
    %627 = vmatpush.bf16.msra.mxu0 %v534
    %628 = vmatpush.bf16.msra.mxu0 %v533
    %629 = vmatpush.bf16.msra.mxu0 %v532
    %630 = vmatpush.bf16.msra.mxu0 %v531
    %631 = vmatpush.bf16.msra.mxu0 %v530
    %632 = vmatpush.bf16.msra.mxu0 %v529
    %633 = vmatmul.bf16.gmra.mxu0 %v324
    %v634 = vpop.f32.mrf.mxu0
    %v635 = vadd.f32 0.0, %v634
    %v636 = vpop.f32.mrf.mxu0
    %v637 = vadd.f32 0.0, %v636
    %638 = vmatmul.bf16.gmra.mxu0 %v328
    %v639 = vpop.f32.mrf.mxu0
    %v640 = vadd.f32 0.0, %v639
    %v641 = vpop.f32.mrf.mxu0
    %v642 = vadd.f32 0.0, %v641
    %643 = vmatmul.bf16.gmra.mxu0 %v332
    %v644 = vpop.f32.mrf.mxu0
    %v645 = vadd.f32 0.0, %v644
    %v646 = vpop.f32.mrf.mxu0
    %v647 = vadd.f32 0.0, %v646
    %648 = vmatmul.bf16.gmra.mxu0 %v336
    %v649 = vpop.f32.mrf.mxu0
    %v650 = vadd.f32 0.0, %v649
    %v651 = vpop.f32.mrf.mxu0
    %v652 = vadd.f32 0.0, %v651
    %653 = vmatmul.bf16.gmra.mxu0 %v340
    %v654 = vpop.f32.mrf.mxu0
    %v655 = vadd.f32 0.0, %v654
    %v656 = vpop.f32.mrf.mxu0
    %v657 = vadd.f32 0.0, %v656
    %658 = vmatmul.bf16.gmra.mxu0 %v344
    %v659 = vpop.f32.mrf.mxu0
    %v660 = vadd.f32 0.0, %v659
    %v661 = vpop.f32.mrf.mxu0
    %v662 = vadd.f32 0.0, %v661
    %663 = vmatmul.bf16.gmra.mxu0 %v348
    %v664 = vpop.f32.mrf.mxu0
    %v665 = vadd.f32 0.0, %v664
    %v666 = vpop.f32.mrf.mxu0
    %v667 = vadd.f32 0.0, %v666
    %668 = vmatmul.bf16.gmra.mxu0 %v352
    %v669 = vpop.f32.mrf.mxu0
    %v670 = vadd.f32 0.0, %v669
    %v671 = vpop.f32.mrf.mxu0
    %v672 = vadd.f32 0.0, %v671
    %673 = vmatmul.bf16.gmra.mxu0 %v356
    %v674 = vpop.f32.mrf.mxu0
    %v675 = vadd.f32 0.0, %v674
    %v676 = vpop.f32.mrf.mxu0
    %v677 = vadd.f32 0.0, %v676
    %678 = vmatmul.bf16.gmra.mxu0 %v360
    %v679 = vpop.f32.mrf.mxu0
    %v680 = vadd.f32 0.0, %v679
    %v681 = vpop.f32.mrf.mxu0
    %v682 = vadd.f32 0.0, %v681
    %683 = vmatmul.bf16.gmra.mxu0 %v364
    %v684 = vpop.f32.mrf.mxu0
    %v685 = vadd.f32 0.0, %v684
    %v686 = vpop.f32.mrf.mxu0
    %v687 = vadd.f32 0.0, %v686
    %688 = vmatmul.bf16.gmra.mxu0 %v368
    %v689 = vpop.f32.mrf.mxu0
    %v690 = vadd.f32 0.0, %v689
    %v691 = vpop.f32.mrf.mxu0
    %v692 = vadd.f32 0.0, %v691
    %693 = vmatmul.bf16.gmra.mxu0 %v372
    %v694 = vpop.f32.mrf.mxu0
    %v695 = vadd.f32 0.0, %v694
    %v696 = vpop.f32.mrf.mxu0
    %v697 = vadd.f32 0.0, %v696
    %698 = vmatmul.bf16.gmra.mxu0 %v376
    %v699 = vpop.f32.mrf.mxu0
    %v700 = vadd.f32 0.0, %v699
    %v701 = vpop.f32.mrf.mxu0
    %v702 = vadd.f32 0.0, %v701
    %703 = vmatmul.bf16.gmra.mxu0 %v380
    %v704 = vpop.f32.mrf.mxu0
    %v705 = vadd.f32 0.0, %v704
    %v706 = vpop.f32.mrf.mxu0
    %v707 = vadd.f32 0.0, %v706
    %708 = vdwg.mxu0
    %709 = vmatpush.bf16.msra.mxu0 %v544
    %710 = vmatpush.bf16.msra.mxu0 %v543
    %711 = vmatpush.bf16.msra.mxu0 %v542
    %712 = vmatpush.bf16.msra.mxu0 %v541
    %713 = vmatpush.bf16.msra.mxu0 %v540
    %714 = vmatpush.bf16.msra.mxu0 %v539
    %715 = vmatpush.bf16.msra.mxu0 %v538
    %716 = vmatpush.bf16.msra.mxu0 %v537
    %717 = vmatmul.bf16.gmra.mxu0 %v325
    %v718 = vpop.f32.mrf.mxu0
    %v719 = vadd.f32 %v635, %v718
    %v720 = vpop.f32.mrf.mxu0
    %v721 = vadd.f32 %v637, %v720
    %722 = vmatmul.bf16.gmra.mxu0 %v329
    %v723 = vpop.f32.mrf.mxu0
    %v724 = vadd.f32 %v640, %v723
    %v725 = vpop.f32.mrf.mxu0
    %v726 = vadd.f32 %v642, %v725
    %727 = vmatmul.bf16.gmra.mxu0 %v333
    %v728 = vpop.f32.mrf.mxu0
    %v729 = vadd.f32 %v645, %v728
    %v730 = vpop.f32.mrf.mxu0
    %v731 = vadd.f32 %v647, %v730
    %732 = vmatmul.bf16.gmra.mxu0 %v337
    %v733 = vpop.f32.mrf.mxu0
    %v734 = vadd.f32 %v650, %v733
    %v735 = vpop.f32.mrf.mxu0
    %v736 = vadd.f32 %v652, %v735
    %737 = vmatmul.bf16.gmra.mxu0 %v341
    %v738 = vpop.f32.mrf.mxu0
    %v739 = vadd.f32 %v655, %v738
    %v740 = vpop.f32.mrf.mxu0
    %v741 = vadd.f32 %v657, %v740
    %742 = vmatmul.bf16.gmra.mxu0 %v345
    %v743 = vpop.f32.mrf.mxu0
    %v744 = vadd.f32 %v660, %v743
    %v745 = vpop.f32.mrf.mxu0
    %v746 = vadd.f32 %v662, %v745
    %747 = vmatmul.bf16.gmra.mxu0 %v349
    %v748 = vpop.f32.mrf.mxu0
    %v749 = vadd.f32 %v665, %v748
    %v750 = vpop.f32.mrf.mxu0
    %v751 = vadd.f32 %v667, %v750
    %752 = vmatmul.bf16.gmra.mxu0 %v353
    %v753 = vpop.f32.mrf.mxu0
    %v754 = vadd.f32 %v670, %v753
    %v755 = vpop.f32.mrf.mxu0
    %v756 = vadd.f32 %v672, %v755
    %757 = vmatmul.bf16.gmra.mxu0 %v357
    %v758 = vpop.f32.mrf.mxu0
    %v759 = vadd.f32 %v675, %v758
    %v760 = vpop.f32.mrf.mxu0
    %v761 = vadd.f32 %v677, %v760
    %762 = vmatmul.bf16.gmra.mxu0 %v361
    %v763 = vpop.f32.mrf.mxu0
    %v764 = vadd.f32 %v680, %v763
    %v765 = vpop.f32.mrf.mxu0
    %v766 = vadd.f32 %v682, %v765
    %767 = vmatmul.bf16.gmra.mxu0 %v365
    %v768 = vpop.f32.mrf.mxu0
    %v769 = vadd.f32 %v685, %v768
    %v770 = vpop.f32.mrf.mxu0
    %v771 = vadd.f32 %v687, %v770
    %772 = vmatmul.bf16.gmra.mxu0 %v369
    %v773 = vpop.f32.mrf.mxu0
    %v774 = vadd.f32 %v690, %v773
    %v775 = vpop.f32.mrf.mxu0
    %v776 = vadd.f32 %v692, %v775
    %777 = vmatmul.bf16.gmra.mxu0 %v373
    %v778 = vpop.f32.mrf.mxu0
    %v779 = vadd.f32 %v695, %v778
    %v780 = vpop.f32.mrf.mxu0
    %v781 = vadd.f32 %v697, %v780
    %782 = vmatmul.bf16.gmra.mxu0 %v377
    %v783 = vpop.f32.mrf.mxu0
    %v784 = vadd.f32 %v700, %v783
    %v785 = vpop.f32.mrf.mxu0
    %v786 = vadd.f32 %v702, %v785
    %787 = vmatmul.bf16.gmra.mxu0 %v381
    %v788 = vpop.f32.mrf.mxu0
    %v789 = vadd.f32 %v705, %v788
    %v790 = vpop.f32.mrf.mxu0
    %v791 = vadd.f32 %v707, %v790
    %792 = vdwg.mxu0
    %793 = vmatpush.bf16.msra.mxu0 %v552
    %794 = vmatpush.bf16.msra.mxu0 %v551
    %795 = vmatpush.bf16.msra.mxu0 %v550
    %796 = vmatpush.bf16.msra.mxu0 %v549
    %797 = vmatpush.bf16.msra.mxu0 %v548
    %798 = vmatpush.bf16.msra.mxu0 %v547
    %799 = vmatpush.bf16.msra.mxu0 %v546
    %800 = vmatpush.bf16.msra.mxu0 %v545
    %801 = vmatmul.bf16.gmra.mxu0 %v326
    %v802 = vpop.f32.mrf.mxu0
    %v803 = vadd.f32 %v719, %v802
    %v804 = vpop.f32.mrf.mxu0
    %v805 = vadd.f32 %v721, %v804
    %806 = vmatmul.bf16.gmra.mxu0 %v330
    %v807 = vpop.f32.mrf.mxu0
    %v808 = vadd.f32 %v724, %v807
    %v809 = vpop.f32.mrf.mxu0
    %v810 = vadd.f32 %v726, %v809
    %811 = vmatmul.bf16.gmra.mxu0 %v334
    %v812 = vpop.f32.mrf.mxu0
    %v813 = vadd.f32 %v729, %v812
    %v814 = vpop.f32.mrf.mxu0
    %v815 = vadd.f32 %v731, %v814
    %816 = vmatmul.bf16.gmra.mxu0 %v338
    %v817 = vpop.f32.mrf.mxu0
    %v818 = vadd.f32 %v734, %v817
    %v819 = vpop.f32.mrf.mxu0
    %v820 = vadd.f32 %v736, %v819
    %821 = vmatmul.bf16.gmra.mxu0 %v342
    %v822 = vpop.f32.mrf.mxu0
    %v823 = vadd.f32 %v739, %v822
    %v824 = vpop.f32.mrf.mxu0
    %v825 = vadd.f32 %v741, %v824
    %826 = vmatmul.bf16.gmra.mxu0 %v346
    %v827 = vpop.f32.mrf.mxu0
    %v828 = vadd.f32 %v744, %v827
    %v829 = vpop.f32.mrf.mxu0
    %v830 = vadd.f32 %v746, %v829
    %831 = vmatmul.bf16.gmra.mxu0 %v350
    %v832 = vpop.f32.mrf.mxu0
    %v833 = vadd.f32 %v749, %v832
    %v834 = vpop.f32.mrf.mxu0
    %v835 = vadd.f32 %v751, %v834
    %836 = vmatmul.bf16.gmra.mxu0 %v354
    %v837 = vpop.f32.mrf.mxu0
    %v838 = vadd.f32 %v754, %v837
    %v839 = vpop.f32.mrf.mxu0
    %v840 = vadd.f32 %v756, %v839
    %841 = vmatmul.bf16.gmra.mxu0 %v358
    %v842 = vpop.f32.mrf.mxu0
    %v843 = vadd.f32 %v759, %v842
    %v844 = vpop.f32.mrf.mxu0
    %v845 = vadd.f32 %v761, %v844
    %846 = vmatmul.bf16.gmra.mxu0 %v362
    %v847 = vpop.f32.mrf.mxu0
    %v848 = vadd.f32 %v764, %v847
    %v849 = vpop.f32.mrf.mxu0
    %v850 = vadd.f32 %v766, %v849
    %851 = vmatmul.bf16.gmra.mxu0 %v366
    %v852 = vpop.f32.mrf.mxu0
    %v853 = vadd.f32 %v769, %v852
    %v854 = vpop.f32.mrf.mxu0
    %v855 = vadd.f32 %v771, %v854
    %856 = vmatmul.bf16.gmra.mxu0 %v370
    %v857 = vpop.f32.mrf.mxu0
    %v858 = vadd.f32 %v774, %v857
    %v859 = vpop.f32.mrf.mxu0
    %v860 = vadd.f32 %v776, %v859
    %861 = vmatmul.bf16.gmra.mxu0 %v374
    %v862 = vpop.f32.mrf.mxu0
    %v863 = vadd.f32 %v779, %v862
    %v864 = vpop.f32.mrf.mxu0
    %v865 = vadd.f32 %v781, %v864
    %866 = vmatmul.bf16.gmra.mxu0 %v378
    %v867 = vpop.f32.mrf.mxu0
    %v868 = vadd.f32 %v784, %v867
    %v869 = vpop.f32.mrf.mxu0
    %v870 = vadd.f32 %v786, %v869
    %871 = vmatmul.bf16.gmra.mxu0 %v382
    %v872 = vpop.f32.mrf.mxu0
    %v873 = vadd.f32 %v789, %v872
    %v874 = vpop.f32.mrf.mxu0
    %v875 = vadd.f32 %v791, %v874
    %876 = vdwg.mxu0
    %877 = vmatpush.bf16.msra.mxu0 0
    %878 = vmatpush.bf16.msra.mxu0 0
    %879 = vmatpush.bf16.msra.mxu0 0
    %880 = vmatpush.bf16.msra.mxu0 0
    %881 = vmatpush.bf16.msra.mxu0 0
    %882 = vmatpush.bf16.msra.mxu0 0
    %883 = vmatpush.bf16.msra.mxu0 0
    %884 = vmatpush.bf16.msra.mxu0 %v553
    %885 = vmatmul.bf16.gmra.mxu0 %v581
    %v886 = vpop.f32.mrf.mxu0
    %v887 = vadd.f32 %v803, %v886
    %v888 = vpop.f32.mrf.mxu0
    %v889 = vadd.f32 %v805, %v888
    %890 = vmatmul.bf16.gmra.mxu0 %v584
    %v891 = vpop.f32.mrf.mxu0
    %v892 = vadd.f32 %v808, %v891
    %v893 = vpop.f32.mrf.mxu0
    %v894 = vadd.f32 %v810, %v893
    %895 = vmatmul.bf16.gmra.mxu0 %v587
    %v896 = vpop.f32.mrf.mxu0
    %v897 = vadd.f32 %v813, %v896
    %v898 = vpop.f32.mrf.mxu0
    %v899 = vadd.f32 %v815, %v898
    %900 = vmatmul.bf16.gmra.mxu0 %v590
    %v901 = vpop.f32.mrf.mxu0
    %v902 = vadd.f32 %v818, %v901
    %v903 = vpop.f32.mrf.mxu0
    %v904 = vadd.f32 %v820, %v903
    %905 = vmatmul.bf16.gmra.mxu0 %v593
    %v906 = vpop.f32.mrf.mxu0
    %v907 = vadd.f32 %v823, %v906
    %v908 = vpop.f32.mrf.mxu0
    %v909 = vadd.f32 %v825, %v908
    %910 = vmatmul.bf16.gmra.mxu0 %v596
    %v911 = vpop.f32.mrf.mxu0
    %v912 = vadd.f32 %v828, %v911
    %v913 = vpop.f32.mrf.mxu0
    %v914 = vadd.f32 %v830, %v913
    %915 = vmatmul.bf16.gmra.mxu0 %v599
    %v916 = vpop.f32.mrf.mxu0
    %v917 = vadd.f32 %v833, %v916
    %v918 = vpop.f32.mrf.mxu0
    %v919 = vadd.f32 %v835, %v918
    %920 = vmatmul.bf16.gmra.mxu0 %v602
    %v921 = vpop.f32.mrf.mxu0
    %v922 = vadd.f32 %v838, %v921
    %v923 = vpop.f32.mrf.mxu0
    %v924 = vadd.f32 %v840, %v923
    %925 = vmatmul.bf16.gmra.mxu0 %v605
    %v926 = vpop.f32.mrf.mxu0
    %v927 = vadd.f32 %v843, %v926
    %v928 = vpop.f32.mrf.mxu0
    %v929 = vadd.f32 %v845, %v928
    %930 = vmatmul.bf16.gmra.mxu0 %v608
    %v931 = vpop.f32.mrf.mxu0
    %v932 = vadd.f32 %v848, %v931
    %v933 = vpop.f32.mrf.mxu0
    %v934 = vadd.f32 %v850, %v933
    %935 = vmatmul.bf16.gmra.mxu0 %v611
    %v936 = vpop.f32.mrf.mxu0
    %v937 = vadd.f32 %v853, %v936
    %v938 = vpop.f32.mrf.mxu0
    %v939 = vadd.f32 %v855, %v938
    %940 = vmatmul.bf16.gmra.mxu0 %v614
    %v941 = vpop.f32.mrf.mxu0
    %v942 = vadd.f32 %v858, %v941
    %v943 = vpop.f32.mrf.mxu0
    %v944 = vadd.f32 %v860, %v943
    %945 = vmatmul.bf16.gmra.mxu0 %v617
    %v946 = vpop.f32.mrf.mxu0
    %v947 = vadd.f32 %v863, %v946
    %v948 = vpop.f32.mrf.mxu0
    %v949 = vadd.f32 %v865, %v948
    %950 = vmatmul.bf16.gmra.mxu0 %v620
    %v951 = vpop.f32.mrf.mxu0
    %v952 = vadd.f32 %v868, %v951
    %v953 = vpop.f32.mrf.mxu0
    %v954 = vadd.f32 %v870, %v953
    %955 = vmatmul.bf16.gmra.mxu0 %v623
    %v956 = vpop.f32.mrf.mxu0
    %v957 = vadd.f32 %v873, %v956
    %v958 = vpop.f32.mrf.mxu0
    %v959 = vadd.f32 %v875, %v958
    %960 = vdwg.mxu0
    %v961 = vld [vmem:[%s2] sm:$0x1]
    %v963 = vperm.slane %v961, 0
    %v965 = vmul.f32 %v887, %v963
    %v966 = vmul.f32 %v889, %v963
    %v967 = vmul.f32 %v892, %v963
    %v968 = vmul.f32 %v894, %v963
    %v969 = vmul.f32 %v897, %v963
    %v970 = vmul.f32 %v899, %v963
    %v971 = vmul.f32 %v902, %v963
    %v972 = vmul.f32 %v904, %v963
    %v973 = vmul.f32 %v907, %v963
    %v974 = vmul.f32 %v909, %v963
    %v975 = vmul.f32 %v912, %v963
    %v976 = vmul.f32 %v914, %v963
    %v977 = vmul.f32 %v917, %v963
    %v978 = vmul.f32 %v919, %v963
    %v979 = vmul.f32 %v922, %v963
    %v980 = vmul.f32 %v924, %v963
    %v981 = vmul.f32 %v927, %v963
    %v982 = vmul.f32 %v929, %v963
    %v983 = vmul.f32 %v932, %v963
    %v984 = vmul.f32 %v934, %v963
    %v985 = vmul.f32 %v937, %v963
    %v986 = vmul.f32 %v939, %v963
    %v987 = vmul.f32 %v942, %v963
    %v988 = vmul.f32 %v944, %v963
    %v989 = vmul.f32 %v947, %v963
    %v990 = vmul.f32 %v949, %v963
    %v991 = vmul.f32 %v952, %v963
    %v992 = vmul.f32 %v954, %v963
    %v993 = vmul.f32 %v957, %v963
    %v994 = vmul.f32 %v959, %v963
    %v995 = vld [vmem:[%s3] sm:$0x1]
    %v997 = vperm.slane %v995, 0
    %v999 = vadd.f32 %v965, %v997
    %v1000 = vadd.f32 %v966, %v997
    %v1001 = vadd.f32 %v967, %v997
    %v1002 = vadd.f32 %v968, %v997
    %v1003 = vadd.f32 %v969, %v997
    %v1004 = vadd.f32 %v970, %v997
    %v1005 = vadd.f32 %v971, %v997
    %v1006 = vadd.f32 %v972, %v997
    %v1007 = vadd.f32 %v973, %v997
    %v1008 = vadd.f32 %v974, %v997
    %v1009 = vadd.f32 %v975, %v997
    %v1010 = vadd.f32 %v976, %v997
    %v1011 = vadd.f32 %v977, %v997
    %v1012 = vadd.f32 %v978, %v997
    %v1013 = vadd.f32 %v979, %v997
    %v1014 = vadd.f32 %v980, %v997
    %v1015 = vadd.f32 %v981, %v997
    %v1016 = vadd.f32 %v982, %v997
    %v1017 = vadd.f32 %v983, %v997
    %v1018 = vadd.f32 %v984, %v997
    %v1019 = vadd.f32 %v985, %v997
    %v1020 = vadd.f32 %v986, %v997
    %v1021 = vadd.f32 %v987, %v997
    %v1022 = vadd.f32 %v988, %v997
    %v1023 = vadd.f32 %v989, %v997
    %v1024 = vadd.f32 %v990, %v997
    %v1025 = vadd.f32 %v991, %v997
    %v1026 = vadd.f32 %v992, %v997
    %v1027 = vadd.f32 %v993, %v997
    %v1028 = vadd.f32 %v994, %v997
    %v1029 = vmax.f32 %v999, 0.0
    %v1030 = vmax.f32 %v1000, 0.0
    %v1031 = vmax.f32 %v1001, 0.0
    %v1032 = vmax.f32 %v1002, 0.0
    %v1033 = vmax.f32 %v1003, 0.0
    %v1034 = vmax.f32 %v1004, 0.0
    %v1035 = vmax.f32 %v1005, 0.0
    %v1036 = vmax.f32 %v1006, 0.0
    %v1037 = vmax.f32 %v1007, 0.0
    %v1038 = vmax.f32 %v1008, 0.0
    %v1039 = vmax.f32 %v1009, 0.0
    %v1040 = vmax.f32 %v1010, 0.0
    %v1041 = vmax.f32 %v1011, 0.0
    %v1042 = vmax.f32 %v1012, 0.0
    %v1043 = vmax.f32 %v1013, 0.0
    %v1044 = vmax.f32 %v1014, 0.0
    %v1045 = vmax.f32 %v1015, 0.0
    %v1046 = vmax.f32 %v1016, 0.0
    %v1047 = vmax.f32 %v1017, 0.0
    %v1048 = vmax.f32 %v1018, 0.0
    %v1049 = vmax.f32 %v1019, 0.0
    %v1050 = vmax.f32 %v1020, 0.0
    %v1051 = vmax.f32 %v1021, 0.0
    %v1052 = vmax.f32 %v1022, 0.0
    %v1053 = vmax.f32 %v1023, 0.0
    %v1054 = vmax.f32 %v1024, 0.0
    %v1055 = vmax.f32 %v1025, 0.0
    %v1056 = vmax.f32 %v1026, 0.0
    %v1057 = vmax.f32 %v1027, 0.0
    %v1058 = vmax.f32 %v1028, 0.0
    %vm1059 = vcmask 261120
    %1060 = vst.msk [vmem:[#allocation2] sm:$0xff] %vm1059, %v1029
    %1061 = vst.msk [vmem:[#allocation2 + $0x8] sm:$0xff] %vm1059, %v1030
    %1062 = vst.msk [vmem:[#allocation2 + $0x10] sm:$0xff] %vm1059, %v1031
    %1063 = vst.msk [vmem:[#allocation2 + $0x18] sm:$0xff] %vm1059, %v1032
    %1064 = vst.msk [vmem:[#allocation2 + $0x20] sm:$0xff] %vm1059, %v1033
    %1065 = vst.msk [vmem:[#allocation2 + $0x28] sm:$0xff] %vm1059, %v1034
    %1066 = vst.msk [vmem:[#allocation2 + $0x30] sm:$0xff] %vm1059, %v1035
    %1067 = vst.msk [vmem:[#allocation2 + $0x38] sm:$0xff] %vm1059, %v1036
    %1068 = vst.msk [vmem:[#allocation2 + $0x40] sm:$0xff] %vm1059, %v1037
    %1069 = vst.msk [vmem:[#allocation2 + $0x48] sm:$0xff] %vm1059, %v1038
    %1070 = vst.msk [vmem:[#allocation2 + $0x50] sm:$0xff] %vm1059, %v1039
    %1071 = vst.msk [vmem:[#allocation2 + $0x58] sm:$0xff] %vm1059, %v1040
    %1072 = vst.msk [vmem:[#allocation2 + $0x60] sm:$0xff] %vm1059, %v1041
    %1073 = vst.msk [vmem:[#allocation2 + $0x68] sm:$0xff] %vm1059, %v1042
    %1074 = vst.msk [vmem:[#allocation2 + $0x70] sm:$0xff] %vm1059, %v1043
    %1075 = vst.msk [vmem:[#allocation2 + $0x78] sm:$0xff] %vm1059, %v1044
    %1076 = vst.msk [vmem:[#allocation2 + $0x80] sm:$0xff] %vm1059, %v1045
    %1077 = vst.msk [vmem:[#allocation2 + $0x88] sm:$0xff] %vm1059, %v1046
    %1078 = vst.msk [vmem:[#allocation2 + $0x90] sm:$0xff] %vm1059, %v1047
    %1079 = vst.msk [vmem:[#allocation2 + $0x98] sm:$0xff] %vm1059, %v1048
    %1080 = vst.msk [vmem:[#allocation2 + $0xa0] sm:$0xff] %vm1059, %v1049
    %1081 = vst.msk [vmem:[#allocation2 + $0xa8] sm:$0xff] %vm1059, %v1050
    %1082 = vst.msk [vmem:[#allocation2 + $0xb0] sm:$0xff] %vm1059, %v1051
    %1083 = vst.msk [vmem:[#allocation2 + $0xb8] sm:$0xff] %vm1059, %v1052
    %1084 = vst.msk [vmem:[#allocation2 + $0xc0] sm:$0xff] %vm1059, %v1053
    %1085 = vst.msk [vmem:[#allocation2 + $0xc8] sm:$0xff] %vm1059, %v1054
    %1086 = vst.msk [vmem:[#allocation2 + $0xd0] sm:$0xff] %vm1059, %v1055
    %1087 = vst.msk [vmem:[#allocation2 + $0xd8] sm:$0xff] %vm1059, %v1056
    %1088 = vst.msk [vmem:[#allocation2 + $0xe0] sm:$0xff] %vm1059, %v1057
    %vm1089 = vcmask 259072
    %1090 = vst.msk [vmem:[#allocation2 + $0xe8] sm:$0x3f] %vm1089, %v1058
    %v1091 = vld [vmem:[#allocation2] ss:$2 sm:$0x7f]
    %s1092 = scalar_lea.vmem [#allocation2], 1
    %v1093 = vld [vmem:[%s1092] ss:$2 sm:$0x7f]
    %s1094 = scalar_lea.vmem [#allocation2], 2
    %v1095 = vld [vmem:[%s1094] ss:$2 sm:$0x7f]
    %s1096 = scalar_lea.vmem [#allocation2], 3
    %v1097 = vld [vmem:[%s1096] ss:$2 sm:$0x7f]
    %s1098 = scalar_lea.vmem [#allocation2], 4
    %v1099 = vld [vmem:[%s1098] ss:$2 sm:$0x7f]
    %s1100 = scalar_lea.vmem [#allocation2], 17
    %v1101 = vld [vmem:[%s1100] ss:$2 sm:$0x7f]
    %s1102 = scalar_lea.vmem [#allocation2], 18
    %v1103 = vld [vmem:[%s1102] ss:$2 sm:$0x7f]
    %s1104 = scalar_lea.vmem [#allocation2], 19
    %v1105 = vld [vmem:[%s1104] ss:$2 sm:$0x7f]
    %s1106 = scalar_lea.vmem [#allocation2], 20
    %v1107 = vld [vmem:[%s1106] ss:$2 sm:$0x7f]
    %s1108 = scalar_lea.vmem [#allocation2], 21
    %v1109 = vld [vmem:[%s1108] ss:$2 sm:$0x7f]
    %s1110 = scalar_lea.vmem [#allocation2], 34
    %v1111 = vld [vmem:[%s1110] ss:$2 sm:$0x7f]
    %s1112 = scalar_lea.vmem [#allocation2], 35
    %v1113 = vld [vmem:[%s1112] ss:$2 sm:$0x7f]
    %s1114 = scalar_lea.vmem [#allocation2], 36
    %v1115 = vld [vmem:[%s1114] ss:$2 sm:$0x7f]
    %s1116 = scalar_lea.vmem [#allocation2], 37
    %v1117 = vld [vmem:[%s1116] ss:$2 sm:$0x7f]
    %s1118 = scalar_lea.vmem [#allocation2], 38
    %v1119 = vld [vmem:[%s1118] ss:$2 sm:$0x7f]
    %s1120 = scalar_lea.vmem [#allocation2], 51
    %v1121 = vld [vmem:[%s1120] ss:$2 sm:$0x7f]
    %s1122 = scalar_lea.vmem [#allocation2], 52
    %v1123 = vld [vmem:[%s1122] ss:$2 sm:$0x7f]
    %s1124 = scalar_lea.vmem [#allocation2], 53
    %v1125 = vld [vmem:[%s1124] ss:$2 sm:$0x7f]
    %s1126 = scalar_lea.vmem [#allocation2], 54
    %v1127 = vld [vmem:[%s1126] ss:$2 sm:$0x7f]
    %s1128 = scalar_lea.vmem [#allocation2], 55
    %v1129 = vld [vmem:[%s1128] ss:$2 sm:$0x7f]
    %s1130 = scalar_lea.vmem [#allocation2], 68
    %v1131 = vld [vmem:[%s1130] ss:$2 sm:$0x7f]
    %s1132 = scalar_lea.vmem [#allocation2], 69
    %v1133 = vld [vmem:[%s1132] ss:$2 sm:$0x7f]
    %s1134 = scalar_lea.vmem [#allocation2], 70
    %v1135 = vld [vmem:[%s1134] ss:$2 sm:$0x7f]
    %s1136 = scalar_lea.vmem [#allocation2], 71
    %v1137 = vld [vmem:[%s1136] ss:$2 sm:$0x7f]
    %s1138 = scalar_lea.vmem [#allocation2], 72
    %v1139 = vld [vmem:[%s1138] ss:$2 sm:$0x7f]
    %1141 = vrot.lane.b32.xlu0 %v1093, 32
    %v1142 = vpop.permute.xlu0 %1141
    %1145 = vrot.lane.b32.xlu0 %v1095, 64
    %v1146 = vpop.permute.xlu0 %1145
    %1149 = vrot.lane.b32.xlu0 %v1097, 96
    %v1150 = vpop.permute.xlu0 %1149
    %1153 = vrot.lane.b32.xlu0 %v1101, 32
    %v1154 = vpop.permute.xlu0 %1153
    %1157 = vrot.lane.b32.xlu0 %v1103, 64
    %v1158 = vpop.permute.xlu0 %1157
    %1161 = vrot.lane.b32.xlu0 %v1105, 96
    %v1162 = vpop.permute.xlu0 %1161
    %1165 = vrot.lane.b32.xlu0 %v1109, 32
    %v1166 = vpop.permute.xlu0 %1165
    %1169 = vrot.lane.b32.xlu0 %v1111, 64
    %v1170 = vpop.permute.xlu0 %1169
    %1173 = vrot.lane.b32.xlu0 %v1113, 96
    %v1174 = vpop.permute.xlu0 %1173
    %1177 = vrot.lane.b32.xlu0 %v1117, 32
    %v1178 = vpop.permute.xlu0 %1177
    %1181 = vrot.lane.b32.xlu0 %v1119, 64
    %v1182 = vpop.permute.xlu0 %1181
    %1185 = vrot.lane.b32.xlu0 %v1121, 96
    %v1186 = vpop.permute.xlu0 %1185
    %v1188 = vsel %vm1059, %v1091, %v1142
    %vm1189 = vcmask 523264
    %v1190 = vsel %vm1189, %v1188, %v1146
    %vm1191 = vcmask 785408
    %v1192 = vsel %vm1191, %v1190, %v1150
    %v1193 = vsel %vm1059, %v1099, %v1154
    %v1194 = vsel %vm1189, %v1193, %v1158
    %v1195 = vsel %vm1191, %v1194, %v1162
    %v1196 = vsel %vm1059, %v1107, %v1166
    %v1197 = vsel %vm1189, %v1196, %v1170
    %v1198 = vsel %vm1191, %v1197, %v1174
    %v1199 = vsel %vm1059, %v1115, %v1178
    %v1200 = vsel %vm1189, %v1199, %v1182
    %v1201 = vsel %vm1191, %v1200, %v1186
    %1203 = vrot.lane.b32.xlu0 %v1125, 32
    %v1204 = vpop.permute.xlu0 %1203
    %1207 = vrot.lane.b32.xlu0 %v1127, 64
    %v1208 = vpop.permute.xlu0 %1207
    %1211 = vrot.lane.b32.xlu0 %v1129, 96
    %v1212 = vpop.permute.xlu0 %1211
    %1215 = vrot.lane.b32.xlu0 %v1133, 32
    %v1216 = vpop.permute.xlu0 %1215
    %1219 = vrot.lane.b32.xlu0 %v1135, 64
    %v1220 = vpop.permute.xlu0 %1219
    %1223 = vrot.lane.b32.xlu0 %v1137, 96
    %v1224 = vpop.permute.xlu0 %1223
    %v1226 = vsel %vm1059, %v1123, %v1204
    %v1227 = vsel %vm1189, %v1226, %v1208
    %v1228 = vsel %vm1191, %v1227, %v1212
    %v1229 = vsel %vm1059, %v1131, %v1216
    %v1230 = vsel %vm1189, %v1229, %v1220
    %v1231 = vsel %vm1191, %v1230, %v1224
    %s1232 = scalar_lea.vmem [#allocation2], 85
    %v1233 = vld [vmem:[%s1232] ss:$2 sm:$0x7f]
    %s1234 = scalar_lea.vmem [#allocation2], 86
    %v1235 = vld [vmem:[%s1234] ss:$2 sm:$0x7f]
    %s1236 = scalar_lea.vmem [#allocation2], 87
    %v1237 = vld [vmem:[%s1236] ss:$2 sm:$0x7f]
    %s1238 = scalar_lea.vmem [#allocation2], 88
    %v1239 = vld [vmem:[%s1238] ss:$2 sm:$0x7f]
    %s1240 = scalar_lea.vmem [#allocation2], 89
    %v1241 = vld [vmem:[%s1240] ss:$2 sm:$0x7f]
    %s1242 = scalar_lea.vmem [#allocation2], 102
    %v1243 = vld [vmem:[%s1242] ss:$2 sm:$0x7f]
    %s1244 = scalar_lea.vmem [#allocation2], 103
    %v1245 = vld [vmem:[%s1244] ss:$2 sm:$0x7f]
    %s1246 = scalar_lea.vmem [#allocation2], 104
    %v1247 = vld [vmem:[%s1246] ss:$2 sm:$0x7f]
    %s1248 = scalar_lea.vmem [#allocation2], 105
    %v1249 = vld [vmem:[%s1248] ss:$2 sm:$0x7f]
    %s1250 = scalar_lea.vmem [#allocation2], 106
    %v1251 = vld [vmem:[%s1250] ss:$2 sm:$0x7f]
    %1252 = vrot.lane.b32.xlu0 %v1113, 32
    %v1253 = vpop.permute.xlu0 %1252
    %1256 = vrot.lane.b32.xlu0 %v1115, 64
    %v1257 = vpop.permute.xlu0 %1256
    %1259 = vrot.lane.b32.xlu0 %v1117, 96
    %v1260 = vpop.permute.xlu0 %1259
    %1262 = vrot.lane.b32.xlu0 %v1121, 32
    %v1263 = vpop.permute.xlu0 %1262
    %1266 = vrot.lane.b32.xlu0 %v1123, 64
    %v1267 = vpop.permute.xlu0 %1266
    %1269 = vrot.lane.b32.xlu0 %v1125, 96
    %v1270 = vpop.permute.xlu0 %1269
    %1272 = vrot.lane.b32.xlu0 %v1129, 32
    %v1273 = vpop.permute.xlu0 %1272
    %1276 = vrot.lane.b32.xlu0 %v1131, 64
    %v1277 = vpop.permute.xlu0 %1276
    %1279 = vrot.lane.b32.xlu0 %v1133, 96
    %v1280 = vpop.permute.xlu0 %1279
    %1282 = vrot.lane.b32.xlu0 %v1137, 32
    %v1283 = vpop.permute.xlu0 %1282
    %1286 = vrot.lane.b32.xlu0 %v1139, 64
    %v1287 = vpop.permute.xlu0 %1286
    %1290 = vrot.lane.b32.xlu0 %v1233, 96
    %v1291 = vpop.permute.xlu0 %1290
    %v1293 = vsel %vm1059, %v1111, %v1253
    %v1294 = vsel %vm1189, %v1293, %v1257
    %v1295 = vsel %vm1191, %v1294, %v1260
    %v1296 = vsel %vm1059, %v1119, %v1263
    %v1297 = vsel %vm1189, %v1296, %v1267
    %v1298 = vsel %vm1191, %v1297, %v1270
    %v1299 = vsel %vm1059, %v1127, %v1273
    %v1300 = vsel %vm1189, %v1299, %v1277
    %v1301 = vsel %vm1191, %v1300, %v1280
    %v1302 = vsel %vm1059, %v1135, %v1283
    %v1303 = vsel %vm1189, %v1302, %v1287
    %v1304 = vsel %vm1191, %v1303, %v1291
    %1306 = vrot.lane.b32.xlu0 %v1237, 32
    %v1307 = vpop.permute.xlu0 %1306
    %1310 = vrot.lane.b32.xlu0 %v1239, 64
    %v1311 = vpop.permute.xlu0 %1310
    %1314 = vrot.lane.b32.xlu0 %v1241, 96
    %v1315 = vpop.permute.xlu0 %1314
    %1318 = vrot.lane.b32.xlu0 %v1245, 32
    %v1319 = vpop.permute.xlu0 %1318
    %1322 = vrot.lane.b32.xlu0 %v1247, 64
    %v1323 = vpop.permute.xlu0 %1322
    %1326 = vrot.lane.b32.xlu0 %v1249, 96
    %v1327 = vpop.permute.xlu0 %1326
    %v1329 = vsel %vm1059, %v1235, %v1307
    %v1330 = vsel %vm1189, %v1329, %v1311
    %v1331 = vsel %vm1191, %v1330, %v1315
    %v1332 = vsel %vm1059, %v1243, %v1319
    %v1333 = vsel %vm1189, %v1332, %v1323
    %v1334 = vsel %vm1191, %v1333, %v1327
    %s1335 = scalar_lea.vmem [#allocation2], 119
    %v1336 = vld [vmem:[%s1335] ss:$2 sm:$0x7f]
    %s1337 = scalar_lea.vmem [#allocation2], 120
    %v1338 = vld [vmem:[%s1337] ss:$2 sm:$0x7f]
    %s1339 = scalar_lea.vmem [#allocation2], 121
    %v1340 = vld [vmem:[%s1339] ss:$2 sm:$0x7f]
    %s1341 = scalar_lea.vmem [#allocation2], 122
    %v1342 = vld [vmem:[%s1341] ss:$2 sm:$0x7f]
    %s1343 = scalar_lea.vmem [#allocation2], 123
    %v1344 = vld [vmem:[%s1343] ss:$2 sm:$0x7f]
    %s1345 = scalar_lea.vmem [#allocation2], 136
    %v1346 = vld [vmem:[%s1345] ss:$2 sm:$0x7f]
    %s1347 = scalar_lea.vmem [#allocation2], 137
    %v1348 = vld [vmem:[%s1347] ss:$2 sm:$0x7f]
    %s1349 = scalar_lea.vmem [#allocation2], 138
    %v1350 = vld [vmem:[%s1349] ss:$2 sm:$0x7f]
    %s1351 = scalar_lea.vmem [#allocation2], 139
    %v1352 = vld [vmem:[%s1351] ss:$2 sm:$0x7f]
    %s1353 = scalar_lea.vmem [#allocation2], 140
    %v1354 = vld [vmem:[%s1353] ss:$2 sm:$0x7f]
    %s1355 = scalar_lea.vmem [#allocation2], 153
    %v1356 = vld [vmem:[%s1355] ss:$2 sm:$0x7f]
    %s1357 = scalar_lea.vmem [#allocation2], 154
    %v1358 = vld [vmem:[%s1357] ss:$2 sm:$0x7f]
    %s1359 = scalar_lea.vmem [#allocation2], 155
    %v1360 = vld [vmem:[%s1359] ss:$2 sm:$0x7f]
    %s1361 = scalar_lea.vmem [#allocation2], 156
    %v1362 = vld [vmem:[%s1361] ss:$2 sm:$0x7f]
    %s1363 = scalar_lea.vmem [#allocation2], 157
    %v1364 = vld [vmem:[%s1363] ss:$2 sm:$0x7f]
    %s1365 = scalar_lea.vmem [#allocation2], 170
    %v1366 = vld [vmem:[%s1365] ss:$2 sm:$0x7f]
    %s1367 = scalar_lea.vmem [#allocation2], 171
    %v1368 = vld [vmem:[%s1367] ss:$2 sm:$0x7f]
    %s1369 = scalar_lea.vmem [#allocation2], 172
    %v1370 = vld [vmem:[%s1369] ss:$2 sm:$0x7f]
    %s1371 = scalar_lea.vmem [#allocation2], 173
    %v1372 = vld [vmem:[%s1371] ss:$2 sm:$0x7f]
    %s1373 = scalar_lea.vmem [#allocation2], 174
    %v1374 = vld [vmem:[%s1373] ss:$2 sm:$0x7f]
    %s1375 = scalar_lea.vmem [#allocation2], 187
    %v1376 = vld [vmem:[%s1375] ss:$2 sm:$0x7f]
    %s1377 = scalar_lea.vmem [#allocation2], 188
    %v1378 = vld [vmem:[%s1377] ss:$2 sm:$0x7f]
    %s1379 = scalar_lea.vmem [#allocation2], 189
    %v1380 = vld [vmem:[%s1379] ss:$2 sm:$0x7f]
    %s1381 = scalar_lea.vmem [#allocation2], 190
    %v1382 = vld [vmem:[%s1381] ss:$2 sm:$0x7f]
    %s1383 = scalar_lea.vmem [#allocation2], 191
    %v1384 = vld [vmem:[%s1383] ss:$2 sm:$0x7f]
    %1386 = vrot.lane.b32.xlu0 %v1338, 32
    %v1387 = vpop.permute.xlu0 %1386
    %1390 = vrot.lane.b32.xlu0 %v1340, 64
    %v1391 = vpop.permute.xlu0 %1390
    %1394 = vrot.lane.b32.xlu0 %v1342, 96
    %v1395 = vpop.permute.xlu0 %1394
    %1398 = vrot.lane.b32.xlu0 %v1346, 32
    %v1399 = vpop.permute.xlu0 %1398
    %1402 = vrot.lane.b32.xlu0 %v1348, 64
    %v1403 = vpop.permute.xlu0 %1402
    %1406 = vrot.lane.b32.xlu0 %v1350, 96
    %v1407 = vpop.permute.xlu0 %1406
    %1410 = vrot.lane.b32.xlu0 %v1354, 32
    %v1411 = vpop.permute.xlu0 %1410
    %1414 = vrot.lane.b32.xlu0 %v1356, 64
    %v1415 = vpop.permute.xlu0 %1414
    %1418 = vrot.lane.b32.xlu0 %v1358, 96
    %v1419 = vpop.permute.xlu0 %1418
    %1422 = vrot.lane.b32.xlu0 %v1362, 32
    %v1423 = vpop.permute.xlu0 %1422
    %1426 = vrot.lane.b32.xlu0 %v1364, 64
    %v1427 = vpop.permute.xlu0 %1426
    %1430 = vrot.lane.b32.xlu0 %v1366, 96
    %v1431 = vpop.permute.xlu0 %1430
    %v1433 = vsel %vm1059, %v1336, %v1387
    %v1434 = vsel %vm1189, %v1433, %v1391
    %v1435 = vsel %vm1191, %v1434, %v1395
    %v1436 = vsel %vm1059, %v1344, %v1399
    %v1437 = vsel %vm1189, %v1436, %v1403
    %v1438 = vsel %vm1191, %v1437, %v1407
    %v1439 = vsel %vm1059, %v1352, %v1411
    %v1440 = vsel %vm1189, %v1439, %v1415
    %v1441 = vsel %vm1191, %v1440, %v1419
    %v1442 = vsel %vm1059, %v1360, %v1423
    %v1443 = vsel %vm1189, %v1442, %v1427
    %v1444 = vsel %vm1191, %v1443, %v1431
    %1446 = vrot.lane.b32.xlu0 %v1370, 32
    %v1447 = vpop.permute.xlu0 %1446
    %1450 = vrot.lane.b32.xlu0 %v1372, 64
    %v1451 = vpop.permute.xlu0 %1450
    %1454 = vrot.lane.b32.xlu0 %v1374, 96
    %v1455 = vpop.permute.xlu0 %1454
    %1458 = vrot.lane.b32.xlu0 %v1378, 32
    %v1459 = vpop.permute.xlu0 %1458
    %1462 = vrot.lane.b32.xlu0 %v1380, 64
    %v1463 = vpop.permute.xlu0 %1462
    %1466 = vrot.lane.b32.xlu0 %v1382, 96
    %v1467 = vpop.permute.xlu0 %1466
    %v1469 = vsel %vm1059, %v1368, %v1447
    %v1470 = vsel %vm1189, %v1469, %v1451
    %v1471 = vsel %vm1191, %v1470, %v1455
    %v1472 = vsel %vm1059, %v1376, %v1459
    %v1473 = vsel %vm1189, %v1472, %v1463
    %v1474 = vsel %vm1191, %v1473, %v1467
    %s1475 = scalar_lea.vmem [#allocation2], 204
    %v1476 = vld [vmem:[%s1475] ss:$2 sm:$0x7f]
    %s1477 = scalar_lea.vmem [#allocation2], 205
    %v1478 = vld [vmem:[%s1477] ss:$2 sm:$0x7f]
    %s1479 = scalar_lea.vmem [#allocation2], 206
    %v1480 = vld [vmem:[%s1479] ss:$2 sm:$0x7f]
    %s1481 = scalar_lea.vmem [#allocation2], 207
    %v1482 = vld [vmem:[%s1481] ss:$2 sm:$0x7f]
    %s1483 = scalar_lea.vmem [#allocation2], 208
    %v1484 = vld [vmem:[%s1483] ss:$2 sm:$0x7f]
    %s1485 = scalar_lea.vmem [#allocation2], 221
    %v1486 = vld [vmem:[%s1485] ss:$2 sm:$0x7f]
    %s1487 = scalar_lea.vmem [#allocation2], 222
    %v1488 = vld [vmem:[%s1487] ss:$2 sm:$0x7f]
    %s1489 = scalar_lea.vmem [#allocation2], 223
    %v1490 = vld [vmem:[%s1489] ss:$2 sm:$0x7f]
    %s1491 = scalar_lea.vmem [#allocation2], 224
    %v1492 = vld [vmem:[%s1491] ss:$2 sm:$0x7f]
    %s1493 = scalar_lea.vmem [#allocation2], 225
    %v1494 = vld [vmem:[%s1493] ss:$2 sm:$0x7f]
    %1495 = vrot.lane.b32.xlu0 %v1358, 32
    %v1496 = vpop.permute.xlu0 %1495
    %1499 = vrot.lane.b32.xlu0 %v1360, 64
    %v1500 = vpop.permute.xlu0 %1499
    %1502 = vrot.lane.b32.xlu0 %v1362, 96
    %v1503 = vpop.permute.xlu0 %1502
    %1505 = vrot.lane.b32.xlu0 %v1366, 32
    %v1506 = vpop.permute.xlu0 %1505
    %1509 = vrot.lane.b32.xlu0 %v1368, 64
    %v1510 = vpop.permute.xlu0 %1509
    %1512 = vrot.lane.b32.xlu0 %v1370, 96
    %v1513 = vpop.permute.xlu0 %1512
    %1515 = vrot.lane.b32.xlu0 %v1374, 32
    %v1516 = vpop.permute.xlu0 %1515
    %1519 = vrot.lane.b32.xlu0 %v1376, 64
    %v1520 = vpop.permute.xlu0 %1519
    %1522 = vrot.lane.b32.xlu0 %v1378, 96
    %v1523 = vpop.permute.xlu0 %1522
    %1525 = vrot.lane.b32.xlu0 %v1382, 32
    %v1526 = vpop.permute.xlu0 %1525
    %1529 = vrot.lane.b32.xlu0 %v1384, 64
    %v1530 = vpop.permute.xlu0 %1529
    %1533 = vrot.lane.b32.xlu0 %v1476, 96
    %v1534 = vpop.permute.xlu0 %1533
    %v1536 = vsel %vm1059, %v1356, %v1496
    %v1537 = vsel %vm1189, %v1536, %v1500
    %v1538 = vsel %vm1191, %v1537, %v1503
    %v1539 = vsel %vm1059, %v1364, %v1506
    %v1540 = vsel %vm1189, %v1539, %v1510
    %v1541 = vsel %vm1191, %v1540, %v1513
    %v1542 = vsel %vm1059, %v1372, %v1516
    %v1543 = vsel %vm1189, %v1542, %v1520
    %v1544 = vsel %vm1191, %v1543, %v1523
    %v1545 = vsel %vm1059, %v1380, %v1526
    %v1546 = vsel %vm1189, %v1545, %v1530
    %v1547 = vsel %vm1191, %v1546, %v1534
    %1549 = vrot.lane.b32.xlu0 %v1480, 32
    %v1550 = vpop.permute.xlu0 %1549
    %1553 = vrot.lane.b32.xlu0 %v1482, 64
    %v1554 = vpop.permute.xlu0 %1553
    %1557 = vrot.lane.b32.xlu0 %v1484, 96
    %v1558 = vpop.permute.xlu0 %1557
    %1561 = vrot.lane.b32.xlu0 %v1488, 32
    %v1562 = vpop.permute.xlu0 %1561
    %1565 = vrot.lane.b32.xlu0 %v1490, 64
    %v1566 = vpop.permute.xlu0 %1565
    %1569 = vrot.lane.b32.xlu0 %v1492, 96
    %v1570 = vpop.permute.xlu0 %1569
    %v1572 = vsel %vm1059, %v1478, %v1550
    %v1573 = vsel %vm1189, %v1572, %v1554
    %v1574 = vsel %vm1191, %v1573, %v1558
    %v1575 = vsel %vm1059, %v1486, %v1562
    %v1576 = vsel %vm1189, %v1575, %v1566
    %v1577 = vsel %vm1191, %v1576, %v1570
    %v1585 = vrot.slane %v1295, 1
    %v1586 = vrot.slane %v1298, 1
    %v1587 = vrot.slane %v1301, 1
    %v1588 = vrot.slane %v1304, 1
    %v1589 = vrot.slane %v1331, 1
    %v1590 = vrot.slane %v1334, 1
    %v1591 = vrot.slane %v1251, 1
    %v1605 = vrot.slane %v1435, 2
    %v1606 = vrot.slane %v1438, 2
    %v1607 = vrot.slane %v1441, 2
    %v1608 = vrot.slane %v1444, 2
    %v1609 = vrot.slane %v1471, 2
    %v1610 = vrot.slane %v1474, 2
    %v1611 = vrot.slane %v1384, 2
    %v1626 = vrot.slane %v1538, 3
    %v1627 = vrot.slane %v1541, 3
    %v1628 = vrot.slane %v1544, 3
    %v1629 = vrot.slane %v1547, 3
    %v1630 = vrot.slane %v1574, 3
    %v1631 = vrot.slane %v1577, 3
    %v1632 = vrot.slane %v1494, 3
    %vm1640 = vcmask 1046528
    %v1641 = vsel %vm1640, %v1192, %v1585
    %v1642 = vsel %vm1640, %v1195, %v1586
    %v1643 = vsel %vm1640, %v1198, %v1587
    %v1644 = vsel %vm1640, %v1201, %v1588
    %v1645 = vsel %vm1640, %v1228, %v1589
    %v1646 = vsel %vm1640, %v1231, %v1590
    %v1647 = vsel %vm1640, %v1139, %v1591
    %vm1648 = vcmask 1045504
    %v1649 = vsel %vm1648, %v1585, %v1605
    %v1650 = vsel %vm1648, %v1586, %v1606
    %v1651 = vsel %vm1648, %v1587, %v1607
    %v1652 = vsel %vm1648, %v1588, %v1608
    %v1653 = vsel %vm1648, %v1589, %v1609
    %v1654 = vsel %vm1648, %v1590, %v1610
    %v1655 = vsel %vm1648, %v1591, %v1611
    %vm1656 = vcmask 1044480
    %v1657 = vsel %vm1656, %v1605, %v1626
    %v1658 = vsel %vm1656, %v1606, %v1627
    %v1659 = vsel %vm1656, %v1607, %v1628
    %v1660 = vsel %vm1656, %v1608, %v1629
    %v1661 = vsel %vm1656, %v1609, %v1630
    %v1662 = vsel %vm1656, %v1610, %v1631
    %v1663 = vsel %vm1656, %v1611, %v1632
    %v1664 = vpack.c.bf16 %v1649, %v1641
    %v1665 = vpack.c.bf16 %v1650, %v1642
    %v1666 = vpack.c.bf16 %v1651, %v1643
    %v1667 = vpack.c.bf16 %v1652, %v1644
    %v1668 = vpack.c.bf16 %v1653, %v1645
    %v1669 = vpack.c.bf16 %v1654, %v1646
    %v1670 = vpack.c.bf16 %v1655, %v1647
    %v1671 = vpack.c.bf16 %v1626, %v1657
    %v1672 = vpack.c.bf16 %v1627, %v1658
    %v1673 = vpack.c.bf16 %v1628, %v1659
    %v1674 = vpack.c.bf16 %v1629, %v1660
    %v1675 = vpack.c.bf16 %v1630, %v1661
    %v1676 = vpack.c.bf16 %v1631, %v1662
    %v1677 = vpack.c.bf16 %v1632, %v1663
    %v1678 = vld [vmem:[%s4] sm:$0xf]
    %v1679 = vld [vmem:[%s4 + $0x4] sm:$0xf]
    %v1680 = vld [vmem:[%s4 + $0x8] sm:$0xf]
    %v1681 = vld [vmem:[%s4 + $0xc] sm:$0xf]
    %v1682 = vld [vmem:[%s4 + $0x10] sm:$0xf]
    %v1683 = vld [vmem:[%s4 + $0x14] sm:$0xf]
    %v1684 = vld [vmem:[%s4 + $0x18] sm:$0xf]
    %v1685 = vld [vmem:[%s4 + $0x1c] sm:$0xf]
    %v1686 = vld [vmem:[%s4 + $0x20] sm:$0xf]
    %v1687 = vld [vmem:[%s4 + $0x24] sm:$0xf]
    %v1688 = vld [vmem:[%s4 + $0x28] sm:$0xf]
    %v1689 = vld [vmem:[%s4 + $0x2c] sm:$0xf]
    %v1690 = vld [vmem:[%s4 + $0x30] sm:$0xf]
    %v1691 = vld [vmem:[%s4 + $0x34] sm:$0xf]
    %v1692 = vld [vmem:[%s4 + $0x38] sm:$0xf]
    %v1693 = vld [vmem:[%s4 + $0x3c] sm:$0xf]
    %v1694 = vld [vmem:[%s4 + $0x40] sm:$0xf]
    %v1695 = vld [vmem:[%s4 + $0x44] sm:$0xf]
    %v1696 = vld [vmem:[%s4 + $0x48] sm:$0xf]
    %v1697 = vld [vmem:[%s4 + $0x4c] sm:$0xf]
    %v1698 = vld [vmem:[%s4 + $0x50] sm:$0xf]
    %v1699 = vld [vmem:[%s4 + $0x54] sm:$0xf]
    %v1700 = vld [vmem:[%s4 + $0x58] sm:$0xf]
    %v1701 = vld [vmem:[%s4 + $0x5c] sm:$0xf]
    %v1702 = vld [vmem:[%s4 + $0x60] sm:$0xf]
    %v1703 = vld [vmem:[%s4 + $0x64] sm:$0xf]
    %v1704 = vld [vmem:[%s4 + $0x68] sm:$0xf]
    %v1705 = vld [vmem:[%s4 + $0x6c] sm:$0xf]
    %v1706 = vld [vmem:[%s4 + $0x70] sm:$0xf]
    %v1707 = vld [vmem:[%s4 + $0x74] sm:$0xf]
    %v1708 = vld [vmem:[%s4 + $0x78] sm:$0xf]
    %v1709 = vld [vmem:[%s4 + $0x7c] sm:$0xf]
    %v1710 = vld [vmem:[%s4 + $0x80] sm:$0xf]
    %v1711 = vld [vmem:[%s4 + $0x84] sm:$0xf]
    %v1712 = vld [vmem:[%s4 + $0x88] sm:$0xf]
    %v1713 = vld [vmem:[%s4 + $0x8c] sm:$0xf]
    %v1714 = vld [vmem:[%s4 + $0x90] sm:$0xf]
    %v1715 = vld [vmem:[%s4 + $0x94] sm:$0xf]
    %v1716 = vld [vmem:[%s4 + $0x98] sm:$0xf]
    %v1717 = vld [vmem:[%s4 + $0x9c] sm:$0xf]
    %v1718 = vld [vmem:[%s4 + $0xa0] sm:$0xf]
    %v1719 = vld [vmem:[%s4 + $0xa4] sm:$0xf]
    %v1720 = vld [vmem:[%s4 + $0xa8] sm:$0xf]
    %v1721 = vld [vmem:[%s4 + $0xac] sm:$0xf]
    %v1722 = vld [vmem:[%s4 + $0xb0] sm:$0xf]
    %v1723 = vld [vmem:[%s4 + $0xb4] sm:$0xf]
    %v1724 = vld [vmem:[%s4 + $0xb8] sm:$0xf]
    %v1725 = vld [vmem:[%s4 + $0xbc] sm:$0xf]
    %v1726 = vld [vmem:[%s4 + $0xc0] sm:$0xf]
    %v1727 = vld [vmem:[%s4 + $0xc4] sm:$0xf]
    %v1728 = vld [vmem:[%s4 + $0xc8] sm:$0xf]
    %v1729 = vld [vmem:[%s4 + $0xcc] sm:$0xf]
    %v1730 = vld [vmem:[%s4 + $0xd0] sm:$0xf]
    %v1731 = vld [vmem:[%s4 + $0xd4] sm:$0xf]
    %v1732 = vld [vmem:[%s4 + $0xd8] sm:$0xf]
    %v1733 = vld [vmem:[%s4 + $0xdc] sm:$0xf]
    %v1734 = vld [vmem:[%s4 + $0xe0] sm:$0xf]
    %v1735 = vld [vmem:[%s4 + $0xe4] sm:$0xf]
    %v1736 = vld [vmem:[%s4 + $0xe8] sm:$0xf]
    %v1737 = vld [vmem:[%s4 + $0xec] sm:$0xf]
    %v1738 = vld [vmem:[%s4 + $0xf0] sm:$0xf]
    %v1739 = vld [vmem:[%s4 + $0xf4] sm:$0xf]
    %v1740 = vld [vmem:[%s4 + $0xf8] sm:$0xf]
    %v1741 = vld [vmem:[%s4 + $0xfc] sm:$0xf]
    %v1742 = vld [vmem:[%s4 + $0x100] sm:$0xf]
    %v1743 = vld [vmem:[%s4 + $0x104] sm:$0xf]
    %v1744 = vld [vmem:[%s4 + $0x108] sm:$0xf]
    %v1745 = vld [vmem:[%s4 + $0x10c] sm:$0xf]
    %v1746 = vld [vmem:[%s4 + $0x110] sm:$0xf]
    %v1747 = vld [vmem:[%s4 + $0x114] sm:$0xf]
    %v1748 = vld [vmem:[%s4 + $0x118] sm:$0xf]
    %v1749 = vld [vmem:[%s4 + $0x11c] sm:$0xf]
    %v1750 = vld [vmem:[%s4 + $0x120] sm:$0xf]
    %v1751 = vld [vmem:[%s4 + $0x124] sm:$0xf]
    %v1752 = vld [vmem:[%s4 + $0x128] sm:$0xf]
    %v1753 = vld [vmem:[%s4 + $0x12c] sm:$0xf]
    %v1754 = vld [vmem:[%s4 + $0x130] sm:$0xf]
    %v1755 = vld [vmem:[%s4 + $0x134] sm:$0xf]
    %v1756 = vld [vmem:[%s4 + $0x138] sm:$0xf]
    %v1757 = vld [vmem:[%s4 + $0x13c] sm:$0xf]
    %v1758 = vld [vmem:[%s4 + $0x140] sm:$0xf]
    %v1759 = vld [vmem:[%s4 + $0x144] sm:$0xf]
    %v1760 = vld [vmem:[%s4 + $0x148] sm:$0xf]
    %v1761 = vld [vmem:[%s4 + $0x14c] sm:$0xf]
    %v1762 = vld [vmem:[%s4 + $0x150] sm:$0xf]
    %v1763 = vld [vmem:[%s4 + $0x154] sm:$0xf]
    %v1764 = vld [vmem:[%s4 + $0x158] sm:$0xf]
    %v1765 = vld [vmem:[%s4 + $0x15c] sm:$0xf]
    %v1766 = vld [vmem:[%s4 + $0x160] sm:$0xf]
    %v1767 = vld [vmem:[%s4 + $0x164] sm:$0xf]
    %v1768 = vld [vmem:[%s4 + $0x168] sm:$0xf]
    %v1769 = vld [vmem:[%s4 + $0x16c] sm:$0xf]
    %v1770 = vld [vmem:[%s4 + $0x170] sm:$0xf]
    %v1771 = vld [vmem:[%s4 + $0x174] sm:$0xf]
    %v1772 = vld [vmem:[%s4 + $0x178] sm:$0xf]
    %v1773 = vld [vmem:[%s4 + $0x17c] sm:$0xf]
    %v1774 = vld [vmem:[%s4 + $0x180] sm:$0xf]
    %v1775 = vld [vmem:[%s4 + $0x184] sm:$0xf]
    %v1776 = vld [vmem:[%s4 + $0x188] sm:$0xf]
    %v1777 = vld [vmem:[%s4 + $0x18c] sm:$0xf]
    %v1878 = vunpack.c.l.b16 %v1678
    %v1879 = vunpack.c.l.b16 %v1679
    %v1880 = vunpack.c.l.b16 %v1680
    %v1881 = vunpack.c.l.b16 %v1681
    %v1882 = vunpack.c.l.b16 %v1682
    %v1883 = vunpack.c.l.b16 %v1683
    %v1884 = vunpack.c.l.b16 %v1684
    %v1885 = vunpack.c.l.b16 %v1685
    %v1886 = vunpack.c.l.b16 %v1686
    %v1887 = vunpack.c.l.b16 %v1687
    %v1888 = vunpack.c.l.b16 %v1688
    %v1889 = vunpack.c.l.b16 %v1689
    %v1890 = vunpack.c.l.b16 %v1690
    %v1891 = vunpack.c.l.b16 %v1691
    %v1892 = vunpack.c.l.b16 %v1692
    %v1893 = vunpack.c.l.b16 %v1693
    %v1894 = vunpack.c.l.b16 %v1694
    %v1895 = vunpack.c.l.b16 %v1695
    %v1896 = vunpack.c.l.b16 %v1696
    %v1897 = vunpack.c.l.b16 %v1697
    %v1898 = vunpack.c.l.b16 %v1698
    %v1899 = vunpack.c.l.b16 %v1699
    %v1900 = vunpack.c.l.b16 %v1700
    %v1901 = vunpack.c.l.b16 %v1701
    %v1902 = vunpack.c.l.b16 %v1702
    %v1903 = vunpack.c.l.b16 %v1703
    %v1904 = vunpack.c.l.b16 %v1704
    %v1905 = vunpack.c.l.b16 %v1705
    %v1906 = vunpack.c.l.b16 %v1706
    %v1907 = vunpack.c.l.b16 %v1707
    %v1908 = vunpack.c.l.b16 %v1708
    %v1909 = vunpack.c.l.b16 %v1709
    %v1910 = vunpack.c.l.b16 %v1710
    %v1911 = vunpack.c.l.b16 %v1711
    %v1912 = vunpack.c.l.b16 %v1712
    %v1913 = vunpack.c.l.b16 %v1713
    %v1914 = vunpack.c.l.b16 %v1714
    %v1915 = vunpack.c.l.b16 %v1715
    %v1916 = vunpack.c.l.b16 %v1716
    %v1917 = vunpack.c.l.b16 %v1717
    %v1918 = vunpack.c.l.b16 %v1718
    %v1919 = vunpack.c.l.b16 %v1719
    %v1920 = vunpack.c.l.b16 %v1720
    %v1921 = vunpack.c.l.b16 %v1721
    %v1922 = vunpack.c.l.b16 %v1722
    %v1923 = vunpack.c.l.b16 %v1723
    %v1924 = vunpack.c.l.b16 %v1724
    %v1925 = vunpack.c.l.b16 %v1725
    %v1926 = vunpack.c.l.b16 %v1726
    %v1927 = vunpack.c.l.b16 %v1727
    %v1928 = vunpack.c.l.b16 %v1728
    %v1929 = vunpack.c.l.b16 %v1729
    %v1930 = vunpack.c.l.b16 %v1730
    %v1931 = vunpack.c.l.b16 %v1731
    %v1932 = vunpack.c.l.b16 %v1732
    %v1933 = vunpack.c.l.b16 %v1733
    %v1934 = vunpack.c.l.b16 %v1734
    %v1935 = vunpack.c.l.b16 %v1735
    %v1936 = vunpack.c.l.b16 %v1736
    %v1937 = vunpack.c.l.b16 %v1737
    %v1938 = vunpack.c.l.b16 %v1738
    %v1939 = vunpack.c.l.b16 %v1739
    %v1940 = vunpack.c.l.b16 %v1740
    %v1941 = vunpack.c.l.b16 %v1741
    %v1942 = vunpack.c.l.b16 %v1742
    %v1943 = vunpack.c.l.b16 %v1743
    %v1944 = vunpack.c.l.b16 %v1744
    %v1945 = vunpack.c.l.b16 %v1745
    %v1946 = vunpack.c.l.b16 %v1746
    %v1947 = vunpack.c.l.b16 %v1747
    %v1948 = vunpack.c.l.b16 %v1748
    %v1949 = vunpack.c.l.b16 %v1749
    %v1950 = vunpack.c.l.b16 %v1750
    %v1951 = vunpack.c.l.b16 %v1751
    %v1952 = vunpack.c.l.b16 %v1752
    %v1953 = vunpack.c.l.b16 %v1753
    %v1954 = vunpack.c.l.b16 %v1754
    %v1955 = vunpack.c.l.b16 %v1755
    %v1956 = vunpack.c.l.b16 %v1756
    %v1957 = vunpack.c.l.b16 %v1757
    %v1958 = vunpack.c.l.b16 %v1758
    %v1959 = vunpack.c.l.b16 %v1759
    %v1960 = vunpack.c.l.b16 %v1760
    %v1961 = vunpack.c.l.b16 %v1761
    %v1962 = vunpack.c.l.b16 %v1762
    %v1963 = vunpack.c.l.b16 %v1763
    %v1964 = vunpack.c.l.b16 %v1764
    %v1965 = vunpack.c.l.b16 %v1765
    %v1966 = vunpack.c.l.b16 %v1766
    %v1967 = vunpack.c.l.b16 %v1767
    %v1968 = vunpack.c.l.b16 %v1768
    %v1969 = vunpack.c.l.b16 %v1769
    %v1970 = vunpack.c.l.b16 %v1770
    %v1971 = vunpack.c.l.b16 %v1771
    %v1972 = vunpack.c.l.b16 %v1772
    %v1973 = vunpack.c.l.b16 %v1773
    %v1974 = vunpack.c.l.b16 %v1774
    %v1975 = vunpack.c.l.b16 %v1775
    %v1976 = vunpack.c.l.b16 %v1776
    %v1977 = vunpack.c.l.b16 %v1777
    %v1978 = vpack.c.b16 %v1879, %v1878
    %v1979 = vpack.c.b16 %v1881, %v1880
    %v1980 = vpack.c.b16 %v1883, %v1882
    %v1981 = vpack.c.b16 %v1885, %v1884
    %v1982 = vpack.c.b16 %v1887, %v1886
    %v1983 = vpack.c.b16 %v1889, %v1888
    %v1984 = vpack.c.b16 %v1891, %v1890
    %v1985 = vpack.c.b16 %v1893, %v1892
    %v1986 = vpack.c.b16 %v1895, %v1894
    %v1987 = vpack.c.b16 %v1897, %v1896
    %v1988 = vpack.c.b16 %v1899, %v1898
    %v1989 = vpack.c.b16 %v1901, %v1900
    %v1990 = vpack.c.b16 %v1903, %v1902
    %v1991 = vpack.c.b16 %v1905, %v1904
    %v1992 = vpack.c.b16 %v1907, %v1906
    %v1993 = vpack.c.b16 %v1909, %v1908
    %v1994 = vpack.c.b16 %v1911, %v1910
    %v1995 = vpack.c.b16 %v1913, %v1912
    %v1996 = vpack.c.b16 %v1915, %v1914
    %v1997 = vpack.c.b16 %v1917, %v1916
    %v1998 = vpack.c.b16 %v1919, %v1918
    %v1999 = vpack.c.b16 %v1921, %v1920
    %v2000 = vpack.c.b16 %v1923, %v1922
    %v2001 = vpack.c.b16 %v1925, %v1924
    %v2002 = vpack.c.b16 %v1927, %v1926
    %v2003 = vpack.c.b16 %v1929, %v1928
    %v2004 = vpack.c.b16 %v1931, %v1930
    %v2005 = vpack.c.b16 %v1933, %v1932
    %v2006 = vpack.c.b16 %v1935, %v1934
    %v2007 = vpack.c.b16 %v1937, %v1936
    %v2008 = vpack.c.b16 %v1939, %v1938
    %v2009 = vpack.c.b16 %v1941, %v1940
    %v2010 = vpack.c.b16 %v1943, %v1942
    %v2011 = vpack.c.b16 %v1945, %v1944
    %v2012 = vpack.c.b16 %v1947, %v1946
    %v2013 = vpack.c.b16 %v1949, %v1948
    %v2014 = vpack.c.b16 %v1951, %v1950
    %v2015 = vpack.c.b16 %v1953, %v1952
    %v2016 = vpack.c.b16 %v1955, %v1954
    %v2017 = vpack.c.b16 %v1957, %v1956
    %v2018 = vpack.c.b16 %v1959, %v1958
    %v2019 = vpack.c.b16 %v1961, %v1960
    %v2020 = vpack.c.b16 %v1963, %v1962
    %v2021 = vpack.c.b16 %v1965, %v1964
    %v2022 = vpack.c.b16 %v1967, %v1966
    %v2023 = vpack.c.b16 %v1969, %v1968
    %v2024 = vpack.c.b16 %v1971, %v1970
    %v2025 = vpack.c.b16 %v1973, %v1972
    %v2026 = vpack.c.b16 %v1975, %v1974
    %v2027 = vpack.c.b16 %v1977, %v1976
    %v2079 = vsel %vm1059, %v1670, 0
    %v2082 = vsel %vm1059, %v1677, 0
    %2084 = vmatpush.bf16.msra.mxu0 %v1985
    %2085 = vmatpush.bf16.msra.mxu0 %v1984
    %2086 = vmatpush.bf16.msra.mxu0 %v1983
    %2087 = vmatpush.bf16.msra.mxu0 %v1982
    %2088 = vmatpush.bf16.msra.mxu0 %v1981
    %2089 = vmatpush.bf16.msra.mxu0 %v1980
    %2090 = vmatpush.bf16.msra.mxu0 %v1979
    %2091 = vmatpush.bf16.msra.mxu0 %v1978
    %2092 = vmatmul.bf16.gmra.mxu0 %v1664
    %v2093 = vpop.f32.mrf.mxu0
    %v2094 = vadd.f32 0.0, %v2093
    %v2095 = vpop.f32.mrf.mxu0
    %v2096 = vadd.f32 0.0, %v2095
    %2097 = vmatmul.bf16.gmra.mxu0 %v1671
    %v2098 = vpop.f32.mrf.mxu0
    %v2099 = vadd.f32 0.0, %v2098
    %v2100 = vpop.f32.mrf.mxu0
    %v2101 = vadd.f32 0.0, %v2100
    %2102 = vdwg.mxu0
    %2103 = vmatpush.bf16.msra.mxu0 %v1993
    %2104 = vmatpush.bf16.msra.mxu0 %v1992
    %2105 = vmatpush.bf16.msra.mxu0 %v1991
    %2106 = vmatpush.bf16.msra.mxu0 %v1990
    %2107 = vmatpush.bf16.msra.mxu0 %v1989
    %2108 = vmatpush.bf16.msra.mxu0 %v1988
    %2109 = vmatpush.bf16.msra.mxu0 %v1987
    %2110 = vmatpush.bf16.msra.mxu0 %v1986
    %2111 = vmatmul.bf16.gmra.mxu0 %v1665
    %v2112 = vpop.f32.mrf.mxu0
    %v2113 = vadd.f32 %v2094, %v2112
    %v2114 = vpop.f32.mrf.mxu0
    %v2115 = vadd.f32 %v2096, %v2114
    %2116 = vmatmul.bf16.gmra.mxu0 %v1672
    %v2117 = vpop.f32.mrf.mxu0
    %v2118 = vadd.f32 %v2099, %v2117
    %v2119 = vpop.f32.mrf.mxu0
    %v2120 = vadd.f32 %v2101, %v2119
    %2121 = vdwg.mxu0
    %2122 = vmatpush.bf16.msra.mxu0 %v2001
    %2123 = vmatpush.bf16.msra.mxu0 %v2000
    %2124 = vmatpush.bf16.msra.mxu0 %v1999
    %2125 = vmatpush.bf16.msra.mxu0 %v1998
    %2126 = vmatpush.bf16.msra.mxu0 %v1997
    %2127 = vmatpush.bf16.msra.mxu0 %v1996
    %2128 = vmatpush.bf16.msra.mxu0 %v1995
    %2129 = vmatpush.bf16.msra.mxu0 %v1994
    %2130 = vmatmul.bf16.gmra.mxu0 %v1666
    %v2131 = vpop.f32.mrf.mxu0
    %v2132 = vadd.f32 %v2113, %v2131
    %v2133 = vpop.f32.mrf.mxu0
    %v2134 = vadd.f32 %v2115, %v2133
    %2135 = vmatmul.bf16.gmra.mxu0 %v1673
    %v2136 = vpop.f32.mrf.mxu0
    %v2137 = vadd.f32 %v2118, %v2136
    %v2138 = vpop.f32.mrf.mxu0
    %v2139 = vadd.f32 %v2120, %v2138
    %2140 = vdwg.mxu0
    %2141 = vmatpush.bf16.msra.mxu0 %v2009
    %2142 = vmatpush.bf16.msra.mxu0 %v2008
    %2143 = vmatpush.bf16.msra.mxu0 %v2007
    %2144 = vmatpush.bf16.msra.mxu0 %v2006
    %2145 = vmatpush.bf16.msra.mxu0 %v2005
    %2146 = vmatpush.bf16.msra.mxu0 %v2004
    %2147 = vmatpush.bf16.msra.mxu0 %v2003
    %2148 = vmatpush.bf16.msra.mxu0 %v2002
    %2149 = vmatmul.bf16.gmra.mxu0 %v1667
    %v2150 = vpop.f32.mrf.mxu0
    %v2151 = vadd.f32 %v2132, %v2150
    %v2152 = vpop.f32.mrf.mxu0
    %v2153 = vadd.f32 %v2134, %v2152
    %2154 = vmatmul.bf16.gmra.mxu0 %v1674
    %v2155 = vpop.f32.mrf.mxu0
    %v2156 = vadd.f32 %v2137, %v2155
    %v2157 = vpop.f32.mrf.mxu0
    %v2158 = vadd.f32 %v2139, %v2157
    %2159 = vdwg.mxu0
    %2160 = vmatpush.bf16.msra.mxu0 %v2017
    %2161 = vmatpush.bf16.msra.mxu0 %v2016
    %2162 = vmatpush.bf16.msra.mxu0 %v2015
    %2163 = vmatpush.bf16.msra.mxu0 %v2014
    %2164 = vmatpush.bf16.msra.mxu0 %v2013
    %2165 = vmatpush.bf16.msra.mxu0 %v2012
    %2166 = vmatpush.bf16.msra.mxu0 %v2011
    %2167 = vmatpush.bf16.msra.mxu0 %v2010
    %2168 = vmatmul.bf16.gmra.mxu0 %v1668
    %v2169 = vpop.f32.mrf.mxu0
    %v2170 = vadd.f32 %v2151, %v2169
    %v2171 = vpop.f32.mrf.mxu0
    %v2172 = vadd.f32 %v2153, %v2171
    %2173 = vmatmul.bf16.gmra.mxu0 %v1675
    %v2174 = vpop.f32.mrf.mxu0
    %v2175 = vadd.f32 %v2156, %v2174
    %v2176 = vpop.f32.mrf.mxu0
    %v2177 = vadd.f32 %v2158, %v2176
    %2178 = vdwg.mxu0
    %2179 = vmatpush.bf16.msra.mxu0 %v2025
    %2180 = vmatpush.bf16.msra.mxu0 %v2024
    %2181 = vmatpush.bf16.msra.mxu0 %v2023
    %2182 = vmatpush.bf16.msra.mxu0 %v2022
    %2183 = vmatpush.bf16.msra.mxu0 %v2021
    %2184 = vmatpush.bf16.msra.mxu0 %v2020
    %2185 = vmatpush.bf16.msra.mxu0 %v2019
    %2186 = vmatpush.bf16.msra.mxu0 %v2018
    %2187 = vmatmul.bf16.gmra.mxu0 %v1669
    %v2188 = vpop.f32.mrf.mxu0
    %v2189 = vadd.f32 %v2170, %v2188
    %v2190 = vpop.f32.mrf.mxu0
    %v2191 = vadd.f32 %v2172, %v2190
    %2192 = vmatmul.bf16.gmra.mxu0 %v1676
    %v2193 = vpop.f32.mrf.mxu0
    %v2194 = vadd.f32 %v2175, %v2193
    %v2195 = vpop.f32.mrf.mxu0
    %v2196 = vadd.f32 %v2177, %v2195
    %2197 = vdwg.mxu0
    %2198 = vmatpush.bf16.msra.mxu0 0
    %2199 = vmatpush.bf16.msra.mxu0 0
    %2200 = vmatpush.bf16.msra.mxu0 0
    %2201 = vmatpush.bf16.msra.mxu0 0
    %2202 = vmatpush.bf16.msra.mxu0 0
    %2203 = vmatpush.bf16.msra.mxu0 0
    %2204 = vmatpush.bf16.msra.mxu0 %v2027
    %2205 = vmatpush.bf16.msra.mxu0 %v2026
    %2206 = vmatmul.bf16.gmra.mxu0 %v2079
    %v2207 = vpop.f32.mrf.mxu0
    %v2208 = vadd.f32 %v2189, %v2207
    %v2209 = vpop.f32.mrf.mxu0
    %v2210 = vadd.f32 %v2191, %v2209
    %2211 = vmatmul.bf16.gmra.mxu0 %v2082
    %v2212 = vpop.f32.mrf.mxu0
    %v2213 = vadd.f32 %v2194, %v2212
    %v2214 = vpop.f32.mrf.mxu0
    %v2215 = vadd.f32 %v2196, %v2214
    %2216 = vdwg.mxu0
    %v2217 = vld [vmem:[%s5] sm:$0x1]
    %v2219 = vperm.slane %v2217, 0
    %v2221 = vmul.f32 %v2208, %v2219
    %v2222 = vmul.f32 %v2210, %v2219
    %v2223 = vmul.f32 %v2213, %v2219
    %v2224 = vmul.f32 %v2215, %v2219
    %v2225 = vld [vmem:[%s6] sm:$0x1]
    %v2227 = vperm.slane %v2225, 0
    %v2229 = vadd.f32 %v2221, %v2227
    %v2230 = vadd.f32 %v2222, %v2227
    %v2231 = vadd.f32 %v2223, %v2227
    %v2232 = vadd.f32 %v2224, %v2227
    %v2233 = vmax.f32 %v2229, 0.0
    %v2234 = vmax.f32 %v2230, 0.0
    %v2235 = vmax.f32 %v2231, 0.0
    %v2236 = vmax.f32 %v2232, 0.0
    %v2237 = vld [vmem:[%s7] sm:$0xff]
    %v2238 = vld [vmem:[%s7 + $0x8] sm:$0xff]
    %v2239 = vld [vmem:[%s7 + $0x10] sm:$0xff]
    %v2240 = vld [vmem:[%s7 + $0x18] sm:$0xf]
    %v2241 = vmul.f32 %v2233, %v2237
    %v2242 = vmul.f32 %v2234, %v2238
    %v2243 = vmul.f32 %v2235, %v2239
    %v2244 = vmul.f32 %v2236, %v2240
    %v2245 = vsel %vm1059, %v2241, 0.0
    %2246 = vadd.xlane.f32.xlu0 %v2245
    %v2247 = vpop.xlane.xlu0 %2246
    %v2248 = vsel %vm1059, %v2242, 0.0
    %2249 = vadd.xlane.f32.xlu0 %v2248
    %v2250 = vpop.xlane.xlu0 %2249
    %v2251 = vsel %vm1059, %v2243, 0.0
    %2252 = vadd.xlane.f32.xlu0 %v2251
    %v2253 = vpop.xlane.xlu0 %2252
    %vm2254 = vcmask 257024
    %v2255 = vsel %vm2254, %v2244, 0.0
    %2256 = vadd.xlane.f32.xlu0 %v2255
    %v2257 = vpop.xlane.xlu0 %2256
    %s2258 = scalar_lea.vmem %s7, 32
    %v2259 = vld [vmem:[%s2258] sm:$0xff]
    %v2260 = vld [vmem:[%s2258 + $0x8] sm:$0xff]
    %v2261 = vld [vmem:[%s2258 + $0x10] sm:$0xff]
    %v2262 = vld [vmem:[%s2258 + $0x18] sm:$0xf]
    %v2263 = vmul.f32 %v2233, %v2259
    %v2264 = vmul.f32 %v2234, %v2260
    %v2265 = vmul.f32 %v2235, %v2261
    %v2266 = vmul.f32 %v2236, %v2262
    %v2267 = vsel %vm1059, %v2263, 0.0
    %2268 = vadd.xlane.f32.xlu0 %v2267
    %v2269 = vpop.xlane.xlu0 %2268
    %v2270 = vsel %vm1059, %v2264, 0.0
    %2271 = vadd.xlane.f32.xlu0 %v2270
    %v2272 = vpop.xlane.xlu0 %2271
    %v2273 = vsel %vm1059, %v2265, 0.0
    %2274 = vadd.xlane.f32.xlu0 %v2273
    %v2275 = vpop.xlane.xlu0 %2274
    %v2276 = vsel %vm2254, %v2266, 0.0
    %2277 = vadd.xlane.f32.xlu0 %v2276
    %v2278 = vpop.xlane.xlu0 %2277
    %vm2279 = vcmask 7168
    %v2280 = vsel %vm2279, %v2247, %v2269
    %v2281 = vsel %vm2279, %v2250, %v2272
    %v2282 = vsel %vm2279, %v2253, %v2275
    %v2283 = vsel %vm2279, %v2257, %v2278
    %vm2284 = vcmask 15360
    %v2285 = vsel %vm2284, %v2280, 0.0
    %vm2286 = vcmask 13312
    %v2287 = vsel %vm2286, %v2281, 0.0
    %v2288 = vadd.f32 %v2285, %v2287
    %v2289 = vrot.slane %v2288, 4
    %v2290 = vadd.f32 %v2288, %v2289
    %v2291 = vrot.slane %v2290, 2
    %v2292 = vadd.f32 %v2290, %v2291
    %v2293 = vrot.slane %v2292, 1
    %v2294 = vadd.f32 %v2292, %v2293
    %vm2298 = vcmask 1041408
    %v2299 = vrot.slane %v2281, 6
    %v2300 = vrot.slane %v2282, 6
    %v2301 = vsel %vm2298, %v2299, %v2300
    %v2302 = vrot.slane %v2283, 6
    %v2303 = vsel %vm2298, %v2300, %v2302
    %v2306 = vsel %vm2284, %v2301, 0.0
    %v2307 = vsel %vm2286, %v2303, 0.0
    %v2308 = vadd.f32 %v2306, %v2307
    %v2309 = vrot.slane %v2308, 4
    %v2310 = vadd.f32 %v2308, %v2309
    %v2311 = vrot.slane %v2310, 2
    %v2312 = vadd.f32 %v2310, %v2311
    %v2313 = vrot.slane %v2312, 1
    %v2314 = vadd.f32 %v2312, %v2313
    %vm2315 = vcmask 1040384
    %v2316 = vsel %vm2315, %v2294, %v2314
    %v2317 = vld [vmem:[%s8] sm:$0x1]
    %v2319 = vperm.slane %v2317, 0
    %v2321 = vadd.f32 %v2316, %v2319
    %vm2322 = vcmask 9216
    %2323 = vst.msk [vmem:[#allocation3] sm:$0x3] %vm2322, %v2321
    // Predicated region
    $region38: #{dqn_forward.3} parent=1 // pred_check
      _
    $region39: #{dqn_forward.3} parent=1 // pred_check_branch
      %2325 = sbr.rel (0) target = $region41
    $region40: #{dqn_forward.3} parent=1 // pred_region
      %2327 = vsyncadd [#allocation4], 0
      %s2329 = sshll.u32 [#allocation3], 4
      %s2330 = int_to_ptr.vmem [resolvable:$true] %s2329
      %s2331 = sshll.u32 %s9, 4
      %s2332 = int_to_ptr.hbm [resolvable:$true] %s2331
      %2334 = dma.vmem_to_hbm [thread:$0]  %s2330, 32, %s2332, [#allocation4]
    $region41: #{dqn_forward.3} parent=1 // pred_fallthru
      _
    // Predicated region
    $region42: #{dqn_forward.3} parent=1 // pred_check
      _
    $region43: #{dqn_forward.3} parent=1 // pred_check_branch
      %2336 = sbr.rel (0) target = $region45
    $region44: #{dqn_forward.3} parent=1 // pred_region
      %2338 = dma.done [#allocation4], 32
    $region45: #{dqn_forward.3} parent=1 // pred_fallthru
      _
    %2339 = vsyncpa [#allocation4], 1

</llo_original>
